<compile_context>
chip_gen: v5e
topology: v5e:2x2
jax: 0.10.0
libtpu: 0.0.40
codegen_flags: <defaults>
</compile_context>

<pallas_src>
import jax
import jax.numpy as jnp
from jax.experimental import pallas as pl
from jax.experimental.pallas import tpu as pltpu

_MXU_DTYPE = jnp.bfloat16     # matmul operand precision (accumulation is f32)


# ----------------------------------------------------------------------------
# In-kernel helpers (operate on VMEM-resident values / weight refs).
# ----------------------------------------------------------------------------

def _relu(v):
    return jnp.maximum(v, 0.0)


def _mm(x, w):
    """x @ w on the MXU: operands in the weight's (bf16) dtype, f32 accumulate."""
    if x.shape[-1] == 1:
        # Degenerate contraction (1-channel input layer): a broadcasted outer
        # product on the VPU is cheaper/safer than a K=1 MXU pass.
        return x.astype(jnp.float32) * w.astype(jnp.float32)
    return jnp.dot(x.astype(w.dtype), w, preferred_element_type=jnp.float32)


def _pad_rows(h):
    """[0; h; 0] zero-row padding along the length (sublane) axis."""
    z = jnp.zeros((1, h.shape[1]), h.dtype)
    return jnp.concatenate([z, h, z], axis=0)


def _sel(shape, cond_fn):
    """0/1 selection matrix built from 2-D iotas (used as exact MXU gathers)."""
    i = jax.lax.broadcasted_iota(jnp.int32, shape, 0)
    j = jax.lax.broadcasted_iota(jnp.int32, shape, 1)
    return jnp.where(cond_fn(i, j), 1.0, 0.0)


def _conv3_s1(h, w_ref):
    """K=3, stride=1, pad=1 Conv1d on an (L, Cin) slab: sum of 3 shifted matmuls."""
    L = h.shape[0]
    hp = _pad_rows(h)                                     # (L+2, Cin)
    acc = _mm(hp[0:L], w_ref[0])
    acc = acc + _mm(hp[1:L + 1], w_ref[1])
    acc = acc + _mm(hp[2:L + 2], w_ref[2])
    return acc                                            # (L, Cout) f32


def _conv3_s2(h, w_ref):
    """K=3, stride=2, pad=1 Conv1d: out[t] = sum_k hp[2t+k] @ W_k.
    Strided rows are picked with a 0/1 selection matmul (no im2col, no wasted
    output rows)."""
    L = h.shape[0]
    hp = _pad_rows(h)                                     # (L+2, Cin)
    acc = None
    for k in range(3):
        sel = _sel((L // 2, L + 2), lambda i, j, k=k: j == 2 * i + k)
        rows = jnp.dot(sel, hp, preferred_element_type=jnp.float32)
        term = _mm(rows, w_ref[k])
        acc = term if acc is None else acc + term
    return acc                                            # (L//2, Cout) f32


def _res_block(h, w1_ref, w2_ref):
    """ResidualBlock / TransposeResidualBlock:
       relu(relu(conv2(relu(conv1(x)))) + x)   (bias-free convs)."""
    y = _relu(_conv3_s1(h, w1_ref))
    y = _relu(_conv3_s1(y, w2_ref))
    return _relu(y + h)


def _convT3_s2(h, w_ref):
    """ConvTranspose1d(K=3, stride=2, padding=1, output_padding=1), phase-decomposed:
         out[2m]   = h[m]   @ W1
         out[2m+1] = h[m]   @ W2 + h[m+1] @ W0
       (no zero-dilation -> no multiplies against stuffed zeros).  The two
       phases are interleaved along the length axis with exact 0/1 matmuls."""
    Lin, Cin = h.shape
    h_next = jnp.concatenate([h[1:Lin], jnp.zeros((1, Cin), h.dtype)], axis=0)
    out_even = _mm(h, w_ref[1])                                  # (Lin, Cout)
    out_odd = _mm(h, w_ref[2]) + _mm(h_next, w_ref[0])           # (Lin, Cout)
    e_even = _sel((2 * Lin, Lin), lambda i, j: i == 2 * j)
    e_odd = _sel((2 * Lin, Lin), lambda i, j: i == 2 * j + 1)
    return (jnp.dot(e_even, out_even, preferred_element_type=jnp.float32)
            + jnp.dot(e_odd, out_odd, preferred_element_type=jnp.float32))


# ----------------------------------------------------------------------------
# The single fused kernel: whole encoder + decoder for one batch element.
# ----------------------------------------------------------------------------

def _autoencoder_kernel(
    x_ref,
    we1, be1, wr1a, wr1b, we2, be2, wr2a, wr2b, we3, be3,
    wd1, bd1, wdr1a, wdr1b, wd2, bd2, wdr2a, wdr2b, wd3, bd3,
    enc_ref, dec_ref,
):
    x = x_ref[...].astype(jnp.float32)                    # (L, 1)

    # ----------------- encoder -----------------
    h = _relu(_conv3_s2(x, we1) + be1[...])               # (L/2, 32)
    h = _res_block(h, wr1a, wr1b)
    h = _relu(_conv3_s2(h, we2) + be2[...])               # (L/4, 64)
    h = _res_block(h, wr2a, wr2b)
    h = _relu(_conv3_s2(h, we3) + be3[...])               # (L/8, 128)
    enc_ref[...] = h.astype(enc_ref.dtype)

    # ----------------- decoder -----------------
    d = _relu(_convT3_s2(h, wd1) + bd1[...])              # (L/4, 64)
    d = _res_block(d, wdr1a, wdr1b)
    d = _relu(_convT3_s2(d, wd2) + bd2[...])              # (L/2, 32)
    d = _res_block(d, wdr2a, wdr2b)
    d = _relu(_convT3_s2(d, wd3) + bd3[...])              # (L, 1)
    dec_ref[...] = d.astype(dec_ref.dtype)


# ----------------------------------------------------------------------------
# Weight re-layout (wrapper side, one-time): every conv is handed to the kernel
# as a (K=3, Cin, Cout) bf16 tap stack; biases stay f32 as (1, Cout).
# ----------------------------------------------------------------------------

def _conv_taps(w_oik):
    """Conv1d weight (Cout, Cin, K) -> (K, Cin, Cout) tap stack."""
    return jnp.transpose(w_oik, (2, 1, 0))


def _convT_s1_taps(w_iok):
    """ConvTranspose1d (stride=1, pad=1) weight (Cin, Cout, K) -> equivalent
    conv tap stack (K, Cin, Cout): taps[k] = W[:, :, K-1-k]."""
    return jnp.transpose(jnp.flip(w_iok, axis=2), (2, 0, 1))


def _convT_s2_taps(w_iok):
    """ConvTranspose1d (stride=2) weight (Cin, Cout, K) -> raw taps in PyTorch
    kernel order, (K, Cin, Cout) (consumed by the phase decomposition)."""
    return jnp.transpose(w_iok, (2, 0, 1))


def _wspec(shape):
    if len(shape) == 3:
        return pl.BlockSpec(shape, lambda b: (0, 0, 0))
    return pl.BlockSpec(shape, lambda b: (0, 0))


# ----------------------------------------------------------------------------
# Full forward pass (mirrors Autoencoder.forward, returns (encoded, decoded)).
# ----------------------------------------------------------------------------

@jax.jit
def autoencoder_forward(params, x_ncw):
    B, cin, L = x_ncw.shape
    assert cin == 1 and L % 8 == 0

    x_blc = jnp.transpose(x_ncw, (0, 2, 1)).astype(jnp.float32)   # (B, L, 1)

    p = params
    cvt = lambda t: t.astype(_MXU_DTYPE)
    fb = lambda t: t.reshape(1, -1).astype(jnp.float32)
    weights = (
        cvt(_conv_taps(p["e_conv1_w"])), fb(p["e_conv1_b"]),
        cvt(_conv_taps(p["e_res1_w1"])), cvt(_conv_taps(p["e_res1_w2"])),
        cvt(_conv_taps(p["e_conv2_w"])), fb(p["e_conv2_b"]),
        cvt(_conv_taps(p["e_res2_w1"])), cvt(_conv_taps(p["e_res2_w2"])),
        cvt(_conv_taps(p["e_conv3_w"])), fb(p["e_conv3_b"]),
        cvt(_convT_s2_taps(p["d_conv1_w"])), fb(p["d_conv1_b"]),
        cvt(_convT_s1_taps(p["d_res1_w1"])), cvt(_convT_s1_taps(p["d_res1_w2"])),
        cvt(_convT_s2_taps(p["d_conv2_w"])), fb(p["d_conv2_b"]),
        cvt(_convT_s1_taps(p["d_res2_w1"])), cvt(_convT_s1_taps(p["d_res2_w2"])),
        cvt(_convT_s2_taps(p["d_conv3_w"])), fb(p["d_conv3_b"]),
    )

    in_specs = [pl.BlockSpec((None, L, 1), lambda b: (b, 0, 0))]
    in_specs += [_wspec(w.shape) for w in weights]
    out_specs = [
        pl.BlockSpec((None, L // 8, 128), lambda b: (b, 0, 0)),   # encoded
        pl.BlockSpec((None, L, 1), lambda b: (b, 0, 0)),          # decoded
    ]
    out_shape = [
        jax.ShapeDtypeStruct((B, L // 8, 128), jnp.float32),
        jax.ShapeDtypeStruct((B, L, 1), jnp.float32),
    ]

    # NOTE: for large B*L this same grid simply grows along the batch axis,
    # keeping each per-step VMEM footprint constant (weights ~0.25 MB bf16).
    encoded_blc, decoded_blc = pl.pallas_call(
        _autoencoder_kernel,
        grid=(B,),
        in_specs=in_specs,
        out_specs=out_specs,
        out_shape=out_shape,
        compiler_params=pltpu.CompilerParams(
            dimension_semantics=("parallel",),
        ),
    )(x_blc, *weights)

    # Back to PyTorch NCW layout.
    return (jnp.transpose(encoded_blc, (0, 2, 1)),
            jnp.transpose(decoded_blc, (0, 2, 1)))


# ----------------------------------------------------------------------------
# Parameter construction (deterministic, PyTorch-default-style uniform init).
# ----------------------------------------------------------------------------

def _uniform(key, shape, fan_in):
    bound = 1.0 / jnp.sqrt(jnp.float32(fan_in))
    return jax.random.uniform(key, shape, jnp.float32, -bound, bound)


def init_params(key):
    ks = iter(jax.random.split(key, 20))
    p = {}
    # encoder: Conv1d weights (C_out, C_in, K), fan_in = C_in * K
    p["e_conv1_w"] = _uniform(next(ks), (32, 1, 3), 3)
    p["e_conv1_b"] = _uniform(next(ks), (32,), 3)
    p["e_res1_w1"] = _uniform(next(ks), (32, 32, 3), 96)
    p["e_res1_w2"] = _uniform(next(ks), (32, 32, 3), 96)
    p["e_conv2_w"] = _uniform(next(ks), (64, 32, 3), 96)
    p["e_conv2_b"] = _uniform(next(ks), (64,), 96)
    p["e_res2_w1"] = _uniform(next(ks), (64, 64, 3), 192)
    p["e_res2_w2"] = _uniform(next(ks), (64, 64, 3), 192)
    p["e_conv3_w"] = _uniform(next(ks), (128, 64, 3), 192)
    p["e_conv3_b"] = _uniform(next(ks), (128,), 192)
    # decoder: ConvTranspose1d weights (C_in, C_out, K), PyTorch fan_in = C_out * K
    p["d_conv1_w"] = _uniform(next(ks), (128, 64, 3), 192)
    p["d_conv1_b"] = _uniform(next(ks), (64,), 192)
    p["d_res1_w1"] = _uniform(next(ks), (64, 64, 3), 192)
    p["d_res1_w2"] = _uniform(next(ks), (64, 64, 3), 192)
    p["d_conv2_w"] = _uniform(next(ks), (64, 32, 3), 96)
    p["d_conv2_b"] = _uniform(next(ks), (32,), 96)
    p["d_res2_w1"] = _uniform(next(ks), (32, 32, 3), 96)
    p["d_res2_w2"] = _uniform(next(ks), (32, 32, 3), 96)
    p["d_conv3_w"] = _uniform(next(ks), (32, 1, 3), 3)
    p["d_conv3_b"] = _uniform(next(ks), (1,), 3)
    return p


if __name__ == "__main__":
    B, L = 2, 16                              # input_dim = 16 (divisible by 8)
    key = jax.random.PRNGKey(0)
    k_x, k_p = jax.random.split(key)
    x = jax.random.normal(k_x, (B, 1, L), jnp.float32)    # (batch, 1, length) NCW
    params = init_params(k_p)

    encoded, decoded = autoencoder_forward(params, x)
    jax.block_until_ready((encoded, decoded))

    assert encoded.shape == (B, 128, L // 8), encoded.shape
    assert decoded.shape == (B, 1, L), decoded.shape
    assert bool(jnp.all(encoded >= 0)) and bool(jnp.all(decoded >= 0))  # ReLU outputs
    print("KERNEL_OK")
</pallas_src>

<mosaic_0001>
module attributes {stable_mosaic.version = 11 : i64} {
  func.func @_autoencoder_kernel(%arg0: i32, %arg1: memref<1x16x1xf32, #tpu.memory_space<vmem>>, %arg2: memref<3x1x32xbf16, #tpu.memory_space<vmem>>, %arg3: memref<1x32xf32, #tpu.memory_space<vmem>>, %arg4: memref<3x32x32xbf16, #tpu.memory_space<vmem>>, %arg5: memref<3x32x32xbf16, #tpu.memory_space<vmem>>, %arg6: memref<3x32x64xbf16, #tpu.memory_space<vmem>>, %arg7: memref<1x64xf32, #tpu.memory_space<vmem>>, %arg8: memref<3x64x64xbf16, #tpu.memory_space<vmem>>, %arg9: memref<3x64x64xbf16, #tpu.memory_space<vmem>>, %arg10: memref<3x64x128xbf16, #tpu.memory_space<vmem>>, %arg11: memref<1x128xf32, #tpu.memory_space<vmem>>, %arg12: memref<3x128x64xbf16, #tpu.memory_space<vmem>>, %arg13: memref<1x64xf32, #tpu.memory_space<vmem>>, %arg14: memref<3x64x64xbf16, #tpu.memory_space<vmem>>, %arg15: memref<3x64x64xbf16, #tpu.memory_space<vmem>>, %arg16: memref<3x64x32xbf16, #tpu.memory_space<vmem>>, %arg17: memref<1x32xf32, #tpu.memory_space<vmem>>, %arg18: memref<3x32x32xbf16, #tpu.memory_space<vmem>>, %arg19: memref<3x32x32xbf16, #tpu.memory_space<vmem>>, %arg20: memref<3x32x1xbf16, #tpu.memory_space<vmem>>, %arg21: memref<1x1xf32, #tpu.memory_space<vmem>>, %arg22: memref<1x2x128xf32, #tpu.memory_space<vmem>>, %arg23: memref<1x16x1xf32, #tpu.memory_space<vmem>>) attributes {dimension_semantics = [#tpu.dimension_semantics<parallel>], iteration_bounds = array<i64: 2>, scalar_prefetch = 0 : i64, scratch_operands = 0 : i64, tpu.core_type = #tpu.core_type<tc>, window_params = [{transform_indices = @transform_0, window_bounds = array<i64: 1, 16, 1>}, {pipeline_mode = #tpu.pipeline_mode<synchronous>, transform_indices = @transform_1, window_bounds = array<i64: 3, 1, 32>}, {pipeline_mode = #tpu.pipeline_mode<synchronous>, transform_indices = @transform_2, window_bounds = array<i64: 1, 32>}, {pipeline_mode = #tpu.pipeline_mode<synchronous>, transform_indices = @transform_3, window_bounds = array<i64: 3, 32, 32>}, {pipeline_mode = #tpu.pipeline_mode<synchronous>, transform_indices = @transform_4, window_bounds = array<i64: 3, 32, 32>}, {pipeline_mode = #tpu.pipeline_mode<synchronous>, transform_indices = @transform_5, window_bounds = array<i64: 3, 32, 64>}, {pipeline_mode = #tpu.pipeline_mode<synchronous>, transform_indices = @transform_6, window_bounds = array<i64: 1, 64>}, {pipeline_mode = #tpu.pipeline_mode<synchronous>, transform_indices = @transform_7, window_bounds = array<i64: 3, 64, 64>}, {pipeline_mode = #tpu.pipeline_mode<synchronous>, transform_indices = @transform_8, window_bounds = array<i64: 3, 64, 64>}, {pipeline_mode = #tpu.pipeline_mode<synchronous>, transform_indices = @transform_9, window_bounds = array<i64: 3, 64, 128>}, {pipeline_mode = #tpu.pipeline_mode<synchronous>, transform_indices = @transform_10, window_bounds = array<i64: 1, 128>}, {pipeline_mode = #tpu.pipeline_mode<synchronous>, transform_indices = @transform_11, window_bounds = array<i64: 3, 128, 64>}, {pipeline_mode = #tpu.pipeline_mode<synchronous>, transform_indices = @transform_12, window_bounds = array<i64: 1, 64>}, {pipeline_mode = #tpu.pipeline_mode<synchronous>, transform_indices = @transform_13, window_bounds = array<i64: 3, 64, 64>}, {pipeline_mode = #tpu.pipeline_mode<synchronous>, transform_indices = @transform_14, window_bounds = array<i64: 3, 64, 64>}, {pipeline_mode = #tpu.pipeline_mode<synchronous>, transform_indices = @transform_15, window_bounds = array<i64: 3, 64, 32>}, {pipeline_mode = #tpu.pipeline_mode<synchronous>, transform_indices = @transform_16, window_bounds = array<i64: 1, 32>}, {pipeline_mode = #tpu.pipeline_mode<synchronous>, transform_indices = @transform_17, window_bounds = array<i64: 3, 32, 32>}, {pipeline_mode = #tpu.pipeline_mode<synchronous>, transform_indices = @transform_18, window_bounds = array<i64: 3, 32, 32>}, {pipeline_mode = #tpu.pipeline_mode<synchronous>, transform_indices = @transform_19, window_bounds = array<i64: 3, 32, 1>}, {pipeline_mode = #tpu.pipeline_mode<synchronous>, transform_indices = @transform_20, window_bounds = array<i64: 1, 1>}, {transform_indices = @transform_21, window_bounds = array<i64: 1, 2, 128>}, {transform_indices = @transform_22, window_bounds = array<i64: 1, 16, 1>}]} {
    %c0 = arith.constant 0 : index
    %c0_0 = arith.constant 0 : index
    %c0_1 = arith.constant 0 : index
    %0 = vector.load %arg1[%c0, %c0_0, %c0_1] : memref<1x16x1xf32, #tpu.memory_space<vmem>>, vector<1x16x1xf32>
    %1 = vector.shape_cast %0 : vector<1x16x1xf32> to vector<16x1xf32>
    %cst = arith.constant 0.000000e+00 : f32
    %2 = vector.broadcast %cst : f32 to vector<1x1xf32>
    %3 = tpu.concatenate %2, %1, %2 in 0 : vector<1x1xf32>, vector<16x1xf32>, vector<1x1xf32> -> vector<18x1xf32>
    %4 = tpu.iota {dimensions = array<i32: 0>} : vector<8x18xi32>
    %5 = tpu.iota {dimensions = array<i32: 1>} : vector<8x18xi32>
    %c2_i32 = arith.constant 2 : i32
    %6 = vector.broadcast %c2_i32 : i32 to vector<8x18xi32>
    %7 = arith.muli %6, %4 : vector<8x18xi32>
    %c0_i32 = arith.constant 0 : i32
    %8 = vector.broadcast %c0_i32 : i32 to vector<8x18xi32>
    %9 = arith.addi %7, %8 : vector<8x18xi32>
    %10 = arith.cmpi eq, %5, %9 : vector<8x18xi32>
    %cst_2 = arith.constant 1.000000e+00 : f32
    %cst_3 = arith.constant 0.000000e+00 : f32
    %11 = vector.broadcast %cst_2 : f32 to vector<8x18xf32>
    %12 = vector.broadcast %cst_3 : f32 to vector<8x18xf32>
    %13 = arith.select %10, %11, %12 : vector<8x18xi1>, vector<8x18xf32>
    %cst_4 = arith.constant dense<0.000000e+00> : vector<8x1xf32>
    %14 = tpu.matmul %13, %3, %cst_4 {dimension_numbers = #tpu.dot_dimension_numbers<[1], [0], [0], [1], [0, 0, 1, 1], [], []>} : vector<8x18xf32>, vector<18x1xf32>, vector<8x1xf32> -> vector<8x1xf32>
    %c0_5 = arith.constant 0 : index
    %c0_6 = arith.constant 0 : index
    %c0_7 = arith.constant 0 : index
    %15 = vector.load %arg2[%c0_5, %c0_6, %c0_7] : memref<3x1x32xbf16, #tpu.memory_space<vmem>>, vector<1x1x32xbf16>
    %16 = vector.shape_cast %15 : vector<1x1x32xbf16> to vector<1x32xbf16>
    %17 = arith.extf %16 : vector<1x32xbf16> to vector<1x32xf32>
    %18 = vector.broadcast %14 : vector<8x1xf32> to vector<8x32xf32>
    %19 = vector.broadcast %17 : vector<1x32xf32> to vector<8x32xf32>
    %20 = arith.mulf %18, %19 : vector<8x32xf32>
    %21 = tpu.iota {dimensions = array<i32: 0>} : vector<8x18xi32>
    %22 = tpu.iota {dimensions = array<i32: 1>} : vector<8x18xi32>
    %c2_i32_8 = arith.constant 2 : i32
    %23 = vector.broadcast %c2_i32_8 : i32 to vector<8x18xi32>
    %24 = arith.muli %23, %21 : vector<8x18xi32>
    %c1_i32 = arith.constant 1 : i32
    %25 = vector.broadcast %c1_i32 : i32 to vector<8x18xi32>
    %26 = arith.addi %24, %25 : vector<8x18xi32>
    %27 = arith.cmpi eq, %22, %26 : vector<8x18xi32>
    %cst_9 = arith.constant 1.000000e+00 : f32
    %cst_10 = arith.constant 0.000000e+00 : f32
    %28 = vector.broadcast %cst_9 : f32 to vector<8x18xf32>
    %29 = vector.broadcast %cst_10 : f32 to vector<8x18xf32>
    %30 = arith.select %27, %28, %29 : vector<8x18xi1>, vector<8x18xf32>
    %cst_11 = arith.constant dense<0.000000e+00> : vector<8x1xf32>
    %31 = tpu.matmul %30, %3, %cst_11 {dimension_numbers = #tpu.dot_dimension_numbers<[1], [0], [0], [1], [0, 0, 1, 1], [], []>} : vector<8x18xf32>, vector<18x1xf32>, vector<8x1xf32> -> vector<8x1xf32>
    %c1 = arith.constant 1 : index
    %c0_12 = arith.constant 0 : index
    %c0_13 = arith.constant 0 : index
    %32 = vector.load %arg2[%c1, %c0_12, %c0_13] : memref<3x1x32xbf16, #tpu.memory_space<vmem>>, vector<1x1x32xbf16>
    %33 = vector.shape_cast %32 : vector<1x1x32xbf16> to vector<1x32xbf16>
    %34 = arith.extf %33 : vector<1x32xbf16> to vector<1x32xf32>
    %35 = vector.broadcast %31 : vector<8x1xf32> to vector<8x32xf32>
    %36 = vector.broadcast %34 : vector<1x32xf32> to vector<8x32xf32>
    %37 = arith.mulf %35, %36 : vector<8x32xf32>
    %38 = arith.addf %20, %37 : vector<8x32xf32>
    %39 = tpu.iota {dimensions = array<i32: 0>} : vector<8x18xi32>
    %40 = tpu.iota {dimensions = array<i32: 1>} : vector<8x18xi32>
    %c2_i32_14 = arith.constant 2 : i32
    %41 = vector.broadcast %c2_i32_14 : i32 to vector<8x18xi32>
    %42 = arith.muli %41, %39 : vector<8x18xi32>
    %c2_i32_15 = arith.constant 2 : i32
    %43 = vector.broadcast %c2_i32_15 : i32 to vector<8x18xi32>
    %44 = arith.addi %42, %43 : vector<8x18xi32>
    %45 = arith.cmpi eq, %40, %44 : vector<8x18xi32>
    %cst_16 = arith.constant 1.000000e+00 : f32
    %cst_17 = arith.constant 0.000000e+00 : f32
    %46 = vector.broadcast %cst_16 : f32 to vector<8x18xf32>
    %47 = vector.broadcast %cst_17 : f32 to vector<8x18xf32>
    %48 = arith.select %45, %46, %47 : vector<8x18xi1>, vector<8x18xf32>
    %cst_18 = arith.constant dense<0.000000e+00> : vector<8x1xf32>
    %49 = tpu.matmul %48, %3, %cst_18 {dimension_numbers = #tpu.dot_dimension_numbers<[1], [0], [0], [1], [0, 0, 1, 1], [], []>} : vector<8x18xf32>, vector<18x1xf32>, vector<8x1xf32> -> vector<8x1xf32>
    %c2 = arith.constant 2 : index
    %c0_19 = arith.constant 0 : index
    %c0_20 = arith.constant 0 : index
    %50 = vector.load %arg2[%c2, %c0_19, %c0_20] : memref<3x1x32xbf16, #tpu.memory_space<vmem>>, vector<1x1x32xbf16>
    %51 = vector.shape_cast %50 : vector<1x1x32xbf16> to vector<1x32xbf16>
    %52 = arith.extf %51 : vector<1x32xbf16> to vector<1x32xf32>
    %53 = vector.broadcast %49 : vector<8x1xf32> to vector<8x32xf32>
    %54 = vector.broadcast %52 : vector<1x32xf32> to vector<8x32xf32>
    %55 = arith.mulf %53, %54 : vector<8x32xf32>
    %56 = arith.addf %38, %55 : vector<8x32xf32>
    %c0_21 = arith.constant 0 : index
    %c0_22 = arith.constant 0 : index
    %57 = vector.load %arg3[%c0_21, %c0_22] : memref<1x32xf32, #tpu.memory_space<vmem>>, vector<1x32xf32>
    %58 = vector.broadcast %57 : vector<1x32xf32> to vector<8x32xf32>
    %59 = arith.addf %56, %58 : vector<8x32xf32>
    %cst_23 = arith.constant 0.000000e+00 : f32
    %60 = vector.broadcast %cst_23 : f32 to vector<8x32xf32>
    %61 = arith.maximumf %59, %60 : vector<8x32xf32>
    %cst_24 = arith.constant 0.000000e+00 : f32
    %62 = vector.broadcast %cst_24 : f32 to vector<1x32xf32>
    %63 = tpu.concatenate %62, %61, %62 in 0 : vector<1x32xf32>, vector<8x32xf32>, vector<1x32xf32> -> vector<10x32xf32>
    %64 = vector.extract_strided_slice %63 {offsets = [0, 0], sizes = [8, 32], strides = [1, 1]} : vector<10x32xf32> to vector<8x32xf32>
    %c0_25 = arith.constant 0 : index
    %c0_26 = arith.constant 0 : index
    %c0_27 = arith.constant 0 : index
    %65 = vector.load %arg4[%c0_25, %c0_26, %c0_27] : memref<3x32x32xbf16, #tpu.memory_space<vmem>>, vector<1x32x32xbf16>
    %66 = vector.shape_cast %65 : vector<1x32x32xbf16> to vector<32x32xbf16>
    %67 = arith.truncf %64 : vector<8x32xf32> to vector<8x32xbf16>
    %cst_28 = arith.constant dense<0.000000e+00> : vector<8x32xf32>
    %68 = tpu.matmul %67, %66, %cst_28 {dimension_numbers = #tpu.dot_dimension_numbers<[1], [0], [0], [1], [0, 0, 1, 1], [], []>} : vector<8x32xbf16>, vector<32x32xbf16>, vector<8x32xf32> -> vector<8x32xf32>
    %69 = vector.extract_strided_slice %63 {offsets = [1, 0], sizes = [8, 32], strides = [1, 1]} : vector<10x32xf32> to vector<8x32xf32>
    %c1_29 = arith.constant 1 : index
    %c0_30 = arith.constant 0 : index
    %c0_31 = arith.constant 0 : index
    %70 = vector.load %arg4[%c1_29, %c0_30, %c0_31] : memref<3x32x32xbf16, #tpu.memory_space<vmem>>, vector<1x32x32xbf16>
    %71 = vector.shape_cast %70 : vector<1x32x32xbf16> to vector<32x32xbf16>
    %72 = arith.truncf %69 : vector<8x32xf32> to vector<8x32xbf16>
    %cst_32 = arith.constant dense<0.000000e+00> : vector<8x32xf32>
    %73 = tpu.matmul %72, %71, %cst_32 {dimension_numbers = #tpu.dot_dimension_numbers<[1], [0], [0], [1], [0, 0, 1, 1], [], []>} : vector<8x32xbf16>, vector<32x32xbf16>, vector<8x32xf32> -> vector<8x32xf32>
    %74 = arith.addf %68, %73 : vector<8x32xf32>
    %75 = vector.extract_strided_slice %63 {offsets = [2, 0], sizes = [8, 32], strides = [1, 1]} : vector<10x32xf32> to vector<8x32xf32>
    %c2_33 = arith.constant 2 : index
    %c0_34 = arith.constant 0 : index
    %c0_35 = arith.constant 0 : index
    %76 = vector.load %arg4[%c2_33, %c0_34, %c0_35] : memref<3x32x32xbf16, #tpu.memory_space<vmem>>, vector<1x32x32xbf16>
    %77 = vector.shape_cast %76 : vector<1x32x32xbf16> to vector<32x32xbf16>
    %78 = arith.truncf %75 : vector<8x32xf32> to vector<8x32xbf16>
    %cst_36 = arith.constant dense<0.000000e+00> : vector<8x32xf32>
    %79 = tpu.matmul %78, %77, %cst_36 {dimension_numbers = #tpu.dot_dimension_numbers<[1], [0], [0], [1], [0, 0, 1, 1], [], []>} : vector<8x32xbf16>, vector<32x32xbf16>, vector<8x32xf32> -> vector<8x32xf32>
    %80 = arith.addf %74, %79 : vector<8x32xf32>
    %cst_37 = arith.constant 0.000000e+00 : f32
    %81 = vector.broadcast %cst_37 : f32 to vector<8x32xf32>
    %82 = arith.maximumf %80, %81 : vector<8x32xf32>
    %cst_38 = arith.constant 0.000000e+00 : f32
    %83 = vector.broadcast %cst_38 : f32 to vector<1x32xf32>
    %84 = tpu.concatenate %83, %82, %83 in 0 : vector<1x32xf32>, vector<8x32xf32>, vector<1x32xf32> -> vector<10x32xf32>
    %85 = vector.extract_strided_slice %84 {offsets = [0, 0], sizes = [8, 32], strides = [1, 1]} : vector<10x32xf32> to vector<8x32xf32>
    %c0_39 = arith.constant 0 : index
    %c0_40 = arith.constant 0 : index
    %c0_41 = arith.constant 0 : index
    %86 = vector.load %arg5[%c0_39, %c0_40, %c0_41] : memref<3x32x32xbf16, #tpu.memory_space<vmem>>, vector<1x32x32xbf16>
    %87 = vector.shape_cast %86 : vector<1x32x32xbf16> to vector<32x32xbf16>
    %88 = arith.truncf %85 : vector<8x32xf32> to vector<8x32xbf16>
    %cst_42 = arith.constant dense<0.000000e+00> : vector<8x32xf32>
    %89 = tpu.matmul %88, %87, %cst_42 {dimension_numbers = #tpu.dot_dimension_numbers<[1], [0], [0], [1], [0, 0, 1, 1], [], []>} : vector<8x32xbf16>, vector<32x32xbf16>, vector<8x32xf32> -> vector<8x32xf32>
    %90 = vector.extract_strided_slice %84 {offsets = [1, 0], sizes = [8, 32], strides = [1, 1]} : vector<10x32xf32> to vector<8x32xf32>
    %c1_43 = arith.constant 1 : index
    %c0_44 = arith.constant 0 : index
    %c0_45 = arith.constant 0 : index
    %91 = vector.load %arg5[%c1_43, %c0_44, %c0_45] : memref<3x32x32xbf16, #tpu.memory_space<vmem>>, vector<1x32x32xbf16>
    %92 = vector.shape_cast %91 : vector<1x32x32xbf16> to vector<32x32xbf16>
    %93 = arith.truncf %90 : vector<8x32xf32> to vector<8x32xbf16>
    %cst_46 = arith.constant dense<0.000000e+00> : vector<8x32xf32>
    %94 = tpu.matmul %93, %92, %cst_46 {dimension_numbers = #tpu.dot_dimension_numbers<[1], [0], [0], [1], [0, 0, 1, 1], [], []>} : vector<8x32xbf16>, vector<32x32xbf16>, vector<8x32xf32> -> vector<8x32xf32>
    %95 = arith.addf %89, %94 : vector<8x32xf32>
    %96 = vector.extract_strided_slice %84 {offsets = [2, 0], sizes = [8, 32], strides = [1, 1]} : vector<10x32xf32> to vector<8x32xf32>
    %c2_47 = arith.constant 2 : index
    %c0_48 = arith.constant 0 : index
    %c0_49 = arith.constant 0 : index
    %97 = vector.load %arg5[%c2_47, %c0_48, %c0_49] : memref<3x32x32xbf16, #tpu.memory_space<vmem>>, vector<1x32x32xbf16>
    %98 = vector.shape_cast %97 : vector<1x32x32xbf16> to vector<32x32xbf16>
    %99 = arith.truncf %96 : vector<8x32xf32> to vector<8x32xbf16>
    %cst_50 = arith.constant dense<0.000000e+00> : vector<8x32xf32>
    %100 = tpu.matmul %99, %98, %cst_50 {dimension_numbers = #tpu.dot_dimension_numbers<[1], [0], [0], [1], [0, 0, 1, 1], [], []>} : vector<8x32xbf16>, vector<32x32xbf16>, vector<8x32xf32> -> vector<8x32xf32>
    %101 = arith.addf %95, %100 : vector<8x32xf32>
    %cst_51 = arith.constant 0.000000e+00 : f32
    %102 = vector.broadcast %cst_51 : f32 to vector<8x32xf32>
    %103 = arith.maximumf %101, %102 : vector<8x32xf32>
    %104 = arith.addf %103, %61 : vector<8x32xf32>
    %cst_52 = arith.constant 0.000000e+00 : f32
    %105 = vector.broadcast %cst_52 : f32 to vector<8x32xf32>
    %106 = arith.maximumf %104, %105 : vector<8x32xf32>
    %cst_53 = arith.constant 0.000000e+00 : f32
    %107 = vector.broadcast %cst_53 : f32 to vector<1x32xf32>
    %108 = tpu.concatenate %107, %106, %107 in 0 : vector<1x32xf32>, vector<8x32xf32>, vector<1x32xf32> -> vector<10x32xf32>
    %109 = tpu.iota {dimensions = array<i32: 0>} : vector<4x10xi32>
    %110 = tpu.iota {dimensions = array<i32: 1>} : vector<4x10xi32>
    %c2_i32_54 = arith.constant 2 : i32
    %111 = vector.broadcast %c2_i32_54 : i32 to vector<4x10xi32>
    %112 = arith.muli %111, %109 : vector<4x10xi32>
    %c0_i32_55 = arith.constant 0 : i32
    %113 = vector.broadcast %c0_i32_55 : i32 to vector<4x10xi32>
    %114 = arith.addi %112, %113 : vector<4x10xi32>
    %115 = arith.cmpi eq, %110, %114 : vector<4x10xi32>
    %cst_56 = arith.constant 1.000000e+00 : f32
    %cst_57 = arith.constant 0.000000e+00 : f32
    %116 = vector.broadcast %cst_56 : f32 to vector<4x10xf32>
    %117 = vector.broadcast %cst_57 : f32 to vector<4x10xf32>
    %118 = arith.select %115, %116, %117 : vector<4x10xi1>, vector<4x10xf32>
    %cst_58 = arith.constant dense<0.000000e+00> : vector<4x32xf32>
    %119 = tpu.matmul %118, %108, %cst_58 {dimension_numbers = #tpu.dot_dimension_numbers<[1], [0], [0], [1], [0, 0, 1, 1], [], []>} : vector<4x10xf32>, vector<10x32xf32>, vector<4x32xf32> -> vector<4x32xf32>
    %c0_59 = arith.constant 0 : index
    %c0_60 = arith.constant 0 : index
    %c0_61 = arith.constant 0 : index
    %120 = vector.load %arg6[%c0_59, %c0_60, %c0_61] : memref<3x32x64xbf16, #tpu.memory_space<vmem>>, vector<1x32x64xbf16>
    %121 = vector.shape_cast %120 : vector<1x32x64xbf16> to vector<32x64xbf16>
    %122 = arith.truncf %119 : vector<4x32xf32> to vector<4x32xbf16>
    %cst_62 = arith.constant dense<0.000000e+00> : vector<4x64xf32>
    %123 = tpu.matmul %122, %121, %cst_62 {dimension_numbers = #tpu.dot_dimension_numbers<[1], [0], [0], [1], [0, 0, 1, 1], [], []>} : vector<4x32xbf16>, vector<32x64xbf16>, vector<4x64xf32> -> vector<4x64xf32>
    %124 = tpu.iota {dimensions = array<i32: 0>} : vector<4x10xi32>
    %125 = tpu.iota {dimensions = array<i32: 1>} : vector<4x10xi32>
    %c2_i32_63 = arith.constant 2 : i32
    %126 = vector.broadcast %c2_i32_63 : i32 to vector<4x10xi32>
    %127 = arith.muli %126, %124 : vector<4x10xi32>
    %c1_i32_64 = arith.constant 1 : i32
    %128 = vector.broadcast %c1_i32_64 : i32 to vector<4x10xi32>
    %129 = arith.addi %127, %128 : vector<4x10xi32>
    %130 = arith.cmpi eq, %125, %129 : vector<4x10xi32>
    %cst_65 = arith.constant 1.000000e+00 : f32
    %cst_66 = arith.constant 0.000000e+00 : f32
    %131 = vector.broadcast %cst_65 : f32 to vector<4x10xf32>
    %132 = vector.broadcast %cst_66 : f32 to vector<4x10xf32>
    %133 = arith.select %130, %131, %132 : vector<4x10xi1>, vector<4x10xf32>
    %cst_67 = arith.constant dense<0.000000e+00> : vector<4x32xf32>
    %134 = tpu.matmul %133, %108, %cst_67 {dimension_numbers = #tpu.dot_dimension_numbers<[1], [0], [0], [1], [0, 0, 1, 1], [], []>} : vector<4x10xf32>, vector<10x32xf32>, vector<4x32xf32> -> vector<4x32xf32>
    %c1_68 = arith.constant 1 : index
    %c0_69 = arith.constant 0 : index
    %c0_70 = arith.constant 0 : index
    %135 = vector.load %arg6[%c1_68, %c0_69, %c0_70] : memref<3x32x64xbf16, #tpu.memory_space<vmem>>, vector<1x32x64xbf16>
    %136 = vector.shape_cast %135 : vector<1x32x64xbf16> to vector<32x64xbf16>
    %137 = arith.truncf %134 : vector<4x32xf32> to vector<4x32xbf16>
    %cst_71 = arith.constant dense<0.000000e+00> : vector<4x64xf32>
    %138 = tpu.matmul %137, %136, %cst_71 {dimension_numbers = #tpu.dot_dimension_numbers<[1], [0], [0], [1], [0, 0, 1, 1], [], []>} : vector<4x32xbf16>, vector<32x64xbf16>, vector<4x64xf32> -> vector<4x64xf32>
    %139 = arith.addf %123, %138 : vector<4x64xf32>
    %140 = tpu.iota {dimensions = array<i32: 0>} : vector<4x10xi32>
    %141 = tpu.iota {dimensions = array<i32: 1>} : vector<4x10xi32>
    %c2_i32_72 = arith.constant 2 : i32
    %142 = vector.broadcast %c2_i32_72 : i32 to vector<4x10xi32>
    %143 = arith.muli %142, %140 : vector<4x10xi32>
    %c2_i32_73 = arith.constant 2 : i32
    %144 = vector.broadcast %c2_i32_73 : i32 to vector<4x10xi32>
    %145 = arith.addi %143, %144 : vector<4x10xi32>
    %146 = arith.cmpi eq, %141, %145 : vector<4x10xi32>
    %cst_74 = arith.constant 1.000000e+00 : f32
    %cst_75 = arith.constant 0.000000e+00 : f32
    %147 = vector.broadcast %cst_74 : f32 to vector<4x10xf32>
    %148 = vector.broadcast %cst_75 : f32 to vector<4x10xf32>
    %149 = arith.select %146, %147, %148 : vector<4x10xi1>, vector<4x10xf32>
    %cst_76 = arith.constant dense<0.000000e+00> : vector<4x32xf32>
    %150 = tpu.matmul %149, %108, %cst_76 {dimension_numbers = #tpu.dot_dimension_numbers<[1], [0], [0], [1], [0, 0, 1, 1], [], []>} : vector<4x10xf32>, vector<10x32xf32>, vector<4x32xf32> -> vector<4x32xf32>
    %c2_77 = arith.constant 2 : index
    %c0_78 = arith.constant 0 : index
    %c0_79 = arith.constant 0 : index
    %151 = vector.load %arg6[%c2_77, %c0_78, %c0_79] : memref<3x32x64xbf16, #tpu.memory_space<vmem>>, vector<1x32x64xbf16>
    %152 = vector.shape_cast %151 : vector<1x32x64xbf16> to vector<32x64xbf16>
    %153 = arith.truncf %150 : vector<4x32xf32> to vector<4x32xbf16>
    %cst_80 = arith.constant dense<0.000000e+00> : vector<4x64xf32>
    %154 = tpu.matmul %153, %152, %cst_80 {dimension_numbers = #tpu.dot_dimension_numbers<[1], [0], [0], [1], [0, 0, 1, 1], [], []>} : vector<4x32xbf16>, vector<32x64xbf16>, vector<4x64xf32> -> vector<4x64xf32>
    %155 = arith.addf %139, %154 : vector<4x64xf32>
    %c0_81 = arith.constant 0 : index
    %c0_82 = arith.constant 0 : index
    %156 = vector.load %arg7[%c0_81, %c0_82] : memref<1x64xf32, #tpu.memory_space<vmem>>, vector<1x64xf32>
    %157 = vector.broadcast %156 : vector<1x64xf32> to vector<4x64xf32>
    %158 = arith.addf %155, %157 : vector<4x64xf32>
    %cst_83 = arith.constant 0.000000e+00 : f32
    %159 = vector.broadcast %cst_83 : f32 to vector<4x64xf32>
    %160 = arith.maximumf %158, %159 : vector<4x64xf32>
    %cst_84 = arith.constant 0.000000e+00 : f32
    %161 = vector.broadcast %cst_84 : f32 to vector<1x64xf32>
    %162 = tpu.concatenate %161, %160, %161 in 0 : vector<1x64xf32>, vector<4x64xf32>, vector<1x64xf32> -> vector<6x64xf32>
    %163 = vector.extract_strided_slice %162 {offsets = [0, 0], sizes = [4, 64], strides = [1, 1]} : vector<6x64xf32> to vector<4x64xf32>
    %c0_85 = arith.constant 0 : index
    %c0_86 = arith.constant 0 : index
    %c0_87 = arith.constant 0 : index
    %164 = vector.load %arg8[%c0_85, %c0_86, %c0_87] : memref<3x64x64xbf16, #tpu.memory_space<vmem>>, vector<1x64x64xbf16>
    %165 = vector.shape_cast %164 : vector<1x64x64xbf16> to vector<64x64xbf16>
    %166 = arith.truncf %163 : vector<4x64xf32> to vector<4x64xbf16>
    %cst_88 = arith.constant dense<0.000000e+00> : vector<4x64xf32>
    %167 = tpu.matmul %166, %165, %cst_88 {dimension_numbers = #tpu.dot_dimension_numbers<[1], [0], [0], [1], [0, 0, 1, 1], [], []>} : vector<4x64xbf16>, vector<64x64xbf16>, vector<4x64xf32> -> vector<4x64xf32>
    %168 = vector.extract_strided_slice %162 {offsets = [1, 0], sizes = [4, 64], strides = [1, 1]} : vector<6x64xf32> to vector<4x64xf32>
    %c1_89 = arith.constant 1 : index
    %c0_90 = arith.constant 0 : index
    %c0_91 = arith.constant 0 : index
    %169 = vector.load %arg8[%c1_89, %c0_90, %c0_91] : memref<3x64x64xbf16, #tpu.memory_space<vmem>>, vector<1x64x64xbf16>
    %170 = vector.shape_cast %169 : vector<1x64x64xbf16> to vector<64x64xbf16>
    %171 = arith.truncf %168 : vector<4x64xf32> to vector<4x64xbf16>
    %cst_92 = arith.constant dense<0.000000e+00> : vector<4x64xf32>
    %172 = tpu.matmul %171, %170, %cst_92 {dimension_numbers = #tpu.dot_dimension_numbers<[1], [0], [0], [1], [0, 0, 1, 1], [], []>} : vector<4x64xbf16>, vector<64x64xbf16>, vector<4x64xf32> -> vector<4x64xf32>
    %173 = arith.addf %167, %172 : vector<4x64xf32>
    %174 = vector.extract_strided_slice %162 {offsets = [2, 0], sizes = [4, 64], strides = [1, 1]} : vector<6x64xf32> to vector<4x64xf32>
    %c2_93 = arith.constant 2 : index
    %c0_94 = arith.constant 0 : index
    %c0_95 = arith.constant 0 : index
    %175 = vector.load %arg8[%c2_93, %c0_94, %c0_95] : memref<3x64x64xbf16, #tpu.memory_space<vmem>>, vector<1x64x64xbf16>
    %176 = vector.shape_cast %175 : vector<1x64x64xbf16> to vector<64x64xbf16>
    %177 = arith.truncf %174 : vector<4x64xf32> to vector<4x64xbf16>
    %cst_96 = arith.constant dense<0.000000e+00> : vector<4x64xf32>
    %178 = tpu.matmul %177, %176, %cst_96 {dimension_numbers = #tpu.dot_dimension_numbers<[1], [0], [0], [1], [0, 0, 1, 1], [], []>} : vector<4x64xbf16>, vector<64x64xbf16>, vector<4x64xf32> -> vector<4x64xf32>
    %179 = arith.addf %173, %178 : vector<4x64xf32>
    %cst_97 = arith.constant 0.000000e+00 : f32
    %180 = vector.broadcast %cst_97 : f32 to vector<4x64xf32>
    %181 = arith.maximumf %179, %180 : vector<4x64xf32>
    %cst_98 = arith.constant 0.000000e+00 : f32
    %182 = vector.broadcast %cst_98 : f32 to vector<1x64xf32>
    %183 = tpu.concatenate %182, %181, %182 in 0 : vector<1x64xf32>, vector<4x64xf32>, vector<1x64xf32> -> vector<6x64xf32>
    %184 = vector.extract_strided_slice %183 {offsets = [0, 0], sizes = [4, 64], strides = [1, 1]} : vector<6x64xf32> to vector<4x64xf32>
    %c0_99 = arith.constant 0 : index
    %c0_100 = arith.constant 0 : index
    %c0_101 = arith.constant 0 : index
    %185 = vector.load %arg9[%c0_99, %c0_100, %c0_101] : memref<3x64x64xbf16, #tpu.memory_space<vmem>>, vector<1x64x64xbf16>
    %186 = vector.shape_cast %185 : vector<1x64x64xbf16> to vector<64x64xbf16>
    %187 = arith.truncf %184 : vector<4x64xf32> to vector<4x64xbf16>
    %cst_102 = arith.constant dense<0.000000e+00> : vector<4x64xf32>
    %188 = tpu.matmul %187, %186, %cst_102 {dimension_numbers = #tpu.dot_dimension_numbers<[1], [0], [0], [1], [0, 0, 1, 1], [], []>} : vector<4x64xbf16>, vector<64x64xbf16>, vector<4x64xf32> -> vector<4x64xf32>
    %189 = vector.extract_strided_slice %183 {offsets = [1, 0], sizes = [4, 64], strides = [1, 1]} : vector<6x64xf32> to vector<4x64xf32>
    %c1_103 = arith.constant 1 : index
    %c0_104 = arith.constant 0 : index
    %c0_105 = arith.constant 0 : index
    %190 = vector.load %arg9[%c1_103, %c0_104, %c0_105] : memref<3x64x64xbf16, #tpu.memory_space<vmem>>, vector<1x64x64xbf16>
    %191 = vector.shape_cast %190 : vector<1x64x64xbf16> to vector<64x64xbf16>
    %192 = arith.truncf %189 : vector<4x64xf32> to vector<4x64xbf16>
    %cst_106 = arith.constant dense<0.000000e+00> : vector<4x64xf32>
    %193 = tpu.matmul %192, %191, %cst_106 {dimension_numbers = #tpu.dot_dimension_numbers<[1], [0], [0], [1], [0, 0, 1, 1], [], []>} : vector<4x64xbf16>, vector<64x64xbf16>, vector<4x64xf32> -> vector<4x64xf32>
    %194 = arith.addf %188, %193 : vector<4x64xf32>
    %195 = vector.extract_strided_slice %183 {offsets = [2, 0], sizes = [4, 64], strides = [1, 1]} : vector<6x64xf32> to vector<4x64xf32>
    %c2_107 = arith.constant 2 : index
    %c0_108 = arith.constant 0 : index
    %c0_109 = arith.constant 0 : index
    %196 = vector.load %arg9[%c2_107, %c0_108, %c0_109] : memref<3x64x64xbf16, #tpu.memory_space<vmem>>, vector<1x64x64xbf16>
    %197 = vector.shape_cast %196 : vector<1x64x64xbf16> to vector<64x64xbf16>
    %198 = arith.truncf %195 : vector<4x64xf32> to vector<4x64xbf16>
    %cst_110 = arith.constant dense<0.000000e+00> : vector<4x64xf32>
    %199 = tpu.matmul %198, %197, %cst_110 {dimension_numbers = #tpu.dot_dimension_numbers<[1], [0], [0], [1], [0, 0, 1, 1], [], []>} : vector<4x64xbf16>, vector<64x64xbf16>, vector<4x64xf32> -> vector<4x64xf32>
    %200 = arith.addf %194, %199 : vector<4x64xf32>
    %cst_111 = arith.constant 0.000000e+00 : f32
    %201 = vector.broadcast %cst_111 : f32 to vector<4x64xf32>
    %202 = arith.maximumf %200, %201 : vector<4x64xf32>
    %203 = arith.addf %202, %160 : vector<4x64xf32>
    %cst_112 = arith.constant 0.000000e+00 : f32
    %204 = vector.broadcast %cst_112 : f32 to vector<4x64xf32>
    %205 = arith.maximumf %203, %204 : vector<4x64xf32>
    %cst_113 = arith.constant 0.000000e+00 : f32
    %206 = vector.broadcast %cst_113 : f32 to vector<1x64xf32>
    %207 = tpu.concatenate %206, %205, %206 in 0 : vector<1x64xf32>, vector<4x64xf32>, vector<1x64xf32> -> vector<6x64xf32>
    %208 = tpu.iota {dimensions = array<i32: 0>} : vector<2x6xi32>
    %209 = tpu.iota {dimensions = array<i32: 1>} : vector<2x6xi32>
    %c2_i32_114 = arith.constant 2 : i32
    %210 = vector.broadcast %c2_i32_114 : i32 to vector<2x6xi32>
    %211 = arith.muli %210, %208 : vector<2x6xi32>
    %c0_i32_115 = arith.constant 0 : i32
    %212 = vector.broadcast %c0_i32_115 : i32 to vector<2x6xi32>
    %213 = arith.addi %211, %212 : vector<2x6xi32>
    %214 = arith.cmpi eq, %209, %213 : vector<2x6xi32>
    %cst_116 = arith.constant 1.000000e+00 : f32
    %cst_117 = arith.constant 0.000000e+00 : f32
    %215 = vector.broadcast %cst_116 : f32 to vector<2x6xf32>
    %216 = vector.broadcast %cst_117 : f32 to vector<2x6xf32>
    %217 = arith.select %214, %215, %216 : vector<2x6xi1>, vector<2x6xf32>
    %cst_118 = arith.constant dense<0.000000e+00> : vector<2x64xf32>
    %218 = tpu.matmul %217, %207, %cst_118 {dimension_numbers = #tpu.dot_dimension_numbers<[1], [0], [0], [1], [0, 0, 1, 1], [], []>} : vector<2x6xf32>, vector<6x64xf32>, vector<2x64xf32> -> vector<2x64xf32>
    %c0_119 = arith.constant 0 : index
    %c0_120 = arith.constant 0 : index
    %c0_121 = arith.constant 0 : index
    %219 = vector.load %arg10[%c0_119, %c0_120, %c0_121] : memref<3x64x128xbf16, #tpu.memory_space<vmem>>, vector<1x64x128xbf16>
    %220 = vector.shape_cast %219 : vector<1x64x128xbf16> to vector<64x128xbf16>
    %221 = arith.truncf %218 : vector<2x64xf32> to vector<2x64xbf16>
    %cst_122 = arith.constant dense<0.000000e+00> : vector<2x128xf32>
    %222 = tpu.matmul %221, %220, %cst_122 {dimension_numbers = #tpu.dot_dimension_numbers<[1], [0], [0], [1], [0, 0, 1, 1], [], []>} : vector<2x64xbf16>, vector<64x128xbf16>, vector<2x128xf32> -> vector<2x128xf32>
    %223 = tpu.iota {dimensions = array<i32: 0>} : vector<2x6xi32>
    %224 = tpu.iota {dimensions = array<i32: 1>} : vector<2x6xi32>
    %c2_i32_123 = arith.constant 2 : i32
    %225 = vector.broadcast %c2_i32_123 : i32 to vector<2x6xi32>
    %226 = arith.muli %225, %223 : vector<2x6xi32>
    %c1_i32_124 = arith.constant 1 : i32
    %227 = vector.broadcast %c1_i32_124 : i32 to vector<2x6xi32>
    %228 = arith.addi %226, %227 : vector<2x6xi32>
    %229 = arith.cmpi eq, %224, %228 : vector<2x6xi32>
    %cst_125 = arith.constant 1.000000e+00 : f32
    %cst_126 = arith.constant 0.000000e+00 : f32
    %230 = vector.broadcast %cst_125 : f32 to vector<2x6xf32>
    %231 = vector.broadcast %cst_126 : f32 to vector<2x6xf32>
    %232 = arith.select %229, %230, %231 : vector<2x6xi1>, vector<2x6xf32>
    %cst_127 = arith.constant dense<0.000000e+00> : vector<2x64xf32>
    %233 = tpu.matmul %232, %207, %cst_127 {dimension_numbers = #tpu.dot_dimension_numbers<[1], [0], [0], [1], [0, 0, 1, 1], [], []>} : vector<2x6xf32>, vector<6x64xf32>, vector<2x64xf32> -> vector<2x64xf32>
    %c1_128 = arith.constant 1 : index
    %c0_129 = arith.constant 0 : index
    %c0_130 = arith.constant 0 : index
    %234 = vector.load %arg10[%c1_128, %c0_129, %c0_130] : memref<3x64x128xbf16, #tpu.memory_space<vmem>>, vector<1x64x128xbf16>
    %235 = vector.shape_cast %234 : vector<1x64x128xbf16> to vector<64x128xbf16>
    %236 = arith.truncf %233 : vector<2x64xf32> to vector<2x64xbf16>
    %cst_131 = arith.constant dense<0.000000e+00> : vector<2x128xf32>
    %237 = tpu.matmul %236, %235, %cst_131 {dimension_numbers = #tpu.dot_dimension_numbers<[1], [0], [0], [1], [0, 0, 1, 1], [], []>} : vector<2x64xbf16>, vector<64x128xbf16>, vector<2x128xf32> -> vector<2x128xf32>
    %238 = arith.addf %222, %237 : vector<2x128xf32>
    %239 = tpu.iota {dimensions = array<i32: 0>} : vector<2x6xi32>
    %240 = tpu.iota {dimensions = array<i32: 1>} : vector<2x6xi32>
    %c2_i32_132 = arith.constant 2 : i32
    %241 = vector.broadcast %c2_i32_132 : i32 to vector<2x6xi32>
    %242 = arith.muli %241, %239 : vector<2x6xi32>
    %c2_i32_133 = arith.constant 2 : i32
    %243 = vector.broadcast %c2_i32_133 : i32 to vector<2x6xi32>
    %244 = arith.addi %242, %243 : vector<2x6xi32>
    %245 = arith.cmpi eq, %240, %244 : vector<2x6xi32>
    %cst_134 = arith.constant 1.000000e+00 : f32
    %cst_135 = arith.constant 0.000000e+00 : f32
    %246 = vector.broadcast %cst_134 : f32 to vector<2x6xf32>
    %247 = vector.broadcast %cst_135 : f32 to vector<2x6xf32>
    %248 = arith.select %245, %246, %247 : vector<2x6xi1>, vector<2x6xf32>
    %cst_136 = arith.constant dense<0.000000e+00> : vector<2x64xf32>
    %249 = tpu.matmul %248, %207, %cst_136 {dimension_numbers = #tpu.dot_dimension_numbers<[1], [0], [0], [1], [0, 0, 1, 1], [], []>} : vector<2x6xf32>, vector<6x64xf32>, vector<2x64xf32> -> vector<2x64xf32>
    %c2_137 = arith.constant 2 : index
    %c0_138 = arith.constant 0 : index
    %c0_139 = arith.constant 0 : index
    %250 = vector.load %arg10[%c2_137, %c0_138, %c0_139] : memref<3x64x128xbf16, #tpu.memory_space<vmem>>, vector<1x64x128xbf16>
    %251 = vector.shape_cast %250 : vector<1x64x128xbf16> to vector<64x128xbf16>
    %252 = arith.truncf %249 : vector<2x64xf32> to vector<2x64xbf16>
    %cst_140 = arith.constant dense<0.000000e+00> : vector<2x128xf32>
    %253 = tpu.matmul %252, %251, %cst_140 {dimension_numbers = #tpu.dot_dimension_numbers<[1], [0], [0], [1], [0, 0, 1, 1], [], []>} : vector<2x64xbf16>, vector<64x128xbf16>, vector<2x128xf32> -> vector<2x128xf32>
    %254 = arith.addf %238, %253 : vector<2x128xf32>
    %c0_141 = arith.constant 0 : index
    %c0_142 = arith.constant 0 : index
    %255 = vector.load %arg11[%c0_141, %c0_142] : memref<1x128xf32, #tpu.memory_space<vmem>>, vector<1x128xf32>
    %256 = vector.broadcast %255 : vector<1x128xf32> to vector<2x128xf32>
    %257 = arith.addf %254, %256 : vector<2x128xf32>
    %cst_143 = arith.constant 0.000000e+00 : f32
    %258 = vector.broadcast %cst_143 : f32 to vector<2x128xf32>
    %259 = arith.maximumf %257, %258 : vector<2x128xf32>
    %c0_144 = arith.constant 0 : index
    %c0_145 = arith.constant 0 : index
    %c0_146 = arith.constant 0 : index
    %260 = vector.load %arg22[%c0_144, %c0_145, %c0_146] : memref<1x2x128xf32, #tpu.memory_space<vmem>>, vector<1x2x128xf32>
    %261 = vector.shape_cast %260 : vector<1x2x128xf32> to vector<2x128xf32>
    %262 = vector.shape_cast %259 : vector<2x128xf32> to vector<1x2x128xf32>
    tpu.vector_store %arg22[%c0_144, %c0_145, %c0_146], %262 {strides = array<i32>} : memref<1x2x128xf32, #tpu.memory_space<vmem>>, vector<1x2x128xf32>,
    %263 = vector.extract_strided_slice %259 {offsets = [1, 0], sizes = [1, 128], strides = [1, 1]} : vector<2x128xf32> to vector<1x128xf32>
    %cst_147 = arith.constant 0.000000e+00 : f32
    %264 = vector.broadcast %cst_147 : f32 to vector<1x128xf32>
    %265 = tpu.concatenate %263, %264 in 0 : vector<1x128xf32>, vector<1x128xf32> -> vector<2x128xf32>
    %c1_148 = arith.constant 1 : index
    %c0_149 = arith.constant 0 : index
    %c0_150 = arith.constant 0 : index
    %266 = vector.load %arg12[%c1_148, %c0_149, %c0_150] : memref<3x128x64xbf16, #tpu.memory_space<vmem>>, vector<1x128x64xbf16>
    %267 = vector.shape_cast %266 : vector<1x128x64xbf16> to vector<128x64xbf16>
    %268 = arith.truncf %259 : vector<2x128xf32> to vector<2x128xbf16>
    %cst_151 = arith.constant dense<0.000000e+00> : vector<2x64xf32>
    %269 = tpu.matmul %268, %267, %cst_151 {dimension_numbers = #tpu.dot_dimension_numbers<[1], [0], [0], [1], [0, 0, 1, 1], [], []>} : vector<2x128xbf16>, vector<128x64xbf16>, vector<2x64xf32> -> vector<2x64xf32>
    %c2_152 = arith.constant 2 : index
    %c0_153 = arith.constant 0 : index
    %c0_154 = arith.constant 0 : index
    %270 = vector.load %arg12[%c2_152, %c0_153, %c0_154] : memref<3x128x64xbf16, #tpu.memory_space<vmem>>, vector<1x128x64xbf16>
    %271 = vector.shape_cast %270 : vector<1x128x64xbf16> to vector<128x64xbf16>
    %272 = arith.truncf %259 : vector<2x128xf32> to vector<2x128xbf16>
    %cst_155 = arith.constant dense<0.000000e+00> : vector<2x64xf32>
    %273 = tpu.matmul %272, %271, %cst_155 {dimension_numbers = #tpu.dot_dimension_numbers<[1], [0], [0], [1], [0, 0, 1, 1], [], []>} : vector<2x128xbf16>, vector<128x64xbf16>, vector<2x64xf32> -> vector<2x64xf32>
    %c0_156 = arith.constant 0 : index
    %c0_157 = arith.constant 0 : index
    %c0_158 = arith.constant 0 : index
    %274 = vector.load %arg12[%c0_156, %c0_157, %c0_158] : memref<3x128x64xbf16, #tpu.memory_space<vmem>>, vector<1x128x64xbf16>
    %275 = vector.shape_cast %274 : vector<1x128x64xbf16> to vector<128x64xbf16>
    %276 = arith.truncf %265 : vector<2x128xf32> to vector<2x128xbf16>
    %cst_159 = arith.constant dense<0.000000e+00> : vector<2x64xf32>
    %277 = tpu.matmul %276, %275, %cst_159 {dimension_numbers = #tpu.dot_dimension_numbers<[1], [0], [0], [1], [0, 0, 1, 1], [], []>} : vector<2x128xbf16>, vector<128x64xbf16>, vector<2x64xf32> -> vector<2x64xf32>
    %278 = arith.addf %273, %277 : vector<2x64xf32>
    %279 = tpu.iota {dimensions = array<i32: 0>} : vector<4x2xi32>
    %280 = tpu.iota {dimensions = array<i32: 1>} : vector<4x2xi32>
    %c2_i32_160 = arith.constant 2 : i32
    %281 = vector.broadcast %c2_i32_160 : i32 to vector<4x2xi32>
    %282 = arith.muli %281, %280 : vector<4x2xi32>
    %283 = arith.cmpi eq, %279, %282 : vector<4x2xi32>
    %cst_161 = arith.constant 1.000000e+00 : f32
    %cst_162 = arith.constant 0.000000e+00 : f32
    %284 = vector.broadcast %cst_161 : f32 to vector<4x2xf32>
    %285 = vector.broadcast %cst_162 : f32 to vector<4x2xf32>
    %286 = arith.select %283, %284, %285 : vector<4x2xi1>, vector<4x2xf32>
    %287 = tpu.iota {dimensions = array<i32: 0>} : vector<4x2xi32>
    %288 = tpu.iota {dimensions = array<i32: 1>} : vector<4x2xi32>
    %c2_i32_163 = arith.constant 2 : i32
    %289 = vector.broadcast %c2_i32_163 : i32 to vector<4x2xi32>
    %290 = arith.muli %289, %288 : vector<4x2xi32>
    %c1_i32_164 = arith.constant 1 : i32
    %291 = vector.broadcast %c1_i32_164 : i32 to vector<4x2xi32>
    %292 = arith.addi %290, %291 : vector<4x2xi32>
    %293 = arith.cmpi eq, %287, %292 : vector<4x2xi32>
    %cst_165 = arith.constant 1.000000e+00 : f32
    %cst_166 = arith.constant 0.000000e+00 : f32
    %294 = vector.broadcast %cst_165 : f32 to vector<4x2xf32>
    %295 = vector.broadcast %cst_166 : f32 to vector<4x2xf32>
    %296 = arith.select %293, %294, %295 : vector<4x2xi1>, vector<4x2xf32>
    %cst_167 = arith.constant dense<0.000000e+00> : vector<4x64xf32>
    %297 = tpu.matmul %286, %269, %cst_167 {dimension_numbers = #tpu.dot_dimension_numbers<[1], [0], [0], [1], [0, 0, 1, 1], [], []>} : vector<4x2xf32>, vector<2x64xf32>, vector<4x64xf32> -> vector<4x64xf32>
    %cst_168 = arith.constant dense<0.000000e+00> : vector<4x64xf32>
    %298 = tpu.matmul %296, %278, %cst_168 {dimension_numbers = #tpu.dot_dimension_numbers<[1], [0], [0], [1], [0, 0, 1, 1], [], []>} : vector<4x2xf32>, vector<2x64xf32>, vector<4x64xf32> -> vector<4x64xf32>
    %299 = arith.addf %297, %298 : vector<4x64xf32>
    %c0_169 = arith.constant 0 : index
    %c0_170 = arith.constant 0 : index
    %300 = vector.load %arg13[%c0_169, %c0_170] : memref<1x64xf32, #tpu.memory_space<vmem>>, vector<1x64xf32>
    %301 = vector.broadcast %300 : vector<1x64xf32> to vector<4x64xf32>
    %302 = arith.addf %299, %301 : vector<4x64xf32>
    %cst_171 = arith.constant 0.000000e+00 : f32
    %303 = vector.broadcast %cst_171 : f32 to vector<4x64xf32>
    %304 = arith.maximumf %302, %303 : vector<4x64xf32>
    %cst_172 = arith.constant 0.000000e+00 : f32
    %305 = vector.broadcast %cst_172 : f32 to vector<1x64xf32>
    %306 = tpu.concatenate %305, %304, %305 in 0 : vector<1x64xf32>, vector<4x64xf32>, vector<1x64xf32> -> vector<6x64xf32>
    %307 = vector.extract_strided_slice %306 {offsets = [0, 0], sizes = [4, 64], strides = [1, 1]} : vector<6x64xf32> to vector<4x64xf32>
    %c0_173 = arith.constant 0 : index
    %c0_174 = arith.constant 0 : index
    %c0_175 = arith.constant 0 : index
    %308 = vector.load %arg14[%c0_173, %c0_174, %c0_175] : memref<3x64x64xbf16, #tpu.memory_space<vmem>>, vector<1x64x64xbf16>
    %309 = vector.shape_cast %308 : vector<1x64x64xbf16> to vector<64x64xbf16>
    %310 = arith.truncf %307 : vector<4x64xf32> to vector<4x64xbf16>
    %cst_176 = arith.constant dense<0.000000e+00> : vector<4x64xf32>
    %311 = tpu.matmul %310, %309, %cst_176 {dimension_numbers = #tpu.dot_dimension_numbers<[1], [0], [0], [1], [0, 0, 1, 1], [], []>} : vector<4x64xbf16>, vector<64x64xbf16>, vector<4x64xf32> -> vector<4x64xf32>
    %312 = vector.extract_strided_slice %306 {offsets = [1, 0], sizes = [4, 64], strides = [1, 1]} : vector<6x64xf32> to vector<4x64xf32>
    %c1_177 = arith.constant 1 : index
    %c0_178 = arith.constant 0 : index
    %c0_179 = arith.constant 0 : index
    %313 = vector.load %arg14[%c1_177, %c0_178, %c0_179] : memref<3x64x64xbf16, #tpu.memory_space<vmem>>, vector<1x64x64xbf16>
    %314 = vector.shape_cast %313 : vector<1x64x64xbf16> to vector<64x64xbf16>
    %315 = arith.truncf %312 : vector<4x64xf32> to vector<4x64xbf16>
    %cst_180 = arith.constant dense<0.000000e+00> : vector<4x64xf32>
    %316 = tpu.matmul %315, %314, %cst_180 {dimension_numbers = #tpu.dot_dimension_numbers<[1], [0], [0], [1], [0, 0, 1, 1], [], []>} : vector<4x64xbf16>, vector<64x64xbf16>, vector<4x64xf32> -> vector<4x64xf32>
    %317 = arith.addf %311, %316 : vector<4x64xf32>
    %318 = vector.extract_strided_slice %306 {offsets = [2, 0], sizes = [4, 64], strides = [1, 1]} : vector<6x64xf32> to vector<4x64xf32>
    %c2_181 = arith.constant 2 : index
    %c0_182 = arith.constant 0 : index
    %c0_183 = arith.constant 0 : index
    %319 = vector.load %arg14[%c2_181, %c0_182, %c0_183] : memref<3x64x64xbf16, #tpu.memory_space<vmem>>, vector<1x64x64xbf16>
    %320 = vector.shape_cast %319 : vector<1x64x64xbf16> to vector<64x64xbf16>
    %321 = arith.truncf %318 : vector<4x64xf32> to vector<4x64xbf16>
    %cst_184 = arith.constant dense<0.000000e+00> : vector<4x64xf32>
    %322 = tpu.matmul %321, %320, %cst_184 {dimension_numbers = #tpu.dot_dimension_numbers<[1], [0], [0], [1], [0, 0, 1, 1], [], []>} : vector<4x64xbf16>, vector<64x64xbf16>, vector<4x64xf32> -> vector<4x64xf32>
    %323 = arith.addf %317, %322 : vector<4x64xf32>
    %cst_185 = arith.constant 0.000000e+00 : f32
    %324 = vector.broadcast %cst_185 : f32 to vector<4x64xf32>
    %325 = arith.maximumf %323, %324 : vector<4x64xf32>
    %cst_186 = arith.constant 0.000000e+00 : f32
    %326 = vector.broadcast %cst_186 : f32 to vector<1x64xf32>
    %327 = tpu.concatenate %326, %325, %326 in 0 : vector<1x64xf32>, vector<4x64xf32>, vector<1x64xf32> -> vector<6x64xf32>
    %328 = vector.extract_strided_slice %327 {offsets = [0, 0], sizes = [4, 64], strides = [1, 1]} : vector<6x64xf32> to vector<4x64xf32>
    %c0_187 = arith.constant 0 : index
    %c0_188 = arith.constant 0 : index
    %c0_189 = arith.constant 0 : index
    %329 = vector.load %arg15[%c0_187, %c0_188, %c0_189] : memref<3x64x64xbf16, #tpu.memory_space<vmem>>, vector<1x64x64xbf16>
    %330 = vector.shape_cast %329 : vector<1x64x64xbf16> to vector<64x64xbf16>
    %331 = arith.truncf %328 : vector<4x64xf32> to vector<4x64xbf16>
    %cst_190 = arith.constant dense<0.000000e+00> : vector<4x64xf32>
    %332 = tpu.matmul %331, %330, %cst_190 {dimension_numbers = #tpu.dot_dimension_numbers<[1], [0], [0], [1], [0, 0, 1, 1], [], []>} : vector<4x64xbf16>, vector<64x64xbf16>, vector<4x64xf32> -> vector<4x64xf32>
    %333 = vector.extract_strided_slice %327 {offsets = [1, 0], sizes = [4, 64], strides = [1, 1]} : vector<6x64xf32> to vector<4x64xf32>
    %c1_191 = arith.constant 1 : index
    %c0_192 = arith.constant 0 : index
    %c0_193 = arith.constant 0 : index
    %334 = vector.load %arg15[%c1_191, %c0_192, %c0_193] : memref<3x64x64xbf16, #tpu.memory_space<vmem>>, vector<1x64x64xbf16>
    %335 = vector.shape_cast %334 : vector<1x64x64xbf16> to vector<64x64xbf16>
    %336 = arith.truncf %333 : vector<4x64xf32> to vector<4x64xbf16>
    %cst_194 = arith.constant dense<0.000000e+00> : vector<4x64xf32>
    %337 = tpu.matmul %336, %335, %cst_194 {dimension_numbers = #tpu.dot_dimension_numbers<[1], [0], [0], [1], [0, 0, 1, 1], [], []>} : vector<4x64xbf16>, vector<64x64xbf16>, vector<4x64xf32> -> vector<4x64xf32>
    %338 = arith.addf %332, %337 : vector<4x64xf32>
    %339 = vector.extract_strided_slice %327 {offsets = [2, 0], sizes = [4, 64], strides = [1, 1]} : vector<6x64xf32> to vector<4x64xf32>
    %c2_195 = arith.constant 2 : index
    %c0_196 = arith.constant 0 : index
    %c0_197 = arith.constant 0 : index
    %340 = vector.load %arg15[%c2_195, %c0_196, %c0_197] : memref<3x64x64xbf16, #tpu.memory_space<vmem>>, vector<1x64x64xbf16>
    %341 = vector.shape_cast %340 : vector<1x64x64xbf16> to vector<64x64xbf16>
    %342 = arith.truncf %339 : vector<4x64xf32> to vector<4x64xbf16>
    %cst_198 = arith.constant dense<0.000000e+00> : vector<4x64xf32>
    %343 = tpu.matmul %342, %341, %cst_198 {dimension_numbers = #tpu.dot_dimension_numbers<[1], [0], [0], [1], [0, 0, 1, 1], [], []>} : vector<4x64xbf16>, vector<64x64xbf16>, vector<4x64xf32> -> vector<4x64xf32>
    %344 = arith.addf %338, %343 : vector<4x64xf32>
    %cst_199 = arith.constant 0.000000e+00 : f32
    %345 = vector.broadcast %cst_199 : f32 to vector<4x64xf32>
    %346 = arith.maximumf %344, %345 : vector<4x64xf32>
    %347 = arith.addf %346, %304 : vector<4x64xf32>
    %cst_200 = arith.constant 0.000000e+00 : f32
    %348 = vector.broadcast %cst_200 : f32 to vector<4x64xf32>
    %349 = arith.maximumf %347, %348 : vector<4x64xf32>
    %350 = vector.extract_strided_slice %349 {offsets = [1, 0], sizes = [3, 64], strides = [1, 1]} : vector<4x64xf32> to vector<3x64xf32>
    %cst_201 = arith.constant 0.000000e+00 : f32
    %351 = vector.broadcast %cst_201 : f32 to vector<1x64xf32>
    %352 = tpu.concatenate %350, %351 in 0 : vector<3x64xf32>, vector<1x64xf32> -> vector<4x64xf32>
    %c1_202 = arith.constant 1 : index
    %c0_203 = arith.constant 0 : index
    %c0_204 = arith.constant 0 : index
    %353 = vector.load %arg16[%c1_202, %c0_203, %c0_204] : memref<3x64x32xbf16, #tpu.memory_space<vmem>>, vector<1x64x32xbf16>
    %354 = vector.shape_cast %353 : vector<1x64x32xbf16> to vector<64x32xbf16>
    %355 = arith.truncf %349 : vector<4x64xf32> to vector<4x64xbf16>
    %cst_205 = arith.constant dense<0.000000e+00> : vector<4x32xf32>
    %356 = tpu.matmul %355, %354, %cst_205 {dimension_numbers = #tpu.dot_dimension_numbers<[1], [0], [0], [1], [0, 0, 1, 1], [], []>} : vector<4x64xbf16>, vector<64x32xbf16>, vector<4x32xf32> -> vector<4x32xf32>
    %c2_206 = arith.constant 2 : index
    %c0_207 = arith.constant 0 : index
    %c0_208 = arith.constant 0 : index
    %357 = vector.load %arg16[%c2_206, %c0_207, %c0_208] : memref<3x64x32xbf16, #tpu.memory_space<vmem>>, vector<1x64x32xbf16>
    %358 = vector.shape_cast %357 : vector<1x64x32xbf16> to vector<64x32xbf16>
    %359 = arith.truncf %349 : vector<4x64xf32> to vector<4x64xbf16>
    %cst_209 = arith.constant dense<0.000000e+00> : vector<4x32xf32>
    %360 = tpu.matmul %359, %358, %cst_209 {dimension_numbers = #tpu.dot_dimension_numbers<[1], [0], [0], [1], [0, 0, 1, 1], [], []>} : vector<4x64xbf16>, vector<64x32xbf16>, vector<4x32xf32> -> vector<4x32xf32>
    %c0_210 = arith.constant 0 : index
    %c0_211 = arith.constant 0 : index
    %c0_212 = arith.constant 0 : index
    %361 = vector.load %arg16[%c0_210, %c0_211, %c0_212] : memref<3x64x32xbf16, #tpu.memory_space<vmem>>, vector<1x64x32xbf16>
    %362 = vector.shape_cast %361 : vector<1x64x32xbf16> to vector<64x32xbf16>
    %363 = arith.truncf %352 : vector<4x64xf32> to vector<4x64xbf16>
    %cst_213 = arith.constant dense<0.000000e+00> : vector<4x32xf32>
    %364 = tpu.matmul %363, %362, %cst_213 {dimension_numbers = #tpu.dot_dimension_numbers<[1], [0], [0], [1], [0, 0, 1, 1], [], []>} : vector<4x64xbf16>, vector<64x32xbf16>, vector<4x32xf32> -> vector<4x32xf32>
    %365 = arith.addf %360, %364 : vector<4x32xf32>
    %366 = tpu.iota {dimensions = array<i32: 0>} : vector<8x4xi32>
    %367 = tpu.iota {dimensions = array<i32: 1>} : vector<8x4xi32>
    %c2_i32_214 = arith.constant 2 : i32
    %368 = vector.broadcast %c2_i32_214 : i32 to vector<8x4xi32>
    %369 = arith.muli %368, %367 : vector<8x4xi32>
    %370 = arith.cmpi eq, %366, %369 : vector<8x4xi32>
    %cst_215 = arith.constant 1.000000e+00 : f32
    %cst_216 = arith.constant 0.000000e+00 : f32
    %371 = vector.broadcast %cst_215 : f32 to vector<8x4xf32>
    %372 = vector.broadcast %cst_216 : f32 to vector<8x4xf32>
    %373 = arith.select %370, %371, %372 : vector<8x4xi1>, vector<8x4xf32>
    %374 = tpu.iota {dimensions = array<i32: 0>} : vector<8x4xi32>
    %375 = tpu.iota {dimensions = array<i32: 1>} : vector<8x4xi32>
    %c2_i32_217 = arith.constant 2 : i32
    %376 = vector.broadcast %c2_i32_217 : i32 to vector<8x4xi32>
    %377 = arith.muli %376, %375 : vector<8x4xi32>
    %c1_i32_218 = arith.constant 1 : i32
    %378 = vector.broadcast %c1_i32_218 : i32 to vector<8x4xi32>
    %379 = arith.addi %377, %378 : vector<8x4xi32>
    %380 = arith.cmpi eq, %374, %379 : vector<8x4xi32>
    %cst_219 = arith.constant 1.000000e+00 : f32
    %cst_220 = arith.constant 0.000000e+00 : f32
    %381 = vector.broadcast %cst_219 : f32 to vector<8x4xf32>
    %382 = vector.broadcast %cst_220 : f32 to vector<8x4xf32>
    %383 = arith.select %380, %381, %382 : vector<8x4xi1>, vector<8x4xf32>
    %cst_221 = arith.constant dense<0.000000e+00> : vector<8x32xf32>
    %384 = tpu.matmul %373, %356, %cst_221 {dimension_numbers = #tpu.dot_dimension_numbers<[1], [0], [0], [1], [0, 0, 1, 1], [], []>} : vector<8x4xf32>, vector<4x32xf32>, vector<8x32xf32> -> vector<8x32xf32>
    %cst_222 = arith.constant dense<0.000000e+00> : vector<8x32xf32>
    %385 = tpu.matmul %383, %365, %cst_222 {dimension_numbers = #tpu.dot_dimension_numbers<[1], [0], [0], [1], [0, 0, 1, 1], [], []>} : vector<8x4xf32>, vector<4x32xf32>, vector<8x32xf32> -> vector<8x32xf32>
    %386 = arith.addf %384, %385 : vector<8x32xf32>
    %c0_223 = arith.constant 0 : index
    %c0_224 = arith.constant 0 : index
    %387 = vector.load %arg17[%c0_223, %c0_224] : memref<1x32xf32, #tpu.memory_space<vmem>>, vector<1x32xf32>
    %388 = vector.broadcast %387 : vector<1x32xf32> to vector<8x32xf32>
    %389 = arith.addf %386, %388 : vector<8x32xf32>
    %cst_225 = arith.constant 0.000000e+00 : f32
    %390 = vector.broadcast %cst_225 : f32 to vector<8x32xf32>
    %391 = arith.maximumf %389, %390 : vector<8x32xf32>
    %cst_226 = arith.constant 0.000000e+00 : f32
    %392 = vector.broadcast %cst_226 : f32 to vector<1x32xf32>
    %393 = tpu.concatenate %392, %391, %392 in 0 : vector<1x32xf32>, vector<8x32xf32>, vector<1x32xf32> -> vector<10x32xf32>
    %394 = vector.extract_strided_slice %393 {offsets = [0, 0], sizes = [8, 32], strides = [1, 1]} : vector<10x32xf32> to vector<8x32xf32>
    %c0_227 = arith.constant 0 : index
    %c0_228 = arith.constant 0 : index
    %c0_229 = arith.constant 0 : index
    %395 = vector.load %arg18[%c0_227, %c0_228, %c0_229] : memref<3x32x32xbf16, #tpu.memory_space<vmem>>, vector<1x32x32xbf16>
    %396 = vector.shape_cast %395 : vector<1x32x32xbf16> to vector<32x32xbf16>
    %397 = arith.truncf %394 : vector<8x32xf32> to vector<8x32xbf16>
    %cst_230 = arith.constant dense<0.000000e+00> : vector<8x32xf32>
    %398 = tpu.matmul %397, %396, %cst_230 {dimension_numbers = #tpu.dot_dimension_numbers<[1], [0], [0], [1], [0, 0, 1, 1], [], []>} : vector<8x32xbf16>, vector<32x32xbf16>, vector<8x32xf32> -> vector<8x32xf32>
    %399 = vector.extract_strided_slice %393 {offsets = [1, 0], sizes = [8, 32], strides = [1, 1]} : vector<10x32xf32> to vector<8x32xf32>
    %c1_231 = arith.constant 1 : index
    %c0_232 = arith.constant 0 : index
    %c0_233 = arith.constant 0 : index
    %400 = vector.load %arg18[%c1_231, %c0_232, %c0_233] : memref<3x32x32xbf16, #tpu.memory_space<vmem>>, vector<1x32x32xbf16>
    %401 = vector.shape_cast %400 : vector<1x32x32xbf16> to vector<32x32xbf16>
    %402 = arith.truncf %399 : vector<8x32xf32> to vector<8x32xbf16>
    %cst_234 = arith.constant dense<0.000000e+00> : vector<8x32xf32>
    %403 = tpu.matmul %402, %401, %cst_234 {dimension_numbers = #tpu.dot_dimension_numbers<[1], [0], [0], [1], [0, 0, 1, 1], [], []>} : vector<8x32xbf16>, vector<32x32xbf16>, vector<8x32xf32> -> vector<8x32xf32>
    %404 = arith.addf %398, %403 : vector<8x32xf32>
    %405 = vector.extract_strided_slice %393 {offsets = [2, 0], sizes = [8, 32], strides = [1, 1]} : vector<10x32xf32> to vector<8x32xf32>
    %c2_235 = arith.constant 2 : index
    %c0_236 = arith.constant 0 : index
    %c0_237 = arith.constant 0 : index
    %406 = vector.load %arg18[%c2_235, %c0_236, %c0_237] : memref<3x32x32xbf16, #tpu.memory_space<vmem>>, vector<1x32x32xbf16>
    %407 = vector.shape_cast %406 : vector<1x32x32xbf16> to vector<32x32xbf16>
    %408 = arith.truncf %405 : vector<8x32xf32> to vector<8x32xbf16>
    %cst_238 = arith.constant dense<0.000000e+00> : vector<8x32xf32>
    %409 = tpu.matmul %408, %407, %cst_238 {dimension_numbers = #tpu.dot_dimension_numbers<[1], [0], [0], [1], [0, 0, 1, 1], [], []>} : vector<8x32xbf16>, vector<32x32xbf16>, vector<8x32xf32> -> vector<8x32xf32>
    %410 = arith.addf %404, %409 : vector<8x32xf32>
    %cst_239 = arith.constant 0.000000e+00 : f32
    %411 = vector.broadcast %cst_239 : f32 to vector<8x32xf32>
    %412 = arith.maximumf %410, %411 : vector<8x32xf32>
    %cst_240 = arith.constant 0.000000e+00 : f32
    %413 = vector.broadcast %cst_240 : f32 to vector<1x32xf32>
    %414 = tpu.concatenate %413, %412, %413 in 0 : vector<1x32xf32>, vector<8x32xf32>, vector<1x32xf32> -> vector<10x32xf32>
    %415 = vector.extract_strided_slice %414 {offsets = [0, 0], sizes = [8, 32], strides = [1, 1]} : vector<10x32xf32> to vector<8x32xf32>
    %c0_241 = arith.constant 0 : index
    %c0_242 = arith.constant 0 : index
    %c0_243 = arith.constant 0 : index
    %416 = vector.load %arg19[%c0_241, %c0_242, %c0_243] : memref<3x32x32xbf16, #tpu.memory_space<vmem>>, vector<1x32x32xbf16>
    %417 = vector.shape_cast %416 : vector<1x32x32xbf16> to vector<32x32xbf16>
    %418 = arith.truncf %415 : vector<8x32xf32> to vector<8x32xbf16>
    %cst_244 = arith.constant dense<0.000000e+00> : vector<8x32xf32>
    %419 = tpu.matmul %418, %417, %cst_244 {dimension_numbers = #tpu.dot_dimension_numbers<[1], [0], [0], [1], [0, 0, 1, 1], [], []>} : vector<8x32xbf16>, vector<32x32xbf16>, vector<8x32xf32> -> vector<8x32xf32>
    %420 = vector.extract_strided_slice %414 {offsets = [1, 0], sizes = [8, 32], strides = [1, 1]} : vector<10x32xf32> to vector<8x32xf32>
    %c1_245 = arith.constant 1 : index
    %c0_246 = arith.constant 0 : index
    %c0_247 = arith.constant 0 : index
    %421 = vector.load %arg19[%c1_245, %c0_246, %c0_247] : memref<3x32x32xbf16, #tpu.memory_space<vmem>>, vector<1x32x32xbf16>
    %422 = vector.shape_cast %421 : vector<1x32x32xbf16> to vector<32x32xbf16>
    %423 = arith.truncf %420 : vector<8x32xf32> to vector<8x32xbf16>
    %cst_248 = arith.constant dense<0.000000e+00> : vector<8x32xf32>
    %424 = tpu.matmul %423, %422, %cst_248 {dimension_numbers = #tpu.dot_dimension_numbers<[1], [0], [0], [1], [0, 0, 1, 1], [], []>} : vector<8x32xbf16>, vector<32x32xbf16>, vector<8x32xf32> -> vector<8x32xf32>
    %425 = arith.addf %419, %424 : vector<8x32xf32>
    %426 = vector.extract_strided_slice %414 {offsets = [2, 0], sizes = [8, 32], strides = [1, 1]} : vector<10x32xf32> to vector<8x32xf32>
    %c2_249 = arith.constant 2 : index
    %c0_250 = arith.constant 0 : index
    %c0_251 = arith.constant 0 : index
    %427 = vector.load %arg19[%c2_249, %c0_250, %c0_251] : memref<3x32x32xbf16, #tpu.memory_space<vmem>>, vector<1x32x32xbf16>
    %428 = vector.shape_cast %427 : vector<1x32x32xbf16> to vector<32x32xbf16>
    %429 = arith.truncf %426 : vector<8x32xf32> to vector<8x32xbf16>
    %cst_252 = arith.constant dense<0.000000e+00> : vector<8x32xf32>
    %430 = tpu.matmul %429, %428, %cst_252 {dimension_numbers = #tpu.dot_dimension_numbers<[1], [0], [0], [1], [0, 0, 1, 1], [], []>} : vector<8x32xbf16>, vector<32x32xbf16>, vector<8x32xf32> -> vector<8x32xf32>
    %431 = arith.addf %425, %430 : vector<8x32xf32>
    %cst_253 = arith.constant 0.000000e+00 : f32
    %432 = vector.broadcast %cst_253 : f32 to vector<8x32xf32>
    %433 = arith.maximumf %431, %432 : vector<8x32xf32>
    %434 = arith.addf %433, %391 : vector<8x32xf32>
    %cst_254 = arith.constant 0.000000e+00 : f32
    %435 = vector.broadcast %cst_254 : f32 to vector<8x32xf32>
    %436 = arith.maximumf %434, %435 : vector<8x32xf32>
    %437 = vector.extract_strided_slice %436 {offsets = [1, 0], sizes = [7, 32], strides = [1, 1]} : vector<8x32xf32> to vector<7x32xf32>
    %cst_255 = arith.constant 0.000000e+00 : f32
    %438 = vector.broadcast %cst_255 : f32 to vector<1x32xf32>
    %439 = tpu.concatenate %437, %438 in 0 : vector<7x32xf32>, vector<1x32xf32> -> vector<8x32xf32>
    %c1_256 = arith.constant 1 : index
    %c0_257 = arith.constant 0 : index
    %c0_258 = arith.constant 0 : index
    %440 = vector.load %arg20[%c1_256, %c0_257, %c0_258] : memref<3x32x1xbf16, #tpu.memory_space<vmem>>, vector<1x32x1xbf16>
    %441 = vector.shape_cast %440 : vector<1x32x1xbf16> to vector<32x1xbf16>
    %442 = arith.truncf %436 : vector<8x32xf32> to vector<8x32xbf16>
    %cst_259 = arith.constant dense<0.000000e+00> : vector<8x1xf32>
    %443 = tpu.matmul %442, %441, %cst_259 {dimension_numbers = #tpu.dot_dimension_numbers<[1], [0], [0], [1], [0, 0, 1, 1], [], []>} : vector<8x32xbf16>, vector<32x1xbf16>, vector<8x1xf32> -> vector<8x1xf32>
    %c2_260 = arith.constant 2 : index
    %c0_261 = arith.constant 0 : index
    %c0_262 = arith.constant 0 : index
    %444 = vector.load %arg20[%c2_260, %c0_261, %c0_262] : memref<3x32x1xbf16, #tpu.memory_space<vmem>>, vector<1x32x1xbf16>
    %445 = vector.shape_cast %444 : vector<1x32x1xbf16> to vector<32x1xbf16>
    %446 = arith.truncf %436 : vector<8x32xf32> to vector<8x32xbf16>
    %cst_263 = arith.constant dense<0.000000e+00> : vector<8x1xf32>
    %447 = tpu.matmul %446, %445, %cst_263 {dimension_numbers = #tpu.dot_dimension_numbers<[1], [0], [0], [1], [0, 0, 1, 1], [], []>} : vector<8x32xbf16>, vector<32x1xbf16>, vector<8x1xf32> -> vector<8x1xf32>
    %c0_264 = arith.constant 0 : index
    %c0_265 = arith.constant 0 : index
    %c0_266 = arith.constant 0 : index
    %448 = vector.load %arg20[%c0_264, %c0_265, %c0_266] : memref<3x32x1xbf16, #tpu.memory_space<vmem>>, vector<1x32x1xbf16>
    %449 = vector.shape_cast %448 : vector<1x32x1xbf16> to vector<32x1xbf16>
    %450 = arith.truncf %439 : vector<8x32xf32> to vector<8x32xbf16>
    %cst_267 = arith.constant dense<0.000000e+00> : vector<8x1xf32>
    %451 = tpu.matmul %450, %449, %cst_267 {dimension_numbers = #tpu.dot_dimension_numbers<[1], [0], [0], [1], [0, 0, 1, 1], [], []>} : vector<8x32xbf16>, vector<32x1xbf16>, vector<8x1xf32> -> vector<8x1xf32>
    %452 = arith.addf %447, %451 : vector<8x1xf32>
    %453 = tpu.iota {dimensions = array<i32: 0>} : vector<16x8xi32>
    %454 = tpu.iota {dimensions = array<i32: 1>} : vector<16x8xi32>
    %c2_i32_268 = arith.constant 2 : i32
    %455 = vector.broadcast %c2_i32_268 : i32 to vector<16x8xi32>
    %456 = arith.muli %455, %454 : vector<16x8xi32>
    %457 = arith.cmpi eq, %453, %456 : vector<16x8xi32>
    %cst_269 = arith.constant 1.000000e+00 : f32
    %cst_270 = arith.constant 0.000000e+00 : f32
    %458 = vector.broadcast %cst_269 : f32 to vector<16x8xf32>
    %459 = vector.broadcast %cst_270 : f32 to vector<16x8xf32>
    %460 = arith.select %457, %458, %459 : vector<16x8xi1>, vector<16x8xf32>
    %461 = tpu.iota {dimensions = array<i32: 0>} : vector<16x8xi32>
    %462 = tpu.iota {dimensions = array<i32: 1>} : vector<16x8xi32>
    %c2_i32_271 = arith.constant 2 : i32
    %463 = vector.broadcast %c2_i32_271 : i32 to vector<16x8xi32>
    %464 = arith.muli %463, %462 : vector<16x8xi32>
    %c1_i32_272 = arith.constant 1 : i32
    %465 = vector.broadcast %c1_i32_272 : i32 to vector<16x8xi32>
    %466 = arith.addi %464, %465 : vector<16x8xi32>
    %467 = arith.cmpi eq, %461, %466 : vector<16x8xi32>
    %cst_273 = arith.constant 1.000000e+00 : f32
    %cst_274 = arith.constant 0.000000e+00 : f32
    %468 = vector.broadcast %cst_273 : f32 to vector<16x8xf32>
    %469 = vector.broadcast %cst_274 : f32 to vector<16x8xf32>
    %470 = arith.select %467, %468, %469 : vector<16x8xi1>, vector<16x8xf32>
    %cst_275 = arith.constant dense<0.000000e+00> : vector<16x1xf32>
    %471 = tpu.matmul %460, %443, %cst_275 {dimension_numbers = #tpu.dot_dimension_numbers<[1], [0], [0], [1], [0, 0, 1, 1], [], []>} : vector<16x8xf32>, vector<8x1xf32>, vector<16x1xf32> -> vector<16x1xf32>
    %cst_276 = arith.constant dense<0.000000e+00> : vector<16x1xf32>
    %472 = tpu.matmul %470, %452, %cst_276 {dimension_numbers = #tpu.dot_dimension_numbers<[1], [0], [0], [1], [0, 0, 1, 1], [], []>} : vector<16x8xf32>, vector<8x1xf32>, vector<16x1xf32> -> vector<16x1xf32>
    %473 = arith.addf %471, %472 : vector<16x1xf32>
    %c0_277 = arith.constant 0 : index
    %c0_278 = arith.constant 0 : index
    %474 = vector.load %arg21[%c0_277, %c0_278] : memref<1x1xf32, #tpu.memory_space<vmem>>, vector<1x1xf32>
    %475 = vector.broadcast %474 : vector<1x1xf32> to vector<16x1xf32>
    %476 = arith.addf %473, %475 : vector<16x1xf32>
    %cst_279 = arith.constant 0.000000e+00 : f32
    %477 = vector.broadcast %cst_279 : f32 to vector<16x1xf32>
    %478 = arith.maximumf %476, %477 : vector<16x1xf32>
    %c0_280 = arith.constant 0 : index
    %c0_281 = arith.constant 0 : index
    %c0_282 = arith.constant 0 : index
    %479 = vector.load %arg23[%c0_280, %c0_281, %c0_282] : memref<1x16x1xf32, #tpu.memory_space<vmem>>, vector<1x16x1xf32>
    %480 = vector.shape_cast %479 : vector<1x16x1xf32> to vector<16x1xf32>
    %481 = vector.shape_cast %478 : vector<16x1xf32> to vector<1x16x1xf32>
    tpu.vector_store %arg23[%c0_280, %c0_281, %c0_282], %481 {strides = array<i32>} : memref<1x16x1xf32, #tpu.memory_space<vmem>>, vector<1x16x1xf32>,
    return
  }
  func.func @transform_0(%arg0: i32) -> (i32, i32, i32) {
    %c0_i32 = arith.constant 0 : i32
    %c0_i32_0 = arith.constant 0 : i32
    %c0_i32_1 = arith.constant 0 : i32
    return %arg0, %c0_i32, %c0_i32_0 : i32, i32, i32
  }
  func.func @transform_1(%arg0: i32) -> (i32, i32, i32) {
    %c0_i32 = arith.constant 0 : i32
    %c0_i32_0 = arith.constant 0 : i32
    %c0_i32_1 = arith.constant 0 : i32
    %c0_i32_2 = arith.constant 0 : i32
    return %c0_i32, %c0_i32_0, %c0_i32_1 : i32, i32, i32
  }
  func.func @transform_2(%arg0: i32) -> (i32, i32) {
    %c0_i32 = arith.constant 0 : i32
    %c0_i32_0 = arith.constant 0 : i32
    %c0_i32_1 = arith.constant 0 : i32
    return %c0_i32, %c0_i32_0 : i32, i32
  }
  func.func @transform_3(%arg0: i32) -> (i32, i32, i32) {
    %c0_i32 = arith.constant 0 : i32
    %c0_i32_0 = arith.constant 0 : i32
    %c0_i32_1 = arith.constant 0 : i32
    %c0_i32_2 = arith.constant 0 : i32
    return %c0_i32, %c0_i32_0, %c0_i32_1 : i32, i32, i32
  }
  func.func @transform_4(%arg0: i32) -> (i32, i32, i32) {
    %c0_i32 = arith.constant 0 : i32
    %c0_i32_0 = arith.constant 0 : i32
    %c0_i32_1 = arith.constant 0 : i32
    %c0_i32_2 = arith.constant 0 : i32
    return %c0_i32, %c0_i32_0, %c0_i32_1 : i32, i32, i32
  }
  func.func @transform_5(%arg0: i32) -> (i32, i32, i32) {
    %c0_i32 = arith.constant 0 : i32
    %c0_i32_0 = arith.constant 0 : i32
    %c0_i32_1 = arith.constant 0 : i32
    %c0_i32_2 = arith.constant 0 : i32
    return %c0_i32, %c0_i32_0, %c0_i32_1 : i32, i32, i32
  }
  func.func @transform_6(%arg0: i32) -> (i32, i32) {
    %c0_i32 = arith.constant 0 : i32
    %c0_i32_0 = arith.constant 0 : i32
    %c0_i32_1 = arith.constant 0 : i32
    return %c0_i32, %c0_i32_0 : i32, i32
  }
  func.func @transform_7(%arg0: i32) -> (i32, i32, i32) {
    %c0_i32 = arith.constant 0 : i32
    %c0_i32_0 = arith.constant 0 : i32
    %c0_i32_1 = arith.constant 0 : i32
    %c0_i32_2 = arith.constant 0 : i32
    return %c0_i32, %c0_i32_0, %c0_i32_1 : i32, i32, i32
  }
  func.func @transform_8(%arg0: i32) -> (i32, i32, i32) {
    %c0_i32 = arith.constant 0 : i32
    %c0_i32_0 = arith.constant 0 : i32
    %c0_i32_1 = arith.constant 0 : i32
    %c0_i32_2 = arith.constant 0 : i32
    return %c0_i32, %c0_i32_0, %c0_i32_1 : i32, i32, i32
  }
  func.func @transform_9(%arg0: i32) -> (i32, i32, i32) {
    %c0_i32 = arith.constant 0 : i32
    %c0_i32_0 = arith.constant 0 : i32
    %c0_i32_1 = arith.constant 0 : i32
    %c0_i32_2 = arith.constant 0 : i32
    return %c0_i32, %c0_i32_0, %c0_i32_1 : i32, i32, i32
  }
  func.func @transform_10(%arg0: i32) -> (i32, i32) {
    %c0_i32 = arith.constant 0 : i32
    %c0_i32_0 = arith.constant 0 : i32
    %c0_i32_1 = arith.constant 0 : i32
    return %c0_i32, %c0_i32_0 : i32, i32
  }
  func.func @transform_11(%arg0: i32) -> (i32, i32, i32) {
    %c0_i32 = arith.constant 0 : i32
    %c0_i32_0 = arith.constant 0 : i32
    %c0_i32_1 = arith.constant 0 : i32
    %c0_i32_2 = arith.constant 0 : i32
    return %c0_i32, %c0_i32_0, %c0_i32_1 : i32, i32, i32
  }
  func.func @transform_12(%arg0: i32) -> (i32, i32) {
    %c0_i32 = arith.constant 0 : i32
    %c0_i32_0 = arith.constant 0 : i32
    %c0_i32_1 = arith.constant 0 : i32
    return %c0_i32, %c0_i32_0 : i32, i32
  }
  func.func @transform_13(%arg0: i32) -> (i32, i32, i32) {
    %c0_i32 = arith.constant 0 : i32
    %c0_i32_0 = arith.constant 0 : i32
    %c0_i32_1 = arith.constant 0 : i32
    %c0_i32_2 = arith.constant 0 : i32
    return %c0_i32, %c0_i32_0, %c0_i32_1 : i32, i32, i32
  }
  func.func @transform_14(%arg0: i32) -> (i32, i32, i32) {
    %c0_i32 = arith.constant 0 : i32
    %c0_i32_0 = arith.constant 0 : i32
    %c0_i32_1 = arith.constant 0 : i32
    %c0_i32_2 = arith.constant 0 : i32
    return %c0_i32, %c0_i32_0, %c0_i32_1 : i32, i32, i32
  }
  func.func @transform_15(%arg0: i32) -> (i32, i32, i32) {
    %c0_i32 = arith.constant 0 : i32
    %c0_i32_0 = arith.constant 0 : i32
    %c0_i32_1 = arith.constant 0 : i32
    %c0_i32_2 = arith.constant 0 : i32
    return %c0_i32, %c0_i32_0, %c0_i32_1 : i32, i32, i32
  }
  func.func @transform_16(%arg0: i32) -> (i32, i32) {
    %c0_i32 = arith.constant 0 : i32
    %c0_i32_0 = arith.constant 0 : i32
    %c0_i32_1 = arith.constant 0 : i32
    return %c0_i32, %c0_i32_0 : i32, i32
  }
  func.func @transform_17(%arg0: i32) -> (i32, i32, i32) {
    %c0_i32 = arith.constant 0 : i32
    %c0_i32_0 = arith.constant 0 : i32
    %c0_i32_1 = arith.constant 0 : i32
    %c0_i32_2 = arith.constant 0 : i32
    return %c0_i32, %c0_i32_0, %c0_i32_1 : i32, i32, i32
  }
  func.func @transform_18(%arg0: i32) -> (i32, i32, i32) {
    %c0_i32 = arith.constant 0 : i32
    %c0_i32_0 = arith.constant 0 : i32
    %c0_i32_1 = arith.constant 0 : i32
    %c0_i32_2 = arith.constant 0 : i32
    return %c0_i32, %c0_i32_0, %c0_i32_1 : i32, i32, i32
  }
  func.func @transform_19(%arg0: i32) -> (i32, i32, i32) {
    %c0_i32 = arith.constant 0 : i32
    %c0_i32_0 = arith.constant 0 : i32
    %c0_i32_1 = arith.constant 0 : i32
    %c0_i32_2 = arith.constant 0 : i32
    return %c0_i32, %c0_i32_0, %c0_i32_1 : i32, i32, i32
  }
  func.func @transform_20(%arg0: i32) -> (i32, i32) {
    %c0_i32 = arith.constant 0 : i32
    %c0_i32_0 = arith.constant 0 : i32
    %c0_i32_1 = arith.constant 0 : i32
    return %c0_i32, %c0_i32_0 : i32, i32
  }
  func.func @transform_21(%arg0: i32) -> (i32, i32, i32) {
    %c0_i32 = arith.constant 0 : i32
    %c0_i32_0 = arith.constant 0 : i32
    %c0_i32_1 = arith.constant 0 : i32
    return %arg0, %c0_i32, %c0_i32_0 : i32, i32, i32
  }
  func.func @transform_22(%arg0: i32) -> (i32, i32, i32) {
    %c0_i32 = arith.constant 0 : i32
    %c0_i32_0 = arith.constant 0 : i32
    %c0_i32_1 = arith.constant 0 : i32
    return %arg0, %c0_i32, %c0_i32_0 : i32, i32, i32
  }
}

</mosaic_0001>

<llo_original>
// kernel: autoencoder_forward.1
$region0: #{autoencoder_forward.1}
  #allocation0 [shape = 'u32[]', space=smem, size = 0x4, offset = 0x4, fixed_abs, tag = 'smem constant byte address 0x4 - core index']
  #allocation1 [shape = 'u32[72,128]{1,0:T(1,128)}', space=vmem, size = 0x9000, scoped, tag = 'internal scratch']
  #allocation2 [shape = 'f32[1,1]{1,0:T(1,128)S(1)}', space=vmem, size = 0x200, scoped, tag = 'scoped memory for autoencoder_forward.1']
  %s0 = inlined_call_operand.vmem [shape: f32[2,16,1], index: 0, kind: input, shape index: {}]
  %s1 = inlined_call_operand.vmem [shape: bf16[3,1,32], index: 1, kind: input, shape index: {}]
  %s2 = inlined_call_operand.vmem [shape: f32[1,32], index: 2, kind: input, shape index: {}]
  %s3 = inlined_call_operand.vmem [shape: bf16[3,32,32], index: 3, kind: input, shape index: {}]
  %s4 = inlined_call_operand.vmem [shape: bf16[3,32,32], index: 4, kind: input, shape index: {}]
  %s5 = inlined_call_operand.vmem [shape: bf16[3,32,64], index: 5, kind: input, shape index: {}]
  %s6 = inlined_call_operand.vmem [shape: f32[1,64], index: 6, kind: input, shape index: {}]
  %s7 = inlined_call_operand.vmem [shape: bf16[3,64,64], index: 7, kind: input, shape index: {}]
  %s8 = inlined_call_operand.vmem [shape: bf16[3,64,64], index: 8, kind: input, shape index: {}]
  %s9 = inlined_call_operand.vmem [shape: bf16[3,64,128], index: 9, kind: input, shape index: {}]
  %s10 = inlined_call_operand.vmem [shape: f32[1,128], index: 10, kind: input, shape index: {}]
  %s11 = inlined_call_operand.vmem [shape: bf16[3,128,64], index: 11, kind: input, shape index: {}]
  %s12 = inlined_call_operand.vmem [shape: f32[1,64], index: 12, kind: input, shape index: {}]
  %s13 = inlined_call_operand.vmem [shape: bf16[3,64,64], index: 13, kind: input, shape index: {}]
  %s14 = inlined_call_operand.vmem [shape: bf16[3,64,64], index: 14, kind: input, shape index: {}]
  %s15 = inlined_call_operand.vmem [shape: bf16[3,64,32], index: 15, kind: input, shape index: {}]
  %s16 = inlined_call_operand.vmem [shape: f32[1,32], index: 16, kind: input, shape index: {}]
  %s17 = inlined_call_operand.vmem [shape: bf16[3,32,32], index: 17, kind: input, shape index: {}]
  %s18 = inlined_call_operand.vmem [shape: bf16[3,32,32], index: 18, kind: input, shape index: {}]
  %s19 = inlined_call_operand.vmem [shape: bf16[3,32,1], index: 19, kind: input, shape index: {}]
  %s20 = inlined_call_operand.<no memory space> [shape: f32[1,1], index: 20, kind: input, shape index: {}]
  %s21 = inlined_call_operand.hbm [shape: f32[2,2,128], index: 21, kind: output, shape index: {0}]
  %s22 = inlined_call_operand.vmem [shape: f32[2,16,1], index: 22, kind: output, shape index: {1}]
  %23 = xla_tuple %s21, %s22
  %s24 = sld [smem:[#allocation0]]
  $region125: #{autoencoder_forward.1} parent=0
    _
  %s26 = ssub.s32 1, %s24
  %s27 = scalar_select 0, %s26, %s24
  %v28 = vstv %s20
  %29 = vst [vmem:[#allocation2] sm:$0x1] %v28
  $region1: #{autoencoder_forward.1} parent=0
    #allocation3 [shape = 'u8[2048]{0}', space=vmem, size = 0x800, scoped, tag = 'output window, operand 0']
    #allocation4 [shape = 's32[2]{0}', space=sflag, size = 0x8, scoped, tag = 'scoped memory for autoencoder_forward.1']
    %30 = vsyncpa [#allocation4], 0
    %s31 = scalar_lea.sflag [#allocation4], 1
    %32 = vsyncpa %s31, 0
    loop: start=0, step=1, limit=4
    $region2: #{autoencoder_forward.1} parent=1 // loop_pre_header
      _
    $region3: #{autoencoder_forward.1} parent=1 // loop_header
      %s34 = sphi 0, %s38
      %p35 = scmp.ge.s32.totalorder %s34, 4
      %s44 = sphi 0, %s46
      %s47 = sphi 0, %s44
      %s48 = sphi 0, %s47
      %s64 = sphi 0, %s48
      %s68 = sphi 0, %s68
      %s70 = sphi 0, %s68
      %s71 = sphi 0, %s70
      %s85 = sphi 0, %s71
      %s89 = sphi 0, %s89
      %s91 = sphi 0, %s89
      %s92 = sphi 0, %s91
      %s106 = sphi 0, %s92
      %s110 = sphi 0, %s110
      %s112 = sphi 0, %s110
      %s113 = sphi 0, %s112
      %s127 = sphi 0, %s113
      %s131 = sphi 0, %s131
      %s133 = sphi 0, %s131
      %s134 = sphi 0, %s133
      %s148 = sphi 0, %s134
      %s152 = sphi 0, %s152
      %s154 = sphi 0, %s152
      %s155 = sphi 0, %s154
      %s169 = sphi 0, %s155
      %s173 = sphi 0, %s173
      %s175 = sphi 0, %s173
      %s176 = sphi 0, %s175
      %s190 = sphi 0, %s176
      %s194 = sphi 0, %s194
      %s196 = sphi 0, %s194
      %s197 = sphi 0, %s196
      %s211 = sphi 0, %s197
      %s215 = sphi 0, %s215
      %s217 = sphi 0, %s215
      %s218 = sphi 0, %s217
      %s232 = sphi 0, %s218
      %s236 = sphi 0, %s236
      %s238 = sphi 0, %s236
      %s239 = sphi 0, %s238
      %s253 = sphi 0, %s239
      %s257 = sphi 0, %s257
      %s259 = sphi 0, %s257
      %s260 = sphi 0, %s259
      %s274 = sphi 0, %s260
      %s278 = sphi 0, %s278
      %s280 = sphi 0, %s278
      %s281 = sphi 0, %s280
      %s295 = sphi 0, %s281
      %s299 = sphi 0, %s299
      %s301 = sphi 0, %s299
      %s302 = sphi 0, %s301
      %s316 = sphi 0, %s302
      %s320 = sphi 0, %s320
      %s322 = sphi 0, %s320
      %s323 = sphi 0, %s322
      %s337 = sphi 0, %s323
      %s341 = sphi 0, %s341
      %s343 = sphi 0, %s341
      %s344 = sphi 0, %s343
      %s358 = sphi 0, %s344
      %s362 = sphi 0, %s362
      %s364 = sphi 0, %s362
      %s365 = sphi 0, %s364
      %s379 = sphi 0, %s365
      %s383 = sphi 0, %s383
      %s385 = sphi 0, %s383
      %s386 = sphi 0, %s385
      %s400 = sphi 0, %s386
      %s404 = sphi 0, %s404
      %s406 = sphi 0, %s404
      %s407 = sphi 0, %s406
      %s421 = sphi 0, %s407
      %s425 = sphi 0, %s425
      %s427 = sphi 0, %s425
      %s428 = sphi 0, %s427
      %s442 = sphi 0, %s428
      %s446 = sphi 0, %s446
      %s448 = sphi 0, %s446
      %s449 = sphi 0, %s448
      %s463 = sphi 0, %s449
      %s467 = sphi 0, %s467
      %s469 = sphi 0, %s467
      %s470 = sphi 0, %s469
      %s484 = sphi 0, %s470
      %s490 = sphi 0, %s492
      %s493 = sphi 0, %s490
      %s494 = sphi 0, %s493
      %s510 = sphi 0, %s494
      %s516 = sphi 0, %s518
      %s519 = sphi 0, %s516
      %s520 = sphi 0, %s519
      %s536 = sphi 0, %s520
    $region4: #{autoencoder_forward.1} parent=1 // loop_header_branch
      %37 = sbr.rel (%p35) target = $region8
    $region5: #{autoencoder_forward.1} parent=1 // loop_body
      %s39 = ssub.s32 %s34, 1
      %s40 = ssub.s32 %s34, 2
      %s41 = sadd.s32 %s34, 1
      %s42 = ssub.s32 %s34, %s41
      %p43 = scmp.eq.s32.totalorder %s42, 0
      %s45 = sadd.s32 %s44, 1
      %s46 = scalar_select %p43, %s44, %s45
      %p49 = pneg %p43
      %p50 = scmp.eq.s32.totalorder %s34, 1
      %p51 = por %p49, %p50
      %p52 = scmp.ne.s32.totalorder %s44, %s47
      %p53 = scmp.eq.s32.totalorder %s34, 0
      %p54 = por %p52, %p53
      %p55 = scmp.ne.s32.totalorder %s44, %s47
      %p56 = scmp.eq.s32.totalorder %s39, 1
      %p57 = por %p55, %p56
      %p58 = scmp.ne.s32.totalorder %s47, %s48
      %p59 = scmp.eq.s32.totalorder %s39, 0
      %p60 = por %p58, %p59
      %p61 = scmp.ne.s32.totalorder %s47, %s48
      %p62 = scmp.eq.s32.totalorder %s40, 1
      %p63 = por %p61, %p62
      %p65 = scmp.ne.s32.totalorder %s48, %s64
      %p66 = scmp.eq.s32.totalorder %s40, 0
      %p67 = por %p65, %p66
      %s69 = sadd.s32 %s68, 1
      %p72 = scmp.eq.s32.totalorder %s34, 1
      %p73 = scmp.ne.s32.totalorder %s68, %s70
      %p74 = scmp.eq.s32.totalorder %s34, 0
      %p75 = por %p73, %p74
      %p76 = scmp.ne.s32.totalorder %s68, %s70
      %p77 = scmp.eq.s32.totalorder %s39, 1
      %p78 = por %p76, %p77
      %p79 = scmp.ne.s32.totalorder %s70, %s71
      %p80 = scmp.eq.s32.totalorder %s39, 0
      %p81 = por %p79, %p80
      %p82 = scmp.ne.s32.totalorder %s70, %s71
      %p83 = scmp.eq.s32.totalorder %s40, 1
      %p84 = por %p82, %p83
      %p86 = scmp.ne.s32.totalorder %s71, %s85
      %p87 = scmp.eq.s32.totalorder %s40, 0
      %p88 = por %p86, %p87
      %s90 = sadd.s32 %s89, 1
      %p93 = scmp.eq.s32.totalorder %s34, 1
      %p94 = scmp.ne.s32.totalorder %s89, %s91
      %p95 = scmp.eq.s32.totalorder %s34, 0
      %p96 = por %p94, %p95
      %p97 = scmp.ne.s32.totalorder %s89, %s91
      %p98 = scmp.eq.s32.totalorder %s39, 1
      %p99 = por %p97, %p98
      %p100 = scmp.ne.s32.totalorder %s91, %s92
      %p101 = scmp.eq.s32.totalorder %s39, 0
      %p102 = por %p100, %p101
      %p103 = scmp.ne.s32.totalorder %s91, %s92
      %p104 = scmp.eq.s32.totalorder %s40, 1
      %p105 = por %p103, %p104
      %p107 = scmp.ne.s32.totalorder %s92, %s106
      %p108 = scmp.eq.s32.totalorder %s40, 0
      %p109 = por %p107, %p108
      %s111 = sadd.s32 %s110, 1
      %p114 = scmp.eq.s32.totalorder %s34, 1
      %p115 = scmp.ne.s32.totalorder %s110, %s112
      %p116 = scmp.eq.s32.totalorder %s34, 0
      %p117 = por %p115, %p116
      %p118 = scmp.ne.s32.totalorder %s110, %s112
      %p119 = scmp.eq.s32.totalorder %s39, 1
      %p120 = por %p118, %p119
      %p121 = scmp.ne.s32.totalorder %s112, %s113
      %p122 = scmp.eq.s32.totalorder %s39, 0
      %p123 = por %p121, %p122
      %p124 = scmp.ne.s32.totalorder %s112, %s113
      %p125 = scmp.eq.s32.totalorder %s40, 1
      %p126 = por %p124, %p125
      %p128 = scmp.ne.s32.totalorder %s113, %s127
      %p129 = scmp.eq.s32.totalorder %s40, 0
      %p130 = por %p128, %p129
      %s132 = sadd.s32 %s131, 1
      %p135 = scmp.eq.s32.totalorder %s34, 1
      %p136 = scmp.ne.s32.totalorder %s131, %s133
      %p137 = scmp.eq.s32.totalorder %s34, 0
      %p138 = por %p136, %p137
      %p139 = scmp.ne.s32.totalorder %s131, %s133
      %p140 = scmp.eq.s32.totalorder %s39, 1
      %p141 = por %p139, %p140
      %p142 = scmp.ne.s32.totalorder %s133, %s134
      %p143 = scmp.eq.s32.totalorder %s39, 0
      %p144 = por %p142, %p143
      %p145 = scmp.ne.s32.totalorder %s133, %s134
      %p146 = scmp.eq.s32.totalorder %s40, 1
      %p147 = por %p145, %p146
      %p149 = scmp.ne.s32.totalorder %s134, %s148
      %p150 = scmp.eq.s32.totalorder %s40, 0
      %p151 = por %p149, %p150
      %s153 = sadd.s32 %s152, 1
      %p156 = scmp.eq.s32.totalorder %s34, 1
      %p157 = scmp.ne.s32.totalorder %s152, %s154
      %p158 = scmp.eq.s32.totalorder %s34, 0
      %p159 = por %p157, %p158
      %p160 = scmp.ne.s32.totalorder %s152, %s154
      %p161 = scmp.eq.s32.totalorder %s39, 1
      %p162 = por %p160, %p161
      %p163 = scmp.ne.s32.totalorder %s154, %s155
      %p164 = scmp.eq.s32.totalorder %s39, 0
      %p165 = por %p163, %p164
      %p166 = scmp.ne.s32.totalorder %s154, %s155
      %p167 = scmp.eq.s32.totalorder %s40, 1
      %p168 = por %p166, %p167
      %p170 = scmp.ne.s32.totalorder %s155, %s169
      %p171 = scmp.eq.s32.totalorder %s40, 0
      %p172 = por %p170, %p171
      %s174 = sadd.s32 %s173, 1
      %p177 = scmp.eq.s32.totalorder %s34, 1
      %p178 = scmp.ne.s32.totalorder %s173, %s175
      %p179 = scmp.eq.s32.totalorder %s34, 0
      %p180 = por %p178, %p179
      %p181 = scmp.ne.s32.totalorder %s173, %s175
      %p182 = scmp.eq.s32.totalorder %s39, 1
      %p183 = por %p181, %p182
      %p184 = scmp.ne.s32.totalorder %s175, %s176
      %p185 = scmp.eq.s32.totalorder %s39, 0
      %p186 = por %p184, %p185
      %p187 = scmp.ne.s32.totalorder %s175, %s176
      %p188 = scmp.eq.s32.totalorder %s40, 1
      %p189 = por %p187, %p188
      %p191 = scmp.ne.s32.totalorder %s176, %s190
      %p192 = scmp.eq.s32.totalorder %s40, 0
      %p193 = por %p191, %p192
      %s195 = sadd.s32 %s194, 1
      %p198 = scmp.eq.s32.totalorder %s34, 1
      %p199 = scmp.ne.s32.totalorder %s194, %s196
      %p200 = scmp.eq.s32.totalorder %s34, 0
      %p201 = por %p199, %p200
      %p202 = scmp.ne.s32.totalorder %s194, %s196
      %p203 = scmp.eq.s32.totalorder %s39, 1
      %p204 = por %p202, %p203
      %p205 = scmp.ne.s32.totalorder %s196, %s197
      %p206 = scmp.eq.s32.totalorder %s39, 0
      %p207 = por %p205, %p206
      %p208 = scmp.ne.s32.totalorder %s196, %s197
      %p209 = scmp.eq.s32.totalorder %s40, 1
      %p210 = por %p208, %p209
      %p212 = scmp.ne.s32.totalorder %s197, %s211
      %p213 = scmp.eq.s32.totalorder %s40, 0
      %p214 = por %p212, %p213
      %s216 = sadd.s32 %s215, 1
      %p219 = scmp.eq.s32.totalorder %s34, 1
      %p220 = scmp.ne.s32.totalorder %s215, %s217
      %p221 = scmp.eq.s32.totalorder %s34, 0
      %p222 = por %p220, %p221
      %p223 = scmp.ne.s32.totalorder %s215, %s217
      %p224 = scmp.eq.s32.totalorder %s39, 1
      %p225 = por %p223, %p224
      %p226 = scmp.ne.s32.totalorder %s217, %s218
      %p227 = scmp.eq.s32.totalorder %s39, 0
      %p228 = por %p226, %p227
      %p229 = scmp.ne.s32.totalorder %s217, %s218
      %p230 = scmp.eq.s32.totalorder %s40, 1
      %p231 = por %p229, %p230
      %p233 = scmp.ne.s32.totalorder %s218, %s232
      %p234 = scmp.eq.s32.totalorder %s40, 0
      %p235 = por %p233, %p234
      %s237 = sadd.s32 %s236, 1
      %p240 = scmp.eq.s32.totalorder %s34, 1
      %p241 = scmp.ne.s32.totalorder %s236, %s238
      %p242 = scmp.eq.s32.totalorder %s34, 0
      %p243 = por %p241, %p242
      %p244 = scmp.ne.s32.totalorder %s236, %s238
      %p245 = scmp.eq.s32.totalorder %s39, 1
      %p246 = por %p244, %p245
      %p247 = scmp.ne.s32.totalorder %s238, %s239
      %p248 = scmp.eq.s32.totalorder %s39, 0
      %p249 = por %p247, %p248
      %p250 = scmp.ne.s32.totalorder %s238, %s239
      %p251 = scmp.eq.s32.totalorder %s40, 1
      %p252 = por %p250, %p251
      %p254 = scmp.ne.s32.totalorder %s239, %s253
      %p255 = scmp.eq.s32.totalorder %s40, 0
      %p256 = por %p254, %p255
      %s258 = sadd.s32 %s257, 1
      %p261 = scmp.eq.s32.totalorder %s34, 1
      %p262 = scmp.ne.s32.totalorder %s257, %s259
      %p263 = scmp.eq.s32.totalorder %s34, 0
      %p264 = por %p262, %p263
      %p265 = scmp.ne.s32.totalorder %s257, %s259
      %p266 = scmp.eq.s32.totalorder %s39, 1
      %p267 = por %p265, %p266
      %p268 = scmp.ne.s32.totalorder %s259, %s260
      %p269 = scmp.eq.s32.totalorder %s39, 0
      %p270 = por %p268, %p269
      %p271 = scmp.ne.s32.totalorder %s259, %s260
      %p272 = scmp.eq.s32.totalorder %s40, 1
      %p273 = por %p271, %p272
      %p275 = scmp.ne.s32.totalorder %s260, %s274
      %p276 = scmp.eq.s32.totalorder %s40, 0
      %p277 = por %p275, %p276
      %s279 = sadd.s32 %s278, 1
      %p282 = scmp.eq.s32.totalorder %s34, 1
      %p283 = scmp.ne.s32.totalorder %s278, %s280
      %p284 = scmp.eq.s32.totalorder %s34, 0
      %p285 = por %p283, %p284
      %p286 = scmp.ne.s32.totalorder %s278, %s280
      %p287 = scmp.eq.s32.totalorder %s39, 1
      %p288 = por %p286, %p287
      %p289 = scmp.ne.s32.totalorder %s280, %s281
      %p290 = scmp.eq.s32.totalorder %s39, 0
      %p291 = por %p289, %p290
      %p292 = scmp.ne.s32.totalorder %s280, %s281
      %p293 = scmp.eq.s32.totalorder %s40, 1
      %p294 = por %p292, %p293
      %p296 = scmp.ne.s32.totalorder %s281, %s295
      %p297 = scmp.eq.s32.totalorder %s40, 0
      %p298 = por %p296, %p297
      %s300 = sadd.s32 %s299, 1
      %p303 = scmp.eq.s32.totalorder %s34, 1
      %p304 = scmp.ne.s32.totalorder %s299, %s301
      %p305 = scmp.eq.s32.totalorder %s34, 0
      %p306 = por %p304, %p305
      %p307 = scmp.ne.s32.totalorder %s299, %s301
      %p308 = scmp.eq.s32.totalorder %s39, 1
      %p309 = por %p307, %p308
      %p310 = scmp.ne.s32.totalorder %s301, %s302
      %p311 = scmp.eq.s32.totalorder %s39, 0
      %p312 = por %p310, %p311
      %p313 = scmp.ne.s32.totalorder %s301, %s302
      %p314 = scmp.eq.s32.totalorder %s40, 1
      %p315 = por %p313, %p314
      %p317 = scmp.ne.s32.totalorder %s302, %s316
      %p318 = scmp.eq.s32.totalorder %s40, 0
      %p319 = por %p317, %p318
      %s321 = sadd.s32 %s320, 1
      %p324 = scmp.eq.s32.totalorder %s34, 1
      %p325 = scmp.ne.s32.totalorder %s320, %s322
      %p326 = scmp.eq.s32.totalorder %s34, 0
      %p327 = por %p325, %p326
      %p328 = scmp.ne.s32.totalorder %s320, %s322
      %p329 = scmp.eq.s32.totalorder %s39, 1
      %p330 = por %p328, %p329
      %p331 = scmp.ne.s32.totalorder %s322, %s323
      %p332 = scmp.eq.s32.totalorder %s39, 0
      %p333 = por %p331, %p332
      %p334 = scmp.ne.s32.totalorder %s322, %s323
      %p335 = scmp.eq.s32.totalorder %s40, 1
      %p336 = por %p334, %p335
      %p338 = scmp.ne.s32.totalorder %s323, %s337
      %p339 = scmp.eq.s32.totalorder %s40, 0
      %p340 = por %p338, %p339
      %s342 = sadd.s32 %s341, 1
      %p345 = scmp.eq.s32.totalorder %s34, 1
      %p346 = scmp.ne.s32.totalorder %s341, %s343
      %p347 = scmp.eq.s32.totalorder %s34, 0
      %p348 = por %p346, %p347
      %p349 = scmp.ne.s32.totalorder %s341, %s343
      %p350 = scmp.eq.s32.totalorder %s39, 1
      %p351 = por %p349, %p350
      %p352 = scmp.ne.s32.totalorder %s343, %s344
      %p353 = scmp.eq.s32.totalorder %s39, 0
      %p354 = por %p352, %p353
      %p355 = scmp.ne.s32.totalorder %s343, %s344
      %p356 = scmp.eq.s32.totalorder %s40, 1
      %p357 = por %p355, %p356
      %p359 = scmp.ne.s32.totalorder %s344, %s358
      %p360 = scmp.eq.s32.totalorder %s40, 0
      %p361 = por %p359, %p360
      %s363 = sadd.s32 %s362, 1
      %p366 = scmp.eq.s32.totalorder %s34, 1
      %p367 = scmp.ne.s32.totalorder %s362, %s364
      %p368 = scmp.eq.s32.totalorder %s34, 0
      %p369 = por %p367, %p368
      %p370 = scmp.ne.s32.totalorder %s362, %s364
      %p371 = scmp.eq.s32.totalorder %s39, 1
      %p372 = por %p370, %p371
      %p373 = scmp.ne.s32.totalorder %s364, %s365
      %p374 = scmp.eq.s32.totalorder %s39, 0
      %p375 = por %p373, %p374
      %p376 = scmp.ne.s32.totalorder %s364, %s365
      %p377 = scmp.eq.s32.totalorder %s40, 1
      %p378 = por %p376, %p377
      %p380 = scmp.ne.s32.totalorder %s365, %s379
      %p381 = scmp.eq.s32.totalorder %s40, 0
      %p382 = por %p380, %p381
      %s384 = sadd.s32 %s383, 1
      %p387 = scmp.eq.s32.totalorder %s34, 1
      %p388 = scmp.ne.s32.totalorder %s383, %s385
      %p389 = scmp.eq.s32.totalorder %s34, 0
      %p390 = por %p388, %p389
      %p391 = scmp.ne.s32.totalorder %s383, %s385
      %p392 = scmp.eq.s32.totalorder %s39, 1
      %p393 = por %p391, %p392
      %p394 = scmp.ne.s32.totalorder %s385, %s386
      %p395 = scmp.eq.s32.totalorder %s39, 0
      %p396 = por %p394, %p395
      %p397 = scmp.ne.s32.totalorder %s385, %s386
      %p398 = scmp.eq.s32.totalorder %s40, 1
      %p399 = por %p397, %p398
      %p401 = scmp.ne.s32.totalorder %s386, %s400
      %p402 = scmp.eq.s32.totalorder %s40, 0
      %p403 = por %p401, %p402
      %s405 = sadd.s32 %s404, 1
      %p408 = scmp.eq.s32.totalorder %s34, 1
      %p409 = scmp.ne.s32.totalorder %s404, %s406
      %p410 = scmp.eq.s32.totalorder %s34, 0
      %p411 = por %p409, %p410
      %p412 = scmp.ne.s32.totalorder %s404, %s406
      %p413 = scmp.eq.s32.totalorder %s39, 1
      %p414 = por %p412, %p413
      %p415 = scmp.ne.s32.totalorder %s406, %s407
      %p416 = scmp.eq.s32.totalorder %s39, 0
      %p417 = por %p415, %p416
      %p418 = scmp.ne.s32.totalorder %s406, %s407
      %p419 = scmp.eq.s32.totalorder %s40, 1
      %p420 = por %p418, %p419
      %p422 = scmp.ne.s32.totalorder %s407, %s421
      %p423 = scmp.eq.s32.totalorder %s40, 0
      %p424 = por %p422, %p423
      %s426 = sadd.s32 %s425, 1
      %p429 = scmp.eq.s32.totalorder %s34, 1
      %p430 = scmp.ne.s32.totalorder %s425, %s427
      %p431 = scmp.eq.s32.totalorder %s34, 0
      %p432 = por %p430, %p431
      %p433 = scmp.ne.s32.totalorder %s425, %s427
      %p434 = scmp.eq.s32.totalorder %s39, 1
      %p435 = por %p433, %p434
      %p436 = scmp.ne.s32.totalorder %s427, %s428
      %p437 = scmp.eq.s32.totalorder %s39, 0
      %p438 = por %p436, %p437
      %p439 = scmp.ne.s32.totalorder %s427, %s428
      %p440 = scmp.eq.s32.totalorder %s40, 1
      %p441 = por %p439, %p440
      %p443 = scmp.ne.s32.totalorder %s428, %s442
      %p444 = scmp.eq.s32.totalorder %s40, 0
      %p445 = por %p443, %p444
      %s447 = sadd.s32 %s446, 1
      %p450 = scmp.eq.s32.totalorder %s34, 1
      %p451 = scmp.ne.s32.totalorder %s446, %s448
      %p452 = scmp.eq.s32.totalorder %s34, 0
      %p453 = por %p451, %p452
      %p454 = scmp.ne.s32.totalorder %s446, %s448
      %p455 = scmp.eq.s32.totalorder %s39, 1
      %p456 = por %p454, %p455
      %p457 = scmp.ne.s32.totalorder %s448, %s449
      %p458 = scmp.eq.s32.totalorder %s39, 0
      %p459 = por %p457, %p458
      %p460 = scmp.ne.s32.totalorder %s448, %s449
      %p461 = scmp.eq.s32.totalorder %s40, 1
      %p462 = por %p460, %p461
      %p464 = scmp.ne.s32.totalorder %s449, %s463
      %p465 = scmp.eq.s32.totalorder %s40, 0
      %p466 = por %p464, %p465
      %s468 = sadd.s32 %s467, 1
      %p471 = scmp.eq.s32.totalorder %s34, 1
      %p472 = scmp.ne.s32.totalorder %s467, %s469
      %p473 = scmp.eq.s32.totalorder %s34, 0
      %p474 = por %p472, %p473
      %p475 = scmp.ne.s32.totalorder %s467, %s469
      %p476 = scmp.eq.s32.totalorder %s39, 1
      %p477 = por %p475, %p476
      %p478 = scmp.ne.s32.totalorder %s469, %s470
      %p479 = scmp.eq.s32.totalorder %s39, 0
      %p480 = por %p478, %p479
      %p481 = scmp.ne.s32.totalorder %s469, %s470
      %p482 = scmp.eq.s32.totalorder %s40, 1
      %p483 = por %p481, %p482
      %p485 = scmp.ne.s32.totalorder %s470, %s484
      %p486 = scmp.eq.s32.totalorder %s40, 0
      %p487 = por %p485, %p486
      %s488 = ssub.s32 %s34, %s41
      %p489 = scmp.eq.s32.totalorder %s488, 0
      %s491 = sadd.s32 %s490, 1
      %s492 = scalar_select %p489, %s490, %s491
      %p495 = pneg %p489
      %p496 = scmp.eq.s32.totalorder %s34, 1
      %p497 = por %p495, %p496
      %p498 = scmp.ne.s32.totalorder %s490, %s493
      %p499 = scmp.eq.s32.totalorder %s34, 0
      %p500 = por %p498, %p499
      %p501 = scmp.ne.s32.totalorder %s490, %s493
      %p502 = scmp.eq.s32.totalorder %s39, 1
      %p503 = por %p501, %p502
      %p504 = scmp.ne.s32.totalorder %s493, %s494
      %p505 = scmp.eq.s32.totalorder %s39, 0
      %p506 = por %p504, %p505
      %p507 = scmp.ne.s32.totalorder %s493, %s494
      %p508 = scmp.eq.s32.totalorder %s40, 1
      %p509 = por %p507, %p508
      %p511 = scmp.ne.s32.totalorder %s494, %s510
      %p512 = scmp.eq.s32.totalorder %s40, 0
      %p513 = por %p511, %p512
      %s514 = ssub.s32 %s34, %s41
      %p515 = scmp.eq.s32.totalorder %s514, 0
      %s517 = sadd.s32 %s516, 1
      %s518 = scalar_select %p515, %s516, %s517
      %p521 = pneg %p515
      %p522 = scmp.eq.s32.totalorder %s34, 1
      %p523 = por %p521, %p522
      %p524 = scmp.ne.s32.totalorder %s516, %s519
      %p525 = scmp.eq.s32.totalorder %s34, 0
      %p526 = por %p524, %p525
      %p527 = scmp.ne.s32.totalorder %s516, %s519
      %p528 = scmp.eq.s32.totalorder %s39, 1
      %p529 = por %p527, %p528
      %p530 = scmp.ne.s32.totalorder %s519, %s520
      %p531 = scmp.eq.s32.totalorder %s39, 0
      %p532 = por %p530, %p531
      %p533 = scmp.ne.s32.totalorder %s519, %s520
      %p534 = scmp.eq.s32.totalorder %s40, 1
      %p535 = por %p533, %p534
      %p537 = scmp.ne.s32.totalorder %s520, %s536
      %p538 = scmp.eq.s32.totalorder %s40, 0
      %p539 = por %p537, %p538
      %p540 = scmp.le.s32.totalorder 1, %s34
      %p541 = scmp.lt.s32.totalorder %s34, 3
      %p542 = pnand %p540, %p541
      %p543 = pneg %p542
      // Predicated region
      $region9: #{autoencoder_forward.1} parent=5 // pred_check
        _
      $region10: #{autoencoder_forward.1} parent=5 // pred_check_branch
        %545 = sbr.rel (%p542) target = $region12
      $region11: #{autoencoder_forward.1} parent=5 // pred_region
        %s546 = ssub.s32 %s34, 1
        // Predicated region
        $region13: #{autoencoder_forward.1} parent=11 // pred_check
          %p547 = pneg %p81
        $region14: #{autoencoder_forward.1} parent=11 // pred_check_branch
          %549 = sbr.rel (%p547) target = $region16
        $region15: #{autoencoder_forward.1} parent=11 // pred_region
          _
        $region16: #{autoencoder_forward.1} parent=11 // pred_fallthru
          _
        // Predicated region
        $region17: #{autoencoder_forward.1} parent=11 // pred_check
          %p550 = pneg %p102
        $region18: #{autoencoder_forward.1} parent=11 // pred_check_branch
          %552 = sbr.rel (%p550) target = $region20
        $region19: #{autoencoder_forward.1} parent=11 // pred_region
          _
        $region20: #{autoencoder_forward.1} parent=11 // pred_fallthru
          _
        // Predicated region
        $region21: #{autoencoder_forward.1} parent=11 // pred_check
          %p553 = pneg %p123
        $region22: #{autoencoder_forward.1} parent=11 // pred_check_branch
          %555 = sbr.rel (%p553) target = $region24
        $region23: #{autoencoder_forward.1} parent=11 // pred_region
          _
        $region24: #{autoencoder_forward.1} parent=11 // pred_fallthru
          _
        // Predicated region
        $region25: #{autoencoder_forward.1} parent=11 // pred_check
          %p556 = pneg %p144
        $region26: #{autoencoder_forward.1} parent=11 // pred_check_branch
          %558 = sbr.rel (%p556) target = $region28
        $region27: #{autoencoder_forward.1} parent=11 // pred_region
          _
        $region28: #{autoencoder_forward.1} parent=11 // pred_fallthru
          _
        // Predicated region
        $region29: #{autoencoder_forward.1} parent=11 // pred_check
          %p559 = pneg %p165
        $region30: #{autoencoder_forward.1} parent=11 // pred_check_branch
          %561 = sbr.rel (%p559) target = $region32
        $region31: #{autoencoder_forward.1} parent=11 // pred_region
          _
        $region32: #{autoencoder_forward.1} parent=11 // pred_fallthru
          _
        // Predicated region
        $region33: #{autoencoder_forward.1} parent=11 // pred_check
          %p562 = pneg %p186
        $region34: #{autoencoder_forward.1} parent=11 // pred_check_branch
          %564 = sbr.rel (%p562) target = $region36
        $region35: #{autoencoder_forward.1} parent=11 // pred_region
          _
        $region36: #{autoencoder_forward.1} parent=11 // pred_fallthru
          _
        // Predicated region
        $region37: #{autoencoder_forward.1} parent=11 // pred_check
          %p565 = pneg %p207
        $region38: #{autoencoder_forward.1} parent=11 // pred_check_branch
          %567 = sbr.rel (%p565) target = $region40
        $region39: #{autoencoder_forward.1} parent=11 // pred_region
          _
        $region40: #{autoencoder_forward.1} parent=11 // pred_fallthru
          _
        // Predicated region
        $region41: #{autoencoder_forward.1} parent=11 // pred_check
          %p568 = pneg %p228
        $region42: #{autoencoder_forward.1} parent=11 // pred_check_branch
          %570 = sbr.rel (%p568) target = $region44
        $region43: #{autoencoder_forward.1} parent=11 // pred_region
          _
        $region44: #{autoencoder_forward.1} parent=11 // pred_fallthru
          _
        // Predicated region
        $region45: #{autoencoder_forward.1} parent=11 // pred_check
          %p571 = pneg %p249
        $region46: #{autoencoder_forward.1} parent=11 // pred_check_branch
          %573 = sbr.rel (%p571) target = $region48
        $region47: #{autoencoder_forward.1} parent=11 // pred_region
          _
        $region48: #{autoencoder_forward.1} parent=11 // pred_fallthru
          _
        // Predicated region
        $region49: #{autoencoder_forward.1} parent=11 // pred_check
          %p574 = pneg %p270
        $region50: #{autoencoder_forward.1} parent=11 // pred_check_branch
          %576 = sbr.rel (%p574) target = $region52
        $region51: #{autoencoder_forward.1} parent=11 // pred_region
          _
        $region52: #{autoencoder_forward.1} parent=11 // pred_fallthru
          _
        // Predicated region
        $region53: #{autoencoder_forward.1} parent=11 // pred_check
          %p577 = pneg %p291
        $region54: #{autoencoder_forward.1} parent=11 // pred_check_branch
          %579 = sbr.rel (%p577) target = $region56
        $region55: #{autoencoder_forward.1} parent=11 // pred_region
          _
        $region56: #{autoencoder_forward.1} parent=11 // pred_fallthru
          _
        // Predicated region
        $region57: #{autoencoder_forward.1} parent=11 // pred_check
          %p580 = pneg %p312
        $region58: #{autoencoder_forward.1} parent=11 // pred_check_branch
          %582 = sbr.rel (%p580) target = $region60
        $region59: #{autoencoder_forward.1} parent=11 // pred_region
          _
        $region60: #{autoencoder_forward.1} parent=11 // pred_fallthru
          _
        // Predicated region
        $region61: #{autoencoder_forward.1} parent=11 // pred_check
          %p583 = pneg %p333
        $region62: #{autoencoder_forward.1} parent=11 // pred_check_branch
          %585 = sbr.rel (%p583) target = $region64
        $region63: #{autoencoder_forward.1} parent=11 // pred_region
          _
        $region64: #{autoencoder_forward.1} parent=11 // pred_fallthru
          _
        // Predicated region
        $region65: #{autoencoder_forward.1} parent=11 // pred_check
          %p586 = pneg %p354
        $region66: #{autoencoder_forward.1} parent=11 // pred_check_branch
          %588 = sbr.rel (%p586) target = $region68
        $region67: #{autoencoder_forward.1} parent=11 // pred_region
          _
        $region68: #{autoencoder_forward.1} parent=11 // pred_fallthru
          _
        // Predicated region
        $region69: #{autoencoder_forward.1} parent=11 // pred_check
          %p589 = pneg %p375
        $region70: #{autoencoder_forward.1} parent=11 // pred_check_branch
          %591 = sbr.rel (%p589) target = $region72
        $region71: #{autoencoder_forward.1} parent=11 // pred_region
          _
        $region72: #{autoencoder_forward.1} parent=11 // pred_fallthru
          _
        // Predicated region
        $region73: #{autoencoder_forward.1} parent=11 // pred_check
          %p592 = pneg %p396
        $region74: #{autoencoder_forward.1} parent=11 // pred_check_branch
          %594 = sbr.rel (%p592) target = $region76
        $region75: #{autoencoder_forward.1} parent=11 // pred_region
          _
        $region76: #{autoencoder_forward.1} parent=11 // pred_fallthru
          _
        // Predicated region
        $region77: #{autoencoder_forward.1} parent=11 // pred_check
          %p595 = pneg %p417
        $region78: #{autoencoder_forward.1} parent=11 // pred_check_branch
          %597 = sbr.rel (%p595) target = $region80
        $region79: #{autoencoder_forward.1} parent=11 // pred_region
          _
        $region80: #{autoencoder_forward.1} parent=11 // pred_fallthru
          _
        // Predicated region
        $region81: #{autoencoder_forward.1} parent=11 // pred_check
          %p598 = pneg %p438
        $region82: #{autoencoder_forward.1} parent=11 // pred_check_branch
          %600 = sbr.rel (%p598) target = $region84
        $region83: #{autoencoder_forward.1} parent=11 // pred_region
          _
        $region84: #{autoencoder_forward.1} parent=11 // pred_fallthru
          _
        // Predicated region
        $region85: #{autoencoder_forward.1} parent=11 // pred_check
          %p601 = pneg %p459
        $region86: #{autoencoder_forward.1} parent=11 // pred_check_branch
          %603 = sbr.rel (%p601) target = $region88
        $region87: #{autoencoder_forward.1} parent=11 // pred_region
          _
        $region88: #{autoencoder_forward.1} parent=11 // pred_fallthru
          _
        // Predicated region
        $region89: #{autoencoder_forward.1} parent=11 // pred_check
          %p604 = pneg %p480
        $region90: #{autoencoder_forward.1} parent=11 // pred_check_branch
          %606 = sbr.rel (%p604) target = $region92
        $region91: #{autoencoder_forward.1} parent=11 // pred_region
          _
        $region92: #{autoencoder_forward.1} parent=11 // pred_fallthru
          _
      $region12: #{autoencoder_forward.1} parent=5 // pred_fallthru
        _
      %p607 = scmp.lt.s32.totalorder %s34, 2
      // Predicated region
      $region93: #{autoencoder_forward.1} parent=5 // pred_check
        %p608 = pneg %p607
      $region94: #{autoencoder_forward.1} parent=5 // pred_check_branch
        %610 = sbr.rel (%p608) target = $region96
      $region95: #{autoencoder_forward.1} parent=5 // pred_region
        // Predicated region
        $region97: #{autoencoder_forward.1} parent=95 // pred_check
          %p611 = pneg %p54
        $region98: #{autoencoder_forward.1} parent=95 // pred_check_branch
          %613 = sbr.rel (%p611) target = $region100
        $region99: #{autoencoder_forward.1} parent=95 // pred_region
          %p614 = scmp.lt.s32.totalorder %s34, 1
          %s615 = scalar_select %p614, %s34, 1
          %s616 = smul.addr %s615, 2
          %s617 = smul.addr %s616, 8
          %s618 = scalar_lea.vmem %s0, %s617
        $region100: #{autoencoder_forward.1} parent=95 // pred_fallthru
          _
      $region96: #{autoencoder_forward.1} parent=5 // pred_fallthru
        _
      %p619 = scmp.le.s32.totalorder 1, %s34
      %p620 = scmp.lt.s32.totalorder %s34, 3
      %p621 = pnand %p619, %p620
      %p622 = pneg %p621
      // Predicated region
      $region101: #{autoencoder_forward.1} parent=5 // pred_check
        _
      $region102: #{autoencoder_forward.1} parent=5 // pred_check_branch
        %624 = sbr.rel (%p621) target = $region104
      $region103: #{autoencoder_forward.1} parent=5 // pred_region
        %s625 = ssub.s32 %s34, 1
        %p626 = scmp.lt.s32.totalorder %s39, 1
        %s627 = scalar_select %p626, %s39, 1
        %s628 = smul.addr %s627, 2
        %s629 = smul.addr %s628, 8
        %s630 = scalar_lea.vmem %s0, %s629
        %p631 = pneg %p60
        %p632 = pneg %p57
        %p633 = pneg %p81
        %p634 = pneg %p78
        %p635 = pneg %p102
        %p636 = pneg %p99
        %p637 = pneg %p123
        %p638 = pneg %p120
        %p639 = pneg %p144
        %p640 = pneg %p141
        %p641 = pneg %p165
        %p642 = pneg %p162
        %p643 = pneg %p186
        %p644 = pneg %p183
        %p645 = pneg %p207
        %p646 = pneg %p204
        %p647 = pneg %p228
        %p648 = pneg %p225
        %p649 = pneg %p249
        %p650 = pneg %p246
        %p651 = pneg %p270
        %p652 = pneg %p267
        %p653 = pneg %p291
        %p654 = pneg %p288
        %p655 = pneg %p312
        %p656 = pneg %p309
        %p657 = pneg %p333
        %p658 = pneg %p330
        %p659 = pneg %p354
        %p660 = pneg %p351
        %p661 = pneg %p375
        %p662 = pneg %p372
        %p663 = pneg %p396
        %p664 = pneg %p393
        %p665 = pneg %p417
        %p666 = pneg %p414
        %p667 = pneg %p438
        %p668 = pneg %p435
        %p669 = pneg %p459
        %p670 = pneg %p456
        %p671 = pneg %p480
        %p672 = pneg %p477
        %p673 = pneg %p506
        %p674 = pneg %p503
        %s675 = sand.u32 %s493, 1
        %s676 = scalar_lea.sflag [#allocation4], %s675
        %s677 = sand.u32 %s493, 1
        %s678 = smul.addr %s677, 2
        %s679 = scalar_lea.vmem [#allocation3], %s678
        %p680 = pneg %p532
        %p681 = pneg %p529
        %p682 = scmp.lt.s32.totalorder %s39, 1
        %s683 = scalar_select %p682, %s39, 1
        %s684 = smul.addr %s683, 2
        %s685 = smul.addr %s684, 8
        %s686 = scalar_lea.vmem %s22, %s685
        %p687 = scmp.lt.s32.totalorder %s39, 1
        %s688 = scalar_select %p687, %s39, 1
        %s689 = smul.addr %s688, 2
        %s690 = smul.addr %s689, 8
        %s691 = scalar_lea.vmem %s0, %s690
        %p692 = scmp.lt.s32.totalorder %s39, 1
        %s693 = scalar_select %p692, %s39, 1
        %s694 = smul.addr %s693, 2
        %s695 = smul.addr %s694, 8
        %s696 = scalar_lea.vmem %s22, %s695
        %v698 = vld [vmem:[%s691] sm:$0xff]
        %v699 = vld [vmem:[%s691 + $0x8] sm:$0xff]
        %vm702 = vcmask 1040384
        %v703 = vrot.slane %v698, 7
        %v704 = vrot.slane %v699, 7
        %v705 = vsel %vm702, %v703, %v704
        %v709 = vsel %vm702, 0.0, %v703
        %v710 = vsel %vm702, %v704, 0.0
        %v711 = vlaneseq
        %v712 = vshrl.u32 %v711, 7
        %v713 = vlaneseq
        %v714 = vand.u32 %v713, 127
        %v715 = vmul.u32 %v712, 2
        %vm716 = vcmp.eq.s32.totalorder %v714, %v715
        %v717 = vsel %vm716, 1.0, 0.0
        %vm718 = vcmask 146432
        %v720 = vsel %vm718, %v717, 0
        %vm722 = vcmask 1041408
        %v724 = vsel %vm722, %v710, 0
        %726 = vmatpush.msra.mxu0 0.0
        %727 = vmatpush.msra.mxu0 0.0
        %728 = vmatpush.msra.mxu0 0.0
        %729 = vmatpush.msra.mxu0 0.0
        %730 = vmatpush.msra.mxu0 0.0
        %731 = vmatpush.msra.mxu0 0.0
        %732 = vmatpush.msra.mxu0 0.0
        %733 = vmatpush.msra.mxu0 0.0
        %734 = vmatpush.msra.mxu0 0.0
        %735 = vmatpush.msra.mxu0 0.0
        %736 = vmatpush.msra.mxu0 0.0
        %737 = vmatpush.msra.mxu0 0.0
        %738 = vmatpush.msra.mxu0 0.0
        %739 = vmatpush.msra.mxu0 %v724
        %740 = vmatpush.msra.mxu0 %v705
        %741 = vmatpush.msra.mxu0 %v709
        %742 = vmatmul.f32.gmra.mxu0 %v720
        %v743 = vpop.f32.mrf.mxu0
        %v744 = vadd.f32 0.0, %v743
        %745 = vdwg.mxu0
        %v746 = vld [vmem:[%s1] sm:$0x1]
        %v747 = vunpack.c.l.bf16 %v746
        %749 = vset.pattern.permute.xlu0 0
        %750 = vperm.xlu0 %749, %v744
        %v751 = vpop.permute.xlu0 %750
        %v753 = vperm.slane %v747, 0
        %v754 = vmul.f32 %v751, %v753
        %v755 = vadd.s32 %v715, 1
        %vm756 = vcmp.eq.s32.totalorder %v714, %v755
        %v757 = vsel %vm756, 1.0, 0.0
        %v759 = vsel %vm718, %v757, 0
        %761 = vmatpush.msra.mxu0 0.0
        %762 = vmatpush.msra.mxu0 0.0
        %763 = vmatpush.msra.mxu0 0.0
        %764 = vmatpush.msra.mxu0 0.0
        %765 = vmatpush.msra.mxu0 0.0
        %766 = vmatpush.msra.mxu0 0.0
        %767 = vmatpush.msra.mxu0 0.0
        %768 = vmatpush.msra.mxu0 0.0
        %769 = vmatpush.msra.mxu0 0.0
        %770 = vmatpush.msra.mxu0 0.0
        %771 = vmatpush.msra.mxu0 0.0
        %772 = vmatpush.msra.mxu0 0.0
        %773 = vmatpush.msra.mxu0 0.0
        %774 = vmatpush.msra.mxu0 %v724
        %775 = vmatpush.msra.mxu0 %v705
        %776 = vmatpush.msra.mxu0 %v709
        %777 = vmatmul.f32.gmra.mxu0 %v759
        %v778 = vpop.f32.mrf.mxu0
        %v779 = vadd.f32 0.0, %v778
        %780 = vdwg.mxu0
        %s781 = scalar_lea.vmem %s1, 1
        %v782 = vld [vmem:[%s781] sm:$0x1]
        %v783 = vunpack.c.l.bf16 %v782
        %785 = vset.pattern.permute.xlu0 0
        %786 = vperm.xlu0 %785, %v779
        %v787 = vpop.permute.xlu0 %786
        %v789 = vperm.slane %v783, 0
        %v790 = vmul.f32 %v787, %v789
        %v791 = vadd.f32 %v754, %v790
        %v792 = vadd.s32 %v715, 2
        %vm793 = vcmp.eq.s32.totalorder %v714, %v792
        %v794 = vsel %vm793, 1.0, 0.0
        %v796 = vsel %vm718, %v794, 0
        %798 = vmatpush.msra.mxu0 0.0
        %799 = vmatpush.msra.mxu0 0.0
        %800 = vmatpush.msra.mxu0 0.0
        %801 = vmatpush.msra.mxu0 0.0
        %802 = vmatpush.msra.mxu0 0.0
        %803 = vmatpush.msra.mxu0 0.0
        %804 = vmatpush.msra.mxu0 0.0
        %805 = vmatpush.msra.mxu0 0.0
        %806 = vmatpush.msra.mxu0 0.0
        %807 = vmatpush.msra.mxu0 0.0
        %808 = vmatpush.msra.mxu0 0.0
        %809 = vmatpush.msra.mxu0 0.0
        %810 = vmatpush.msra.mxu0 0.0
        %811 = vmatpush.msra.mxu0 %v724
        %812 = vmatpush.msra.mxu0 %v705
        %813 = vmatpush.msra.mxu0 %v709
        %814 = vmatmul.f32.gmra.mxu0 %v796
        %v815 = vpop.f32.mrf.mxu0
        %v816 = vadd.f32 0.0, %v815
        %817 = vdwg.mxu0
        %s818 = scalar_lea.vmem %s1, 2
        %v819 = vld [vmem:[%s818] sm:$0x1]
        %v820 = vunpack.c.l.bf16 %v819
        %822 = vset.pattern.permute.xlu0 0
        %823 = vperm.xlu0 %822, %v816
        %v824 = vpop.permute.xlu0 %823
        %v826 = vperm.slane %v820, 0
        %v827 = vmul.f32 %v824, %v826
        %v828 = vadd.f32 %v791, %v827
        %v829 = vld [vmem:[%s2] sm:$0x1]
        %v831 = vperm.slane %v829, 0
        %v833 = vadd.f32 %v828, %v831
        %v834 = vmax.f32 %v833, 0.0
        %v836 = vrot.slane %v834, 7
        %v838 = vsel %vm702, 0.0, %v836
        %v839 = vsel %vm702, %v836, 0.0
        %v840 = vld [vmem:[%s3] sm:$0xf]
        %v841 = vld [vmem:[%s3 + $0x4] sm:$0xf]
        %v842 = vld [vmem:[%s3 + $0x8] sm:$0xf]
        %v843 = vld [vmem:[%s3 + $0xc] sm:$0xf]
        %v844 = vpack.c.bf16 %v838, %v838
        %s845 = scalar_lea.vmem %s3, 16
        %v846 = vld [vmem:[%s845] sm:$0xf]
        %v847 = vld [vmem:[%s845 + $0x4] sm:$0xf]
        %v848 = vld [vmem:[%s845 + $0x8] sm:$0xf]
        %v849 = vld [vmem:[%s845 + $0xc] sm:$0xf]
        %v850 = vpack.c.bf16 %v839, %v838
        %v852 = vshrl.u32 %v850, 16
        %v854 = vshll.u32 %v850, 16
        %v856 = vrot.slane %v854, 1
        %v857 = vor.u32 %v852, %v856
        %v862 = vunpack.c.l.b16 %v846
        %v863 = vunpack.c.l.b16 %v847
        %v864 = vunpack.c.l.b16 %v848
        %v865 = vunpack.c.l.b16 %v849
        %v866 = vpack.c.b16 %v863, %v862
        %v867 = vpack.c.b16 %v865, %v864
        %vm870 = vcmask 261120
        %v872 = vsel %vm870, %v857, 0
        %874 = vmatpush.bf16.msra.mxu0 0
        %875 = vmatpush.bf16.msra.mxu0 0
        %876 = vmatpush.bf16.msra.mxu0 0
        %877 = vmatpush.bf16.msra.mxu0 0
        %878 = vmatpush.bf16.msra.mxu0 0
        %879 = vmatpush.bf16.msra.mxu0 0
        %880 = vmatpush.bf16.msra.mxu0 %v867
        %881 = vmatpush.bf16.msra.mxu0 %v866
        %882 = vmatmul.bf16.gmra.mxu0 %v872
        %v883 = vpop.f32.mrf.mxu0
        %v884 = vadd.f32 0.0, %v883
        %v885 = vpop.f32.mrf.mxu0
        %886 = vdwg.mxu0
        %v891 = vunpack.c.l.b16 %v840
        %v892 = vunpack.c.l.b16 %v841
        %v893 = vunpack.c.l.b16 %v842
        %v894 = vunpack.c.l.b16 %v843
        %v895 = vpack.c.b16 %v892, %v891
        %v896 = vpack.c.b16 %v894, %v893
        %v900 = vsel %vm870, %v844, 0
        %902 = vmatpush.bf16.msra.mxu0 0
        %903 = vmatpush.bf16.msra.mxu0 0
        %904 = vmatpush.bf16.msra.mxu0 0
        %905 = vmatpush.bf16.msra.mxu0 0
        %906 = vmatpush.bf16.msra.mxu0 0
        %907 = vmatpush.bf16.msra.mxu0 0
        %908 = vmatpush.bf16.msra.mxu0 %v896
        %909 = vmatpush.bf16.msra.mxu0 %v895
        %910 = vmatmul.bf16.gmra.mxu0 %v900
        %v911 = vpop.f32.mrf.mxu0
        %v912 = vadd.f32 %v884, %v911
        %v913 = vpop.f32.mrf.mxu0
        %914 = vdwg.mxu0
        %s915 = scalar_lea.vmem %s3, 32
        %v916 = vld [vmem:[%s915] sm:$0xf]
        %v917 = vld [vmem:[%s915 + $0x4] sm:$0xf]
        %v918 = vld [vmem:[%s915 + $0x8] sm:$0xf]
        %v919 = vld [vmem:[%s915 + $0xc] sm:$0xf]
        %v921 = vrot.slane %v850, 1
        %v926 = vunpack.c.l.b16 %v916
        %v927 = vunpack.c.l.b16 %v917
        %v928 = vunpack.c.l.b16 %v918
        %v929 = vunpack.c.l.b16 %v919
        %v930 = vpack.c.b16 %v927, %v926
        %v931 = vpack.c.b16 %v929, %v928
        %v935 = vsel %vm870, %v921, 0
        %937 = vmatpush.bf16.msra.mxu0 0
        %938 = vmatpush.bf16.msra.mxu0 0
        %939 = vmatpush.bf16.msra.mxu0 0
        %940 = vmatpush.bf16.msra.mxu0 0
        %941 = vmatpush.bf16.msra.mxu0 0
        %942 = vmatpush.bf16.msra.mxu0 0
        %943 = vmatpush.bf16.msra.mxu0 %v931
        %944 = vmatpush.bf16.msra.mxu0 %v930
        %945 = vmatmul.bf16.gmra.mxu0 %v935
        %v946 = vpop.f32.mrf.mxu0
        %v947 = vadd.f32 0.0, %v946
        %v948 = vpop.f32.mrf.mxu0
        %949 = vdwg.mxu0
        %v950 = vadd.f32 %v912, %v947
        %v951 = vmax.f32 %v950, 0.0
        %v953 = vrot.slane %v951, 7
        %v955 = vsel %vm702, 0.0, %v953
        %v956 = vsel %vm702, %v953, 0.0
        %v957 = vld [vmem:[%s4] sm:$0xf]
        %v958 = vld [vmem:[%s4 + $0x4] sm:$0xf]
        %v959 = vld [vmem:[%s4 + $0x8] sm:$0xf]
        %v960 = vld [vmem:[%s4 + $0xc] sm:$0xf]
        %v961 = vpack.c.bf16 %v955, %v955
        %s962 = scalar_lea.vmem %s4, 16
        %v963 = vld [vmem:[%s962] sm:$0xf]
        %v964 = vld [vmem:[%s962 + $0x4] sm:$0xf]
        %v965 = vld [vmem:[%s962 + $0x8] sm:$0xf]
        %v966 = vld [vmem:[%s962 + $0xc] sm:$0xf]
        %v967 = vpack.c.bf16 %v956, %v955
        %v969 = vshrl.u32 %v967, 16
        %v971 = vshll.u32 %v967, 16
        %v973 = vrot.slane %v971, 1
        %v974 = vor.u32 %v969, %v973
        %v979 = vunpack.c.l.b16 %v963
        %v980 = vunpack.c.l.b16 %v964
        %v981 = vunpack.c.l.b16 %v965
        %v982 = vunpack.c.l.b16 %v966
        %v983 = vpack.c.b16 %v980, %v979
        %v984 = vpack.c.b16 %v982, %v981
        %v988 = vsel %vm870, %v974, 0
        %990 = vmatpush.bf16.msra.mxu0 0
        %991 = vmatpush.bf16.msra.mxu0 0
        %992 = vmatpush.bf16.msra.mxu0 0
        %993 = vmatpush.bf16.msra.mxu0 0
        %994 = vmatpush.bf16.msra.mxu0 0
        %995 = vmatpush.bf16.msra.mxu0 0
        %996 = vmatpush.bf16.msra.mxu0 %v984
        %997 = vmatpush.bf16.msra.mxu0 %v983
        %998 = vmatmul.bf16.gmra.mxu0 %v988
        %v999 = vpop.f32.mrf.mxu0
        %v1000 = vadd.f32 0.0, %v999
        %v1001 = vpop.f32.mrf.mxu0
        %1002 = vdwg.mxu0
        %v1007 = vunpack.c.l.b16 %v957
        %v1008 = vunpack.c.l.b16 %v958
        %v1009 = vunpack.c.l.b16 %v959
        %v1010 = vunpack.c.l.b16 %v960
        %v1011 = vpack.c.b16 %v1008, %v1007
        %v1012 = vpack.c.b16 %v1010, %v1009
        %v1016 = vsel %vm870, %v961, 0
        %1018 = vmatpush.bf16.msra.mxu0 0
        %1019 = vmatpush.bf16.msra.mxu0 0
        %1020 = vmatpush.bf16.msra.mxu0 0
        %1021 = vmatpush.bf16.msra.mxu0 0
        %1022 = vmatpush.bf16.msra.mxu0 0
        %1023 = vmatpush.bf16.msra.mxu0 0
        %1024 = vmatpush.bf16.msra.mxu0 %v1012
        %1025 = vmatpush.bf16.msra.mxu0 %v1011
        %1026 = vmatmul.bf16.gmra.mxu0 %v1016
        %v1027 = vpop.f32.mrf.mxu0
        %v1028 = vadd.f32 %v1000, %v1027
        %v1029 = vpop.f32.mrf.mxu0
        %1030 = vdwg.mxu0
        %s1031 = scalar_lea.vmem %s4, 32
        %v1032 = vld [vmem:[%s1031] sm:$0xf]
        %v1033 = vld [vmem:[%s1031 + $0x4] sm:$0xf]
        %v1034 = vld [vmem:[%s1031 + $0x8] sm:$0xf]
        %v1035 = vld [vmem:[%s1031 + $0xc] sm:$0xf]
        %v1037 = vrot.slane %v967, 1
        %v1042 = vunpack.c.l.b16 %v1032
        %v1043 = vunpack.c.l.b16 %v1033
        %v1044 = vunpack.c.l.b16 %v1034
        %v1045 = vunpack.c.l.b16 %v1035
        %v1046 = vpack.c.b16 %v1043, %v1042
        %v1047 = vpack.c.b16 %v1045, %v1044
        %v1051 = vsel %vm870, %v1037, 0
        %1053 = vmatpush.bf16.msra.mxu0 0
        %1054 = vmatpush.bf16.msra.mxu0 0
        %1055 = vmatpush.bf16.msra.mxu0 0
        %1056 = vmatpush.bf16.msra.mxu0 0
        %1057 = vmatpush.bf16.msra.mxu0 0
        %1058 = vmatpush.bf16.msra.mxu0 0
        %1059 = vmatpush.bf16.msra.mxu0 %v1047
        %1060 = vmatpush.bf16.msra.mxu0 %v1046
        %1061 = vmatmul.bf16.gmra.mxu0 %v1051
        %v1062 = vpop.f32.mrf.mxu0
        %v1063 = vadd.f32 0.0, %v1062
        %v1064 = vpop.f32.mrf.mxu0
        %1065 = vdwg.mxu0
        %v1066 = vadd.f32 %v1028, %v1063
        %v1067 = vmax.f32 %v1066, 0.0
        %v1068 = vadd.f32 %v1067, %v834
        %v1069 = vmax.f32 %v1068, 0.0
        %v1071 = vrot.slane %v1069, 7
        %v1073 = vsel %vm702, 0.0, %v1071
        %v1074 = vsel %vm702, %v1071, 0.0
        %vm1075 = vcmask 80896
        %v1076 = vsel %vm1075, %v717, 0
        %v1079 = vsel %vm722, %v1074, 0
        %1081 = vmatpush.msra.mxu0 0.0
        %1082 = vmatpush.msra.mxu0 0.0
        %1083 = vmatpush.msra.mxu0 0.0
        %1084 = vmatpush.msra.mxu0 0.0
        %1085 = vmatpush.msra.mxu0 0.0
        %1086 = vmatpush.msra.mxu0 0.0
        %1087 = vmatpush.msra.mxu0 0.0
        %1088 = vmatpush.msra.mxu0 0.0
        %1089 = vmatpush.msra.mxu0 0.0
        %1090 = vmatpush.msra.mxu0 0.0
        %1091 = vmatpush.msra.mxu0 0.0
        %1092 = vmatpush.msra.mxu0 0.0
        %1093 = vmatpush.msra.mxu0 0.0
        %1094 = vmatpush.msra.mxu0 0.0
        %1095 = vmatpush.msra.mxu0 %v1079
        %1096 = vmatpush.msra.mxu0 %v1073
        %1097 = vmatmul.f32.gmra.mxu0 %v1076
        %v1098 = vpop.f32.mrf.mxu0
        %v1099 = vadd.f32 0.0, %v1098
        %1100 = vdwg.mxu0
        %v1101 = vld [vmem:[%s5] sm:$0xf]
        %v1102 = vld [vmem:[%s5 + $0x4] sm:$0xf]
        %v1103 = vld [vmem:[%s5 + $0x8] sm:$0xf]
        %v1104 = vld [vmem:[%s5 + $0xc] sm:$0xf]
        %v1105 = vpack.c.bf16 %v1099, %v1099
        %v1106 = vsel %vm1075, %v757, 0
        %1108 = vmatpush.msra.mxu0 0.0
        %1109 = vmatpush.msra.mxu0 0.0
        %1110 = vmatpush.msra.mxu0 0.0
        %1111 = vmatpush.msra.mxu0 0.0
        %1112 = vmatpush.msra.mxu0 0.0
        %1113 = vmatpush.msra.mxu0 0.0
        %1114 = vmatpush.msra.mxu0 0.0
        %1115 = vmatpush.msra.mxu0 0.0
        %1116 = vmatpush.msra.mxu0 0.0
        %1117 = vmatpush.msra.mxu0 0.0
        %1118 = vmatpush.msra.mxu0 0.0
        %1119 = vmatpush.msra.mxu0 0.0
        %1120 = vmatpush.msra.mxu0 0.0
        %1121 = vmatpush.msra.mxu0 0.0
        %1122 = vmatpush.msra.mxu0 %v1079
        %1123 = vmatpush.msra.mxu0 %v1073
        %1124 = vmatmul.f32.gmra.mxu0 %v1106
        %v1125 = vpop.f32.mrf.mxu0
        %v1126 = vadd.f32 0.0, %v1125
        %1127 = vdwg.mxu0
        %s1128 = scalar_lea.vmem %s5, 16
        %v1129 = vld [vmem:[%s1128] sm:$0xf]
        %v1130 = vld [vmem:[%s1128 + $0x4] sm:$0xf]
        %v1131 = vld [vmem:[%s1128 + $0x8] sm:$0xf]
        %v1132 = vld [vmem:[%s1128 + $0xc] sm:$0xf]
        %v1133 = vpack.c.bf16 %v1126, %v1126
        %v1138 = vunpack.c.l.b16 %v1129
        %v1139 = vunpack.c.l.b16 %v1130
        %v1140 = vunpack.c.l.b16 %v1131
        %v1141 = vunpack.c.l.b16 %v1132
        %v1142 = vpack.c.b16 %v1139, %v1138
        %v1143 = vpack.c.b16 %v1141, %v1140
        %v1147 = vsel %vm870, %v1133, 0
        %1149 = vmatpush.bf16.msra.mxu0 0
        %1150 = vmatpush.bf16.msra.mxu0 0
        %1151 = vmatpush.bf16.msra.mxu0 0
        %1152 = vmatpush.bf16.msra.mxu0 0
        %1153 = vmatpush.bf16.msra.mxu0 0
        %1154 = vmatpush.bf16.msra.mxu0 0
        %1155 = vmatpush.bf16.msra.mxu0 %v1143
        %1156 = vmatpush.bf16.msra.mxu0 %v1142
        %1157 = vmatmul.bf16.gmra.mxu0 %v1147
        %v1158 = vpop.f32.mrf.mxu0
        %v1159 = vadd.f32 0.0, %v1158
        %v1160 = vpop.f32.mrf.mxu0
        %1161 = vdwg.mxu0
        %v1166 = vunpack.c.l.b16 %v1101
        %v1167 = vunpack.c.l.b16 %v1102
        %v1168 = vunpack.c.l.b16 %v1103
        %v1169 = vunpack.c.l.b16 %v1104
        %v1170 = vpack.c.b16 %v1167, %v1166
        %v1171 = vpack.c.b16 %v1169, %v1168
        %v1175 = vsel %vm870, %v1105, 0
        %1177 = vmatpush.bf16.msra.mxu0 0
        %1178 = vmatpush.bf16.msra.mxu0 0
        %1179 = vmatpush.bf16.msra.mxu0 0
        %1180 = vmatpush.bf16.msra.mxu0 0
        %1181 = vmatpush.bf16.msra.mxu0 0
        %1182 = vmatpush.bf16.msra.mxu0 0
        %1183 = vmatpush.bf16.msra.mxu0 %v1171
        %1184 = vmatpush.bf16.msra.mxu0 %v1170
        %1185 = vmatmul.bf16.gmra.mxu0 %v1175
        %v1186 = vpop.f32.mrf.mxu0
        %v1187 = vadd.f32 %v1159, %v1186
        %v1188 = vpop.f32.mrf.mxu0
        %1189 = vdwg.mxu0
        %v1190 = vsel %vm1075, %v794, 0
        %1192 = vmatpush.msra.mxu0 0.0
        %1193 = vmatpush.msra.mxu0 0.0
        %1194 = vmatpush.msra.mxu0 0.0
        %1195 = vmatpush.msra.mxu0 0.0
        %1196 = vmatpush.msra.mxu0 0.0
        %1197 = vmatpush.msra.mxu0 0.0
        %1198 = vmatpush.msra.mxu0 0.0
        %1199 = vmatpush.msra.mxu0 0.0
        %1200 = vmatpush.msra.mxu0 0.0
        %1201 = vmatpush.msra.mxu0 0.0
        %1202 = vmatpush.msra.mxu0 0.0
        %1203 = vmatpush.msra.mxu0 0.0
        %1204 = vmatpush.msra.mxu0 0.0
        %1205 = vmatpush.msra.mxu0 0.0
        %1206 = vmatpush.msra.mxu0 %v1079
        %1207 = vmatpush.msra.mxu0 %v1073
        %1208 = vmatmul.f32.gmra.mxu0 %v1190
        %v1209 = vpop.f32.mrf.mxu0
        %v1210 = vadd.f32 0.0, %v1209
        %1211 = vdwg.mxu0
        %s1212 = scalar_lea.vmem %s5, 32
        %v1213 = vld [vmem:[%s1212] sm:$0xf]
        %v1214 = vld [vmem:[%s1212 + $0x4] sm:$0xf]
        %v1215 = vld [vmem:[%s1212 + $0x8] sm:$0xf]
        %v1216 = vld [vmem:[%s1212 + $0xc] sm:$0xf]
        %v1217 = vpack.c.bf16 %v1210, %v1210
        %v1222 = vunpack.c.l.b16 %v1213
        %v1223 = vunpack.c.l.b16 %v1214
        %v1224 = vunpack.c.l.b16 %v1215
        %v1225 = vunpack.c.l.b16 %v1216
        %v1226 = vpack.c.b16 %v1223, %v1222
        %v1227 = vpack.c.b16 %v1225, %v1224
        %v1231 = vsel %vm870, %v1217, 0
        %1233 = vmatpush.bf16.msra.mxu0 0
        %1234 = vmatpush.bf16.msra.mxu0 0
        %1235 = vmatpush.bf16.msra.mxu0 0
        %1236 = vmatpush.bf16.msra.mxu0 0
        %1237 = vmatpush.bf16.msra.mxu0 0
        %1238 = vmatpush.bf16.msra.mxu0 0
        %1239 = vmatpush.bf16.msra.mxu0 %v1227
        %1240 = vmatpush.bf16.msra.mxu0 %v1226
        %1241 = vmatmul.bf16.gmra.mxu0 %v1231
        %v1242 = vpop.f32.mrf.mxu0
        %v1243 = vadd.f32 0.0, %v1242
        %v1244 = vpop.f32.mrf.mxu0
        %1245 = vdwg.mxu0
        %v1246 = vadd.f32 %v1187, %v1243
        %v1247 = vld [vmem:[%s6] sm:$0x1]
        %v1249 = vperm.slane %v1247, 0
        %v1251 = vadd.f32 %v1246, %v1249
        %v1252 = vmax.f32 %v1251, 0.0
        %v1254 = vrot.slane %v1252, 7
        %v1256 = vsel %vm702, 0.0, %v1254
        %vm1257 = vcmask 1044480
        %v1258 = vsel %vm1257, %v1256, 0.0
        %v1259 = vld [vmem:[%s7] sm:$0xf]
        %v1260 = vld [vmem:[%s7 + $0x4] sm:$0xf]
        %v1261 = vld [vmem:[%s7 + $0x8] sm:$0xf]
        %v1262 = vld [vmem:[%s7 + $0xc] sm:$0xf]
        %v1263 = vld [vmem:[%s7 + $0x10] sm:$0xf]
        %v1264 = vld [vmem:[%s7 + $0x14] sm:$0xf]
        %v1265 = vld [vmem:[%s7 + $0x18] sm:$0xf]
        %v1266 = vld [vmem:[%s7 + $0x1c] sm:$0xf]
        %v1267 = vpack.c.bf16 %v1258, %v1258
        %s1268 = scalar_lea.vmem %s7, 32
        %v1269 = vld [vmem:[%s1268] sm:$0xf]
        %v1270 = vld [vmem:[%s1268 + $0x4] sm:$0xf]
        %v1271 = vld [vmem:[%s1268 + $0x8] sm:$0xf]
        %v1272 = vld [vmem:[%s1268 + $0xc] sm:$0xf]
        %v1273 = vld [vmem:[%s1268 + $0x10] sm:$0xf]
        %v1274 = vld [vmem:[%s1268 + $0x14] sm:$0xf]
        %v1275 = vld [vmem:[%s1268 + $0x18] sm:$0xf]
        %v1276 = vld [vmem:[%s1268 + $0x1c] sm:$0xf]
        %v1278 = vshrl.u32 %v1267, 16
        %v1280 = vshll.u32 %v1267, 16
        %v1282 = vrot.slane %v1280, 1
        %v1283 = vor.u32 %v1278, %v1282
        %v1292 = vunpack.c.l.b16 %v1269
        %v1293 = vunpack.c.l.b16 %v1270
        %v1294 = vunpack.c.l.b16 %v1271
        %v1295 = vunpack.c.l.b16 %v1272
        %v1296 = vunpack.c.l.b16 %v1273
        %v1297 = vunpack.c.l.b16 %v1274
        %v1298 = vunpack.c.l.b16 %v1275
        %v1299 = vunpack.c.l.b16 %v1276
        %v1300 = vpack.c.b16 %v1293, %v1292
        %v1301 = vpack.c.b16 %v1295, %v1294
        %v1302 = vpack.c.b16 %v1297, %v1296
        %v1303 = vpack.c.b16 %v1299, %v1298
        %vm1308 = vcmask 523264
        %v1310 = vsel %vm1308, %v1283, 0
        %1312 = vmatpush.bf16.msra.mxu0 0
        %1313 = vmatpush.bf16.msra.mxu0 0
        %1314 = vmatpush.bf16.msra.mxu0 0
        %1315 = vmatpush.bf16.msra.mxu0 0
        %1316 = vmatpush.bf16.msra.mxu0 %v1303
        %1317 = vmatpush.bf16.msra.mxu0 %v1302
        %1318 = vmatpush.bf16.msra.mxu0 %v1301
        %1319 = vmatpush.bf16.msra.mxu0 %v1300
        %1320 = vmatmul.bf16.gmra.mxu0 %v1310
        %v1321 = vpop.f32.mrf.mxu0
        %v1322 = vadd.f32 0.0, %v1321
        %v1323 = vpop.f32.mrf.mxu0
        %1324 = vdwg.mxu0
        %v1333 = vunpack.c.l.b16 %v1259
        %v1334 = vunpack.c.l.b16 %v1260
        %v1335 = vunpack.c.l.b16 %v1261
        %v1336 = vunpack.c.l.b16 %v1262
        %v1337 = vunpack.c.l.b16 %v1263
        %v1338 = vunpack.c.l.b16 %v1264
        %v1339 = vunpack.c.l.b16 %v1265
        %v1340 = vunpack.c.l.b16 %v1266
        %v1341 = vpack.c.b16 %v1334, %v1333
        %v1342 = vpack.c.b16 %v1336, %v1335
        %v1343 = vpack.c.b16 %v1338, %v1337
        %v1344 = vpack.c.b16 %v1340, %v1339
        %v1349 = vsel %vm1308, %v1267, 0
        %1351 = vmatpush.bf16.msra.mxu0 0
        %1352 = vmatpush.bf16.msra.mxu0 0
        %1353 = vmatpush.bf16.msra.mxu0 0
        %1354 = vmatpush.bf16.msra.mxu0 0
        %1355 = vmatpush.bf16.msra.mxu0 %v1344
        %1356 = vmatpush.bf16.msra.mxu0 %v1343
        %1357 = vmatpush.bf16.msra.mxu0 %v1342
        %1358 = vmatpush.bf16.msra.mxu0 %v1341
        %1359 = vmatmul.bf16.gmra.mxu0 %v1349
        %v1360 = vpop.f32.mrf.mxu0
        %v1361 = vadd.f32 %v1322, %v1360
        %v1362 = vpop.f32.mrf.mxu0
        %1363 = vdwg.mxu0
        %s1364 = scalar_lea.vmem %s7, 64
        %v1365 = vld [vmem:[%s1364] sm:$0xf]
        %v1366 = vld [vmem:[%s1364 + $0x4] sm:$0xf]
        %v1367 = vld [vmem:[%s1364 + $0x8] sm:$0xf]
        %v1368 = vld [vmem:[%s1364 + $0xc] sm:$0xf]
        %v1369 = vld [vmem:[%s1364 + $0x10] sm:$0xf]
        %v1370 = vld [vmem:[%s1364 + $0x14] sm:$0xf]
        %v1371 = vld [vmem:[%s1364 + $0x18] sm:$0xf]
        %v1372 = vld [vmem:[%s1364 + $0x1c] sm:$0xf]
        %v1374 = vrot.slane %v1267, 1
        %v1383 = vunpack.c.l.b16 %v1365
        %v1384 = vunpack.c.l.b16 %v1366
        %v1385 = vunpack.c.l.b16 %v1367
        %v1386 = vunpack.c.l.b16 %v1368
        %v1387 = vunpack.c.l.b16 %v1369
        %v1388 = vunpack.c.l.b16 %v1370
        %v1389 = vunpack.c.l.b16 %v1371
        %v1390 = vunpack.c.l.b16 %v1372
        %v1391 = vpack.c.b16 %v1384, %v1383
        %v1392 = vpack.c.b16 %v1386, %v1385
        %v1393 = vpack.c.b16 %v1388, %v1387
        %v1394 = vpack.c.b16 %v1390, %v1389
        %v1400 = vsel %vm1308, %v1374, 0
        %1402 = vmatpush.bf16.msra.mxu0 0
        %1403 = vmatpush.bf16.msra.mxu0 0
        %1404 = vmatpush.bf16.msra.mxu0 0
        %1405 = vmatpush.bf16.msra.mxu0 0
        %1406 = vmatpush.bf16.msra.mxu0 %v1394
        %1407 = vmatpush.bf16.msra.mxu0 %v1393
        %1408 = vmatpush.bf16.msra.mxu0 %v1392
        %1409 = vmatpush.bf16.msra.mxu0 %v1391
        %1410 = vmatmul.bf16.gmra.mxu0 %v1400
        %v1411 = vpop.f32.mrf.mxu0
        %v1412 = vadd.f32 0.0, %v1411
        %v1413 = vpop.f32.mrf.mxu0
        %1414 = vdwg.mxu0
        %v1415 = vadd.f32 %v1361, %v1412
        %v1416 = vmax.f32 %v1415, 0.0
        %v1418 = vrot.slane %v1416, 7
        %v1420 = vsel %vm702, 0.0, %v1418
        %v1421 = vsel %vm1257, %v1420, 0.0
        %v1422 = vld [vmem:[%s8] sm:$0xf]
        %v1423 = vld [vmem:[%s8 + $0x4] sm:$0xf]
        %v1424 = vld [vmem:[%s8 + $0x8] sm:$0xf]
        %v1425 = vld [vmem:[%s8 + $0xc] sm:$0xf]
        %v1426 = vld [vmem:[%s8 + $0x10] sm:$0xf]
        %v1427 = vld [vmem:[%s8 + $0x14] sm:$0xf]
        %v1428 = vld [vmem:[%s8 + $0x18] sm:$0xf]
        %v1429 = vld [vmem:[%s8 + $0x1c] sm:$0xf]
        %v1430 = vpack.c.bf16 %v1421, %v1421
        %s1431 = scalar_lea.vmem %s8, 32
        %v1432 = vld [vmem:[%s1431] sm:$0xf]
        %v1433 = vld [vmem:[%s1431 + $0x4] sm:$0xf]
        %v1434 = vld [vmem:[%s1431 + $0x8] sm:$0xf]
        %v1435 = vld [vmem:[%s1431 + $0xc] sm:$0xf]
        %v1436 = vld [vmem:[%s1431 + $0x10] sm:$0xf]
        %v1437 = vld [vmem:[%s1431 + $0x14] sm:$0xf]
        %v1438 = vld [vmem:[%s1431 + $0x18] sm:$0xf]
        %v1439 = vld [vmem:[%s1431 + $0x1c] sm:$0xf]
        %v1441 = vshrl.u32 %v1430, 16
        %v1443 = vshll.u32 %v1430, 16
        %v1445 = vrot.slane %v1443, 1
        %v1446 = vor.u32 %v1441, %v1445
        %v1455 = vunpack.c.l.b16 %v1432
        %v1456 = vunpack.c.l.b16 %v1433
        %v1457 = vunpack.c.l.b16 %v1434
        %v1458 = vunpack.c.l.b16 %v1435
        %v1459 = vunpack.c.l.b16 %v1436
        %v1460 = vunpack.c.l.b16 %v1437
        %v1461 = vunpack.c.l.b16 %v1438
        %v1462 = vunpack.c.l.b16 %v1439
        %v1463 = vpack.c.b16 %v1456, %v1455
        %v1464 = vpack.c.b16 %v1458, %v1457
        %v1465 = vpack.c.b16 %v1460, %v1459
        %v1466 = vpack.c.b16 %v1462, %v1461
        %v1472 = vsel %vm1308, %v1446, 0
        %1474 = vmatpush.bf16.msra.mxu0 0
        %1475 = vmatpush.bf16.msra.mxu0 0
        %1476 = vmatpush.bf16.msra.mxu0 0
        %1477 = vmatpush.bf16.msra.mxu0 0
        %1478 = vmatpush.bf16.msra.mxu0 %v1466
        %1479 = vmatpush.bf16.msra.mxu0 %v1465
        %1480 = vmatpush.bf16.msra.mxu0 %v1464
        %1481 = vmatpush.bf16.msra.mxu0 %v1463
        %1482 = vmatmul.bf16.gmra.mxu0 %v1472
        %v1483 = vpop.f32.mrf.mxu0
        %v1484 = vadd.f32 0.0, %v1483
        %v1485 = vpop.f32.mrf.mxu0
        %1486 = vdwg.mxu0
        %v1495 = vunpack.c.l.b16 %v1422
        %v1496 = vunpack.c.l.b16 %v1423
        %v1497 = vunpack.c.l.b16 %v1424
        %v1498 = vunpack.c.l.b16 %v1425
        %v1499 = vunpack.c.l.b16 %v1426
        %v1500 = vunpack.c.l.b16 %v1427
        %v1501 = vunpack.c.l.b16 %v1428
        %v1502 = vunpack.c.l.b16 %v1429
        %v1503 = vpack.c.b16 %v1496, %v1495
        %v1504 = vpack.c.b16 %v1498, %v1497
        %v1505 = vpack.c.b16 %v1500, %v1499
        %v1506 = vpack.c.b16 %v1502, %v1501
        %v1511 = vsel %vm1308, %v1430, 0
        %1513 = vmatpush.bf16.msra.mxu0 0
        %1514 = vmatpush.bf16.msra.mxu0 0
        %1515 = vmatpush.bf16.msra.mxu0 0
        %1516 = vmatpush.bf16.msra.mxu0 0
        %1517 = vmatpush.bf16.msra.mxu0 %v1506
        %1518 = vmatpush.bf16.msra.mxu0 %v1505
        %1519 = vmatpush.bf16.msra.mxu0 %v1504
        %1520 = vmatpush.bf16.msra.mxu0 %v1503
        %1521 = vmatmul.bf16.gmra.mxu0 %v1511
        %v1522 = vpop.f32.mrf.mxu0
        %v1523 = vadd.f32 %v1484, %v1522
        %v1524 = vpop.f32.mrf.mxu0
        %1525 = vdwg.mxu0
        %s1526 = scalar_lea.vmem %s8, 64
        %v1527 = vld [vmem:[%s1526] sm:$0xf]
        %v1528 = vld [vmem:[%s1526 + $0x4] sm:$0xf]
        %v1529 = vld [vmem:[%s1526 + $0x8] sm:$0xf]
        %v1530 = vld [vmem:[%s1526 + $0xc] sm:$0xf]
        %v1531 = vld [vmem:[%s1526 + $0x10] sm:$0xf]
        %v1532 = vld [vmem:[%s1526 + $0x14] sm:$0xf]
        %v1533 = vld [vmem:[%s1526 + $0x18] sm:$0xf]
        %v1534 = vld [vmem:[%s1526 + $0x1c] sm:$0xf]
        %v1536 = vrot.slane %v1430, 1
        %v1545 = vunpack.c.l.b16 %v1527
        %v1546 = vunpack.c.l.b16 %v1528
        %v1547 = vunpack.c.l.b16 %v1529
        %v1548 = vunpack.c.l.b16 %v1530
        %v1549 = vunpack.c.l.b16 %v1531
        %v1550 = vunpack.c.l.b16 %v1532
        %v1551 = vunpack.c.l.b16 %v1533
        %v1552 = vunpack.c.l.b16 %v1534
        %v1553 = vpack.c.b16 %v1546, %v1545
        %v1554 = vpack.c.b16 %v1548, %v1547
        %v1555 = vpack.c.b16 %v1550, %v1549
        %v1556 = vpack.c.b16 %v1552, %v1551
        %v1562 = vsel %vm1308, %v1536, 0
        %1564 = vmatpush.bf16.msra.mxu0 0
        %1565 = vmatpush.bf16.msra.mxu0 0
        %1566 = vmatpush.bf16.msra.mxu0 0
        %1567 = vmatpush.bf16.msra.mxu0 0
        %1568 = vmatpush.bf16.msra.mxu0 %v1556
        %1569 = vmatpush.bf16.msra.mxu0 %v1555
        %1570 = vmatpush.bf16.msra.mxu0 %v1554
        %1571 = vmatpush.bf16.msra.mxu0 %v1553
        %1572 = vmatmul.bf16.gmra.mxu0 %v1562
        %v1573 = vpop.f32.mrf.mxu0
        %v1574 = vadd.f32 0.0, %v1573
        %v1575 = vpop.f32.mrf.mxu0
        %1576 = vdwg.mxu0
        %v1577 = vadd.f32 %v1523, %v1574
        %v1578 = vmax.f32 %v1577, 0.0
        %v1579 = vadd.f32 %v1578, %v1252
        %v1580 = vmax.f32 %v1579, 0.0
        %v1582 = vrot.slane %v1580, 7
        %v1584 = vsel %vm702, 0.0, %v1582
        %v1585 = vsel %vm1257, %v1584, 0.0
        %vm1586 = vcmask 48128
        %v1587 = vsel %vm1586, %v717, 0
        %vm1589 = vcmask 1045504
        %v1591 = vsel %vm1589, %v1585, 0
        %1593 = vmatpush.msra.mxu0 0.0
        %1594 = vmatpush.msra.mxu0 0.0
        %1595 = vmatpush.msra.mxu0 0.0
        %1596 = vmatpush.msra.mxu0 0.0
        %1597 = vmatpush.msra.mxu0 0.0
        %1598 = vmatpush.msra.mxu0 0.0
        %1599 = vmatpush.msra.mxu0 0.0
        %1600 = vmatpush.msra.mxu0 0.0
        %1601 = vmatpush.msra.mxu0 0.0
        %1602 = vmatpush.msra.mxu0 0.0
        %1603 = vmatpush.msra.mxu0 0.0
        %1604 = vmatpush.msra.mxu0 0.0
        %1605 = vmatpush.msra.mxu0 0.0
        %1606 = vmatpush.msra.mxu0 0.0
        %1607 = vmatpush.msra.mxu0 0.0
        %1608 = vmatpush.msra.mxu0 %v1591
        %1609 = vmatmul.f32.gmra.mxu0 %v1587
        %v1610 = vpop.f32.mrf.mxu0
        %v1611 = vadd.f32 0.0, %v1610
        %1612 = vdwg.mxu0
        %v1613 = vld [vmem:[%s9] sm:$0xf]
        %v1614 = vld [vmem:[%s9 + $0x4] sm:$0xf]
        %v1615 = vld [vmem:[%s9 + $0x8] sm:$0xf]
        %v1616 = vld [vmem:[%s9 + $0xc] sm:$0xf]
        %v1617 = vld [vmem:[%s9 + $0x10] sm:$0xf]
        %v1618 = vld [vmem:[%s9 + $0x14] sm:$0xf]
        %v1619 = vld [vmem:[%s9 + $0x18] sm:$0xf]
        %v1620 = vld [vmem:[%s9 + $0x1c] sm:$0xf]
        %v1621 = vpack.c.bf16 %v1611, %v1611
        %v1622 = vsel %vm1586, %v757, 0
        %1624 = vmatpush.msra.mxu0 0.0
        %1625 = vmatpush.msra.mxu0 0.0
        %1626 = vmatpush.msra.mxu0 0.0
        %1627 = vmatpush.msra.mxu0 0.0
        %1628 = vmatpush.msra.mxu0 0.0
        %1629 = vmatpush.msra.mxu0 0.0
        %1630 = vmatpush.msra.mxu0 0.0
        %1631 = vmatpush.msra.mxu0 0.0
        %1632 = vmatpush.msra.mxu0 0.0
        %1633 = vmatpush.msra.mxu0 0.0
        %1634 = vmatpush.msra.mxu0 0.0
        %1635 = vmatpush.msra.mxu0 0.0
        %1636 = vmatpush.msra.mxu0 0.0
        %1637 = vmatpush.msra.mxu0 0.0
        %1638 = vmatpush.msra.mxu0 0.0
        %1639 = vmatpush.msra.mxu0 %v1591
        %1640 = vmatmul.f32.gmra.mxu0 %v1622
        %v1641 = vpop.f32.mrf.mxu0
        %v1642 = vadd.f32 0.0, %v1641
        %1643 = vdwg.mxu0
        %s1644 = scalar_lea.vmem %s9, 32
        %v1645 = vld [vmem:[%s1644] sm:$0xf]
        %v1646 = vld [vmem:[%s1644 + $0x4] sm:$0xf]
        %v1647 = vld [vmem:[%s1644 + $0x8] sm:$0xf]
        %v1648 = vld [vmem:[%s1644 + $0xc] sm:$0xf]
        %v1649 = vld [vmem:[%s1644 + $0x10] sm:$0xf]
        %v1650 = vld [vmem:[%s1644 + $0x14] sm:$0xf]
        %v1651 = vld [vmem:[%s1644 + $0x18] sm:$0xf]
        %v1652 = vld [vmem:[%s1644 + $0x1c] sm:$0xf]
        %v1653 = vpack.c.bf16 %v1642, %v1642
        %v1662 = vunpack.c.l.b16 %v1645
        %v1663 = vunpack.c.l.b16 %v1646
        %v1664 = vunpack.c.l.b16 %v1647
        %v1665 = vunpack.c.l.b16 %v1648
        %v1666 = vunpack.c.l.b16 %v1649
        %v1667 = vunpack.c.l.b16 %v1650
        %v1668 = vunpack.c.l.b16 %v1651
        %v1669 = vunpack.c.l.b16 %v1652
        %v1670 = vpack.c.b16 %v1663, %v1662
        %v1671 = vpack.c.b16 %v1665, %v1664
        %v1672 = vpack.c.b16 %v1667, %v1666
        %v1673 = vpack.c.b16 %v1669, %v1668
        %v1679 = vsel %vm1308, %v1653, 0
        %1681 = vmatpush.bf16.msra.mxu0 0
        %1682 = vmatpush.bf16.msra.mxu0 0
        %1683 = vmatpush.bf16.msra.mxu0 0
        %1684 = vmatpush.bf16.msra.mxu0 0
        %1685 = vmatpush.bf16.msra.mxu0 %v1673
        %1686 = vmatpush.bf16.msra.mxu0 %v1672
        %1687 = vmatpush.bf16.msra.mxu0 %v1671
        %1688 = vmatpush.bf16.msra.mxu0 %v1670
        %1689 = vmatmul.bf16.gmra.mxu0 %v1679
        %v1690 = vpop.f32.mrf.mxu0
        %v1691 = vadd.f32 0.0, %v1690
        %v1692 = vpop.f32.mrf.mxu0
        %1693 = vdwg.mxu0
        %v1702 = vunpack.c.l.b16 %v1613
        %v1703 = vunpack.c.l.b16 %v1614
        %v1704 = vunpack.c.l.b16 %v1615
        %v1705 = vunpack.c.l.b16 %v1616
        %v1706 = vunpack.c.l.b16 %v1617
        %v1707 = vunpack.c.l.b16 %v1618
        %v1708 = vunpack.c.l.b16 %v1619
        %v1709 = vunpack.c.l.b16 %v1620
        %v1710 = vpack.c.b16 %v1703, %v1702
        %v1711 = vpack.c.b16 %v1705, %v1704
        %v1712 = vpack.c.b16 %v1707, %v1706
        %v1713 = vpack.c.b16 %v1709, %v1708
        %v1719 = vsel %vm1308, %v1621, 0
        %1721 = vmatpush.bf16.msra.mxu0 0
        %1722 = vmatpush.bf16.msra.mxu0 0
        %1723 = vmatpush.bf16.msra.mxu0 0
        %1724 = vmatpush.bf16.msra.mxu0 0
        %1725 = vmatpush.bf16.msra.mxu0 %v1713
        %1726 = vmatpush.bf16.msra.mxu0 %v1712
        %1727 = vmatpush.bf16.msra.mxu0 %v1711
        %1728 = vmatpush.bf16.msra.mxu0 %v1710
        %1729 = vmatmul.bf16.gmra.mxu0 %v1719
        %v1730 = vpop.f32.mrf.mxu0
        %v1731 = vadd.f32 %v1691, %v1730
        %v1732 = vpop.f32.mrf.mxu0
        %1733 = vdwg.mxu0
        %v1734 = vsel %vm1586, %v794, 0
        %1736 = vmatpush.msra.mxu0 0.0
        %1737 = vmatpush.msra.mxu0 0.0
        %1738 = vmatpush.msra.mxu0 0.0
        %1739 = vmatpush.msra.mxu0 0.0
        %1740 = vmatpush.msra.mxu0 0.0
        %1741 = vmatpush.msra.mxu0 0.0
        %1742 = vmatpush.msra.mxu0 0.0
        %1743 = vmatpush.msra.mxu0 0.0
        %1744 = vmatpush.msra.mxu0 0.0
        %1745 = vmatpush.msra.mxu0 0.0
        %1746 = vmatpush.msra.mxu0 0.0
        %1747 = vmatpush.msra.mxu0 0.0
        %1748 = vmatpush.msra.mxu0 0.0
        %1749 = vmatpush.msra.mxu0 0.0
        %1750 = vmatpush.msra.mxu0 0.0
        %1751 = vmatpush.msra.mxu0 %v1591
        %1752 = vmatmul.f32.gmra.mxu0 %v1734
        %v1753 = vpop.f32.mrf.mxu0
        %v1754 = vadd.f32 0.0, %v1753
        %1755 = vdwg.mxu0
        %s1756 = scalar_lea.vmem %s9, 64
        %v1757 = vld [vmem:[%s1756] sm:$0xf]
        %v1758 = vld [vmem:[%s1756 + $0x4] sm:$0xf]
        %v1759 = vld [vmem:[%s1756 + $0x8] sm:$0xf]
        %v1760 = vld [vmem:[%s1756 + $0xc] sm:$0xf]
        %v1761 = vld [vmem:[%s1756 + $0x10] sm:$0xf]
        %v1762 = vld [vmem:[%s1756 + $0x14] sm:$0xf]
        %v1763 = vld [vmem:[%s1756 + $0x18] sm:$0xf]
        %v1764 = vld [vmem:[%s1756 + $0x1c] sm:$0xf]
        %v1765 = vpack.c.bf16 %v1754, %v1754
        %v1774 = vunpack.c.l.b16 %v1757
        %v1775 = vunpack.c.l.b16 %v1758
        %v1776 = vunpack.c.l.b16 %v1759
        %v1777 = vunpack.c.l.b16 %v1760
        %v1778 = vunpack.c.l.b16 %v1761
        %v1779 = vunpack.c.l.b16 %v1762
        %v1780 = vunpack.c.l.b16 %v1763
        %v1781 = vunpack.c.l.b16 %v1764
        %v1782 = vpack.c.b16 %v1775, %v1774
        %v1783 = vpack.c.b16 %v1777, %v1776
        %v1784 = vpack.c.b16 %v1779, %v1778
        %v1785 = vpack.c.b16 %v1781, %v1780
        %v1791 = vsel %vm1308, %v1765, 0
        %1793 = vmatpush.bf16.msra.mxu0 0
        %1794 = vmatpush.bf16.msra.mxu0 0
        %1795 = vmatpush.bf16.msra.mxu0 0
        %1796 = vmatpush.bf16.msra.mxu0 0
        %1797 = vmatpush.bf16.msra.mxu0 %v1785
        %1798 = vmatpush.bf16.msra.mxu0 %v1784
        %1799 = vmatpush.bf16.msra.mxu0 %v1783
        %1800 = vmatpush.bf16.msra.mxu0 %v1782
        %1801 = vmatmul.bf16.gmra.mxu0 %v1791
        %v1802 = vpop.f32.mrf.mxu0
        %v1803 = vadd.f32 0.0, %v1802
        %v1804 = vpop.f32.mrf.mxu0
        %1805 = vdwg.mxu0
        %v1806 = vadd.f32 %v1731, %v1803
        %v1807 = vld [vmem:[%s10] sm:$0x1]
        %v1809 = vperm.slane %v1807, 0
        %v1811 = vadd.f32 %v1806, %v1809
        %v1812 = vmax.f32 %v1811, 0.0
        %1813 = vst [vmem:[%s679] sm:$0x3] %v1812
        %v1815 = vrot.slane %v1812, 1
        %v1817 = vsel %vm702, %v1815, 0.0
        %s1818 = scalar_lea.vmem %s11, 64
        %v1819 = vld [vmem:[%s1818] sm:$0xf]
        %v1820 = vld [vmem:[%s1818 + $0x4] sm:$0xf]
        %v1821 = vld [vmem:[%s1818 + $0x8] sm:$0xf]
        %v1822 = vld [vmem:[%s1818 + $0xc] sm:$0xf]
        %v1823 = vld [vmem:[%s1818 + $0x10] sm:$0xf]
        %v1824 = vld [vmem:[%s1818 + $0x14] sm:$0xf]
        %v1825 = vld [vmem:[%s1818 + $0x18] sm:$0xf]
        %v1826 = vld [vmem:[%s1818 + $0x1c] sm:$0xf]
        %v1827 = vld [vmem:[%s1818 + $0x20] sm:$0xf]
        %v1828 = vld [vmem:[%s1818 + $0x24] sm:$0xf]
        %v1829 = vld [vmem:[%s1818 + $0x28] sm:$0xf]
        %v1830 = vld [vmem:[%s1818 + $0x2c] sm:$0xf]
        %v1831 = vld [vmem:[%s1818 + $0x30] sm:$0xf]
        %v1832 = vld [vmem:[%s1818 + $0x34] sm:$0xf]
        %v1833 = vld [vmem:[%s1818 + $0x38] sm:$0xf]
        %v1834 = vld [vmem:[%s1818 + $0x3c] sm:$0xf]
        %v1835 = vpack.c.bf16 %v1812, %v1812
        %v1852 = vunpack.c.l.b16 %v1819
        %v1853 = vunpack.c.l.b16 %v1820
        %v1854 = vunpack.c.l.b16 %v1821
        %v1855 = vunpack.c.l.b16 %v1822
        %v1856 = vunpack.c.l.b16 %v1823
        %v1857 = vunpack.c.l.b16 %v1824
        %v1858 = vunpack.c.l.b16 %v1825
        %v1859 = vunpack.c.l.b16 %v1826
        %v1860 = vunpack.c.l.b16 %v1827
        %v1861 = vunpack.c.l.b16 %v1828
        %v1862 = vunpack.c.l.b16 %v1829
        %v1863 = vunpack.c.l.b16 %v1830
        %v1864 = vunpack.c.l.b16 %v1831
        %v1865 = vunpack.c.l.b16 %v1832
        %v1866 = vunpack.c.l.b16 %v1833
        %v1867 = vunpack.c.l.b16 %v1834
        %v1868 = vpack.c.b16 %v1853, %v1852
        %v1869 = vpack.c.b16 %v1855, %v1854
        %v1870 = vpack.c.b16 %v1857, %v1856
        %v1871 = vpack.c.b16 %v1859, %v1858
        %v1872 = vpack.c.b16 %v1861, %v1860
        %v1873 = vpack.c.b16 %v1863, %v1862
        %v1874 = vpack.c.b16 %v1865, %v1864
        %v1875 = vpack.c.b16 %v1867, %v1866
        %1884 = vmatpush.bf16.msra.mxu0 %v1875
        %1885 = vmatpush.bf16.msra.mxu0 %v1874
        %1886 = vmatpush.bf16.msra.mxu0 %v1873
        %1887 = vmatpush.bf16.msra.mxu0 %v1872
        %1888 = vmatpush.bf16.msra.mxu0 %v1871
        %1889 = vmatpush.bf16.msra.mxu0 %v1870
        %1890 = vmatpush.bf16.msra.mxu0 %v1869
        %1891 = vmatpush.bf16.msra.mxu0 %v1868
        %1892 = vmatmul.bf16.gmra.mxu0 %v1835
        %v1893 = vpop.f32.mrf.mxu0
        %v1894 = vadd.f32 0.0, %v1893
        %v1895 = vpop.f32.mrf.mxu0
        %1896 = vdwg.mxu0
        %s1897 = scalar_lea.vmem %s11, 128
        %v1898 = vld [vmem:[%s1897] sm:$0xf]
        %v1899 = vld [vmem:[%s1897 + $0x4] sm:$0xf]
        %v1900 = vld [vmem:[%s1897 + $0x8] sm:$0xf]
        %v1901 = vld [vmem:[%s1897 + $0xc] sm:$0xf]
        %v1902 = vld [vmem:[%s1897 + $0x10] sm:$0xf]
        %v1903 = vld [vmem:[%s1897 + $0x14] sm:$0xf]
        %v1904 = vld [vmem:[%s1897 + $0x18] sm:$0xf]
        %v1905 = vld [vmem:[%s1897 + $0x1c] sm:$0xf]
        %v1906 = vld [vmem:[%s1897 + $0x20] sm:$0xf]
        %v1907 = vld [vmem:[%s1897 + $0x24] sm:$0xf]
        %v1908 = vld [vmem:[%s1897 + $0x28] sm:$0xf]
        %v1909 = vld [vmem:[%s1897 + $0x2c] sm:$0xf]
        %v1910 = vld [vmem:[%s1897 + $0x30] sm:$0xf]
        %v1911 = vld [vmem:[%s1897 + $0x34] sm:$0xf]
        %v1912 = vld [vmem:[%s1897 + $0x38] sm:$0xf]
        %v1913 = vld [vmem:[%s1897 + $0x3c] sm:$0xf]
        %v1914 = vld [vmem:[%s11] sm:$0xf]
        %v1915 = vld [vmem:[%s11 + $0x4] sm:$0xf]
        %v1916 = vld [vmem:[%s11 + $0x8] sm:$0xf]
        %v1917 = vld [vmem:[%s11 + $0xc] sm:$0xf]
        %v1918 = vld [vmem:[%s11 + $0x10] sm:$0xf]
        %v1919 = vld [vmem:[%s11 + $0x14] sm:$0xf]
        %v1920 = vld [vmem:[%s11 + $0x18] sm:$0xf]
        %v1921 = vld [vmem:[%s11 + $0x1c] sm:$0xf]
        %v1922 = vld [vmem:[%s11 + $0x20] sm:$0xf]
        %v1923 = vld [vmem:[%s11 + $0x24] sm:$0xf]
        %v1924 = vld [vmem:[%s11 + $0x28] sm:$0xf]
        %v1925 = vld [vmem:[%s11 + $0x2c] sm:$0xf]
        %v1926 = vld [vmem:[%s11 + $0x30] sm:$0xf]
        %v1927 = vld [vmem:[%s11 + $0x34] sm:$0xf]
        %v1928 = vld [vmem:[%s11 + $0x38] sm:$0xf]
        %v1929 = vld [vmem:[%s11 + $0x3c] sm:$0xf]
        %v1930 = vpack.c.bf16 %v1817, %v1817
        %v1947 = vunpack.c.l.b16 %v1914
        %v1948 = vunpack.c.l.b16 %v1915
        %v1949 = vunpack.c.l.b16 %v1916
        %v1950 = vunpack.c.l.b16 %v1917
        %v1951 = vunpack.c.l.b16 %v1918
        %v1952 = vunpack.c.l.b16 %v1919
        %v1953 = vunpack.c.l.b16 %v1920
        %v1954 = vunpack.c.l.b16 %v1921
        %v1955 = vunpack.c.l.b16 %v1922
        %v1956 = vunpack.c.l.b16 %v1923
        %v1957 = vunpack.c.l.b16 %v1924
        %v1958 = vunpack.c.l.b16 %v1925
        %v1959 = vunpack.c.l.b16 %v1926
        %v1960 = vunpack.c.l.b16 %v1927
        %v1961 = vunpack.c.l.b16 %v1928
        %v1962 = vunpack.c.l.b16 %v1929
        %v1963 = vpack.c.b16 %v1948, %v1947
        %v1964 = vpack.c.b16 %v1950, %v1949
        %v1965 = vpack.c.b16 %v1952, %v1951
        %v1966 = vpack.c.b16 %v1954, %v1953
        %v1967 = vpack.c.b16 %v1956, %v1955
        %v1968 = vpack.c.b16 %v1958, %v1957
        %v1969 = vpack.c.b16 %v1960, %v1959
        %v1970 = vpack.c.b16 %v1962, %v1961
        %1979 = vmatpush.bf16.msra.mxu0 %v1970
        %1980 = vmatpush.bf16.msra.mxu0 %v1969
        %1981 = vmatpush.bf16.msra.mxu0 %v1968
        %1982 = vmatpush.bf16.msra.mxu0 %v1967
        %1983 = vmatpush.bf16.msra.mxu0 %v1966
        %1984 = vmatpush.bf16.msra.mxu0 %v1965
        %1985 = vmatpush.bf16.msra.mxu0 %v1964
        %1986 = vmatpush.bf16.msra.mxu0 %v1963
        %1987 = vmatmul.bf16.gmra.mxu0 %v1930
        %v1988 = vpop.f32.mrf.mxu0
        %v1989 = vadd.f32 0.0, %v1988
        %v1990 = vpop.f32.mrf.mxu0
        %1991 = vdwg.mxu0
        %v2008 = vunpack.c.l.b16 %v1898
        %v2009 = vunpack.c.l.b16 %v1899
        %v2010 = vunpack.c.l.b16 %v1900
        %v2011 = vunpack.c.l.b16 %v1901
        %v2012 = vunpack.c.l.b16 %v1902
        %v2013 = vunpack.c.l.b16 %v1903
        %v2014 = vunpack.c.l.b16 %v1904
        %v2015 = vunpack.c.l.b16 %v1905
        %v2016 = vunpack.c.l.b16 %v1906
        %v2017 = vunpack.c.l.b16 %v1907
        %v2018 = vunpack.c.l.b16 %v1908
        %v2019 = vunpack.c.l.b16 %v1909
        %v2020 = vunpack.c.l.b16 %v1910
        %v2021 = vunpack.c.l.b16 %v1911
        %v2022 = vunpack.c.l.b16 %v1912
        %v2023 = vunpack.c.l.b16 %v1913
        %v2024 = vpack.c.b16 %v2009, %v2008
        %v2025 = vpack.c.b16 %v2011, %v2010
        %v2026 = vpack.c.b16 %v2013, %v2012
        %v2027 = vpack.c.b16 %v2015, %v2014
        %v2028 = vpack.c.b16 %v2017, %v2016
        %v2029 = vpack.c.b16 %v2019, %v2018
        %v2030 = vpack.c.b16 %v2021, %v2020
        %v2031 = vpack.c.b16 %v2023, %v2022
        %2040 = vmatpush.bf16.msra.mxu0 %v2031
        %2041 = vmatpush.bf16.msra.mxu0 %v2030
        %2042 = vmatpush.bf16.msra.mxu0 %v2029
        %2043 = vmatpush.bf16.msra.mxu0 %v2028
        %2044 = vmatpush.bf16.msra.mxu0 %v2027
        %2045 = vmatpush.bf16.msra.mxu0 %v2026
        %2046 = vmatpush.bf16.msra.mxu0 %v2025
        %2047 = vmatpush.bf16.msra.mxu0 %v2024
        %2048 = vmatmul.bf16.gmra.mxu0 %v1835
        %v2049 = vpop.f32.mrf.mxu0
        %v2050 = vadd.f32 %v1989, %v2049
        %v2051 = vpop.f32.mrf.mxu0
        %2052 = vdwg.mxu0
        %v2053 = vmul.u32 %v714, 2
        %vm2054 = vcmp.eq.s32.totalorder %v712, %v2053
        %v2055 = vsel %vm2054, 1.0, 0.0
        %v2056 = vadd.s32 %v2053, 1
        %vm2057 = vcmp.eq.s32.totalorder %v712, %v2056
        %v2058 = vsel %vm2057, 1.0, 0.0
        %vm2059 = vcmask 15360
        %v2061 = vsel %vm2059, %v2058, 0
        %v2064 = vsel %vm722, %v2050, 0
        %2066 = vmatpush.msra.mxu0 0.0
        %2067 = vmatpush.msra.mxu0 0.0
        %2068 = vmatpush.msra.mxu0 0.0
        %2069 = vmatpush.msra.mxu0 0.0
        %2070 = vmatpush.msra.mxu0 0.0
        %2071 = vmatpush.msra.mxu0 0.0
        %2072 = vmatpush.msra.mxu0 0.0
        %2073 = vmatpush.msra.mxu0 0.0
        %2074 = vmatpush.msra.mxu0 0.0
        %2075 = vmatpush.msra.mxu0 0.0
        %2076 = vmatpush.msra.mxu0 0.0
        %2077 = vmatpush.msra.mxu0 0.0
        %2078 = vmatpush.msra.mxu0 0.0
        %2079 = vmatpush.msra.mxu0 0.0
        %2080 = vmatpush.msra.mxu0 0.0
        %2081 = vmatpush.msra.mxu0 %v2064
        %2082 = vmatmul.f32.gmra.mxu0 %v2061
        %v2083 = vpop.f32.mrf.mxu0
        %v2084 = vadd.f32 0.0, %v2083
        %2085 = vdwg.mxu0
        %v2087 = vsel %vm2059, %v2055, 0
        %v2090 = vsel %vm722, %v1894, 0
        %2092 = vmatpush.msra.mxu0 0.0
        %2093 = vmatpush.msra.mxu0 0.0
        %2094 = vmatpush.msra.mxu0 0.0
        %2095 = vmatpush.msra.mxu0 0.0
        %2096 = vmatpush.msra.mxu0 0.0
        %2097 = vmatpush.msra.mxu0 0.0
        %2098 = vmatpush.msra.mxu0 0.0
        %2099 = vmatpush.msra.mxu0 0.0
        %2100 = vmatpush.msra.mxu0 0.0
        %2101 = vmatpush.msra.mxu0 0.0
        %2102 = vmatpush.msra.mxu0 0.0
        %2103 = vmatpush.msra.mxu0 0.0
        %2104 = vmatpush.msra.mxu0 0.0
        %2105 = vmatpush.msra.mxu0 0.0
        %2106 = vmatpush.msra.mxu0 0.0
        %2107 = vmatpush.msra.mxu0 %v2090
        %2108 = vmatmul.f32.gmra.mxu0 %v2087
        %v2109 = vpop.f32.mrf.mxu0
        %v2110 = vadd.f32 %v2084, %v2109
        %2111 = vdwg.mxu0
        %v2112 = vld [vmem:[%s12] sm:$0x1]
        %v2114 = vperm.slane %v2112, 0
        %v2116 = vadd.f32 %v2110, %v2114
        %v2117 = vmax.f32 %v2116, 0.0
        %v2119 = vrot.slane %v2117, 7
        %v2121 = vsel %vm702, 0.0, %v2119
        %v2122 = vsel %vm1257, %v2121, 0.0
        %v2123 = vld [vmem:[%s13] sm:$0xf]
        %v2124 = vld [vmem:[%s13 + $0x4] sm:$0xf]
        %v2125 = vld [vmem:[%s13 + $0x8] sm:$0xf]
        %v2126 = vld [vmem:[%s13 + $0xc] sm:$0xf]
        %v2127 = vld [vmem:[%s13 + $0x10] sm:$0xf]
        %v2128 = vld [vmem:[%s13 + $0x14] sm:$0xf]
        %v2129 = vld [vmem:[%s13 + $0x18] sm:$0xf]
        %v2130 = vld [vmem:[%s13 + $0x1c] sm:$0xf]
        %v2131 = vpack.c.bf16 %v2122, %v2122
        %s2132 = scalar_lea.vmem %s13, 32
        %v2133 = vld [vmem:[%s2132] sm:$0xf]
        %v2134 = vld [vmem:[%s2132 + $0x4] sm:$0xf]
        %v2135 = vld [vmem:[%s2132 + $0x8] sm:$0xf]
        %v2136 = vld [vmem:[%s2132 + $0xc] sm:$0xf]
        %v2137 = vld [vmem:[%s2132 + $0x10] sm:$0xf]
        %v2138 = vld [vmem:[%s2132 + $0x14] sm:$0xf]
        %v2139 = vld [vmem:[%s2132 + $0x18] sm:$0xf]
        %v2140 = vld [vmem:[%s2132 + $0x1c] sm:$0xf]
        %v2142 = vshrl.u32 %v2131, 16
        %v2144 = vshll.u32 %v2131, 16
        %v2146 = vrot.slane %v2144, 1
        %v2147 = vor.u32 %v2142, %v2146
        %v2156 = vunpack.c.l.b16 %v2133
        %v2157 = vunpack.c.l.b16 %v2134
        %v2158 = vunpack.c.l.b16 %v2135
        %v2159 = vunpack.c.l.b16 %v2136
        %v2160 = vunpack.c.l.b16 %v2137
        %v2161 = vunpack.c.l.b16 %v2138
        %v2162 = vunpack.c.l.b16 %v2139
        %v2163 = vunpack.c.l.b16 %v2140
        %v2164 = vpack.c.b16 %v2157, %v2156
        %v2165 = vpack.c.b16 %v2159, %v2158
        %v2166 = vpack.c.b16 %v2161, %v2160
        %v2167 = vpack.c.b16 %v2163, %v2162
        %v2173 = vsel %vm1308, %v2147, 0
        %2175 = vmatpush.bf16.msra.mxu0 0
        %2176 = vmatpush.bf16.msra.mxu0 0
        %2177 = vmatpush.bf16.msra.mxu0 0
        %2178 = vmatpush.bf16.msra.mxu0 0
        %2179 = vmatpush.bf16.msra.mxu0 %v2167
        %2180 = vmatpush.bf16.msra.mxu0 %v2166
        %2181 = vmatpush.bf16.msra.mxu0 %v2165
        %2182 = vmatpush.bf16.msra.mxu0 %v2164
        %2183 = vmatmul.bf16.gmra.mxu0 %v2173
        %v2184 = vpop.f32.mrf.mxu0
        %v2185 = vadd.f32 0.0, %v2184
        %v2186 = vpop.f32.mrf.mxu0
        %2187 = vdwg.mxu0
        %v2196 = vunpack.c.l.b16 %v2123
        %v2197 = vunpack.c.l.b16 %v2124
        %v2198 = vunpack.c.l.b16 %v2125
        %v2199 = vunpack.c.l.b16 %v2126
        %v2200 = vunpack.c.l.b16 %v2127
        %v2201 = vunpack.c.l.b16 %v2128
        %v2202 = vunpack.c.l.b16 %v2129
        %v2203 = vunpack.c.l.b16 %v2130
        %v2204 = vpack.c.b16 %v2197, %v2196
        %v2205 = vpack.c.b16 %v2199, %v2198
        %v2206 = vpack.c.b16 %v2201, %v2200
        %v2207 = vpack.c.b16 %v2203, %v2202
        %v2212 = vsel %vm1308, %v2131, 0
        %2214 = vmatpush.bf16.msra.mxu0 0
        %2215 = vmatpush.bf16.msra.mxu0 0
        %2216 = vmatpush.bf16.msra.mxu0 0
        %2217 = vmatpush.bf16.msra.mxu0 0
        %2218 = vmatpush.bf16.msra.mxu0 %v2207
        %2219 = vmatpush.bf16.msra.mxu0 %v2206
        %2220 = vmatpush.bf16.msra.mxu0 %v2205
        %2221 = vmatpush.bf16.msra.mxu0 %v2204
        %2222 = vmatmul.bf16.gmra.mxu0 %v2212
        %v2223 = vpop.f32.mrf.mxu0
        %v2224 = vadd.f32 %v2185, %v2223
        %v2225 = vpop.f32.mrf.mxu0
        %2226 = vdwg.mxu0
        %s2227 = scalar_lea.vmem %s13, 64
        %v2228 = vld [vmem:[%s2227] sm:$0xf]
        %v2229 = vld [vmem:[%s2227 + $0x4] sm:$0xf]
        %v2230 = vld [vmem:[%s2227 + $0x8] sm:$0xf]
        %v2231 = vld [vmem:[%s2227 + $0xc] sm:$0xf]
        %v2232 = vld [vmem:[%s2227 + $0x10] sm:$0xf]
        %v2233 = vld [vmem:[%s2227 + $0x14] sm:$0xf]
        %v2234 = vld [vmem:[%s2227 + $0x18] sm:$0xf]
        %v2235 = vld [vmem:[%s2227 + $0x1c] sm:$0xf]
        %v2237 = vrot.slane %v2131, 1
        %v2246 = vunpack.c.l.b16 %v2228
        %v2247 = vunpack.c.l.b16 %v2229
        %v2248 = vunpack.c.l.b16 %v2230
        %v2249 = vunpack.c.l.b16 %v2231
        %v2250 = vunpack.c.l.b16 %v2232
        %v2251 = vunpack.c.l.b16 %v2233
        %v2252 = vunpack.c.l.b16 %v2234
        %v2253 = vunpack.c.l.b16 %v2235
        %v2254 = vpack.c.b16 %v2247, %v2246
        %v2255 = vpack.c.b16 %v2249, %v2248
        %v2256 = vpack.c.b16 %v2251, %v2250
        %v2257 = vpack.c.b16 %v2253, %v2252
        %v2263 = vsel %vm1308, %v2237, 0
        %2265 = vmatpush.bf16.msra.mxu0 0
        %2266 = vmatpush.bf16.msra.mxu0 0
        %2267 = vmatpush.bf16.msra.mxu0 0
        %2268 = vmatpush.bf16.msra.mxu0 0
        %2269 = vmatpush.bf16.msra.mxu0 %v2257
        %2270 = vmatpush.bf16.msra.mxu0 %v2256
        %2271 = vmatpush.bf16.msra.mxu0 %v2255
        %2272 = vmatpush.bf16.msra.mxu0 %v2254
        %2273 = vmatmul.bf16.gmra.mxu0 %v2263
        %v2274 = vpop.f32.mrf.mxu0
        %v2275 = vadd.f32 0.0, %v2274
        %v2276 = vpop.f32.mrf.mxu0
        %2277 = vdwg.mxu0
        %v2278 = vadd.f32 %v2224, %v2275
        %v2279 = vmax.f32 %v2278, 0.0
        %v2281 = vrot.slane %v2279, 7
        %v2283 = vsel %vm702, 0.0, %v2281
        %v2284 = vsel %vm1257, %v2283, 0.0
        %v2285 = vld [vmem:[%s14] sm:$0xf]
        %v2286 = vld [vmem:[%s14 + $0x4] sm:$0xf]
        %v2287 = vld [vmem:[%s14 + $0x8] sm:$0xf]
        %v2288 = vld [vmem:[%s14 + $0xc] sm:$0xf]
        %v2289 = vld [vmem:[%s14 + $0x10] sm:$0xf]
        %v2290 = vld [vmem:[%s14 + $0x14] sm:$0xf]
        %v2291 = vld [vmem:[%s14 + $0x18] sm:$0xf]
        %v2292 = vld [vmem:[%s14 + $0x1c] sm:$0xf]
        %v2293 = vpack.c.bf16 %v2284, %v2284
        %s2294 = scalar_lea.vmem %s14, 32
        %v2295 = vld [vmem:[%s2294] sm:$0xf]
        %v2296 = vld [vmem:[%s2294 + $0x4] sm:$0xf]
        %v2297 = vld [vmem:[%s2294 + $0x8] sm:$0xf]
        %v2298 = vld [vmem:[%s2294 + $0xc] sm:$0xf]
        %v2299 = vld [vmem:[%s2294 + $0x10] sm:$0xf]
        %v2300 = vld [vmem:[%s2294 + $0x14] sm:$0xf]
        %v2301 = vld [vmem:[%s2294 + $0x18] sm:$0xf]
        %v2302 = vld [vmem:[%s2294 + $0x1c] sm:$0xf]
        %v2304 = vshrl.u32 %v2293, 16
        %v2306 = vshll.u32 %v2293, 16
        %v2308 = vrot.slane %v2306, 1
        %v2309 = vor.u32 %v2304, %v2308
        %v2318 = vunpack.c.l.b16 %v2295
        %v2319 = vunpack.c.l.b16 %v2296
        %v2320 = vunpack.c.l.b16 %v2297
        %v2321 = vunpack.c.l.b16 %v2298
        %v2322 = vunpack.c.l.b16 %v2299
        %v2323 = vunpack.c.l.b16 %v2300
        %v2324 = vunpack.c.l.b16 %v2301
        %v2325 = vunpack.c.l.b16 %v2302
        %v2326 = vpack.c.b16 %v2319, %v2318
        %v2327 = vpack.c.b16 %v2321, %v2320
        %v2328 = vpack.c.b16 %v2323, %v2322
        %v2329 = vpack.c.b16 %v2325, %v2324
        %v2335 = vsel %vm1308, %v2309, 0
        %2337 = vmatpush.bf16.msra.mxu0 0
        %2338 = vmatpush.bf16.msra.mxu0 0
        %2339 = vmatpush.bf16.msra.mxu0 0
        %2340 = vmatpush.bf16.msra.mxu0 0
        %2341 = vmatpush.bf16.msra.mxu0 %v2329
        %2342 = vmatpush.bf16.msra.mxu0 %v2328
        %2343 = vmatpush.bf16.msra.mxu0 %v2327
        %2344 = vmatpush.bf16.msra.mxu0 %v2326
        %2345 = vmatmul.bf16.gmra.mxu0 %v2335
        %v2346 = vpop.f32.mrf.mxu0
        %v2347 = vadd.f32 0.0, %v2346
        %v2348 = vpop.f32.mrf.mxu0
        %2349 = vdwg.mxu0
        %v2358 = vunpack.c.l.b16 %v2285
        %v2359 = vunpack.c.l.b16 %v2286
        %v2360 = vunpack.c.l.b16 %v2287
        %v2361 = vunpack.c.l.b16 %v2288
        %v2362 = vunpack.c.l.b16 %v2289
        %v2363 = vunpack.c.l.b16 %v2290
        %v2364 = vunpack.c.l.b16 %v2291
        %v2365 = vunpack.c.l.b16 %v2292
        %v2366 = vpack.c.b16 %v2359, %v2358
        %v2367 = vpack.c.b16 %v2361, %v2360
        %v2368 = vpack.c.b16 %v2363, %v2362
        %v2369 = vpack.c.b16 %v2365, %v2364
        %v2374 = vsel %vm1308, %v2293, 0
        %2376 = vmatpush.bf16.msra.mxu0 0
        %2377 = vmatpush.bf16.msra.mxu0 0
        %2378 = vmatpush.bf16.msra.mxu0 0
        %2379 = vmatpush.bf16.msra.mxu0 0
        %2380 = vmatpush.bf16.msra.mxu0 %v2369
        %2381 = vmatpush.bf16.msra.mxu0 %v2368
        %2382 = vmatpush.bf16.msra.mxu0 %v2367
        %2383 = vmatpush.bf16.msra.mxu0 %v2366
        %2384 = vmatmul.bf16.gmra.mxu0 %v2374
        %v2385 = vpop.f32.mrf.mxu0
        %v2386 = vadd.f32 %v2347, %v2385
        %v2387 = vpop.f32.mrf.mxu0
        %2388 = vdwg.mxu0
        %s2389 = scalar_lea.vmem %s14, 64
        %v2390 = vld [vmem:[%s2389] sm:$0xf]
        %v2391 = vld [vmem:[%s2389 + $0x4] sm:$0xf]
        %v2392 = vld [vmem:[%s2389 + $0x8] sm:$0xf]
        %v2393 = vld [vmem:[%s2389 + $0xc] sm:$0xf]
        %v2394 = vld [vmem:[%s2389 + $0x10] sm:$0xf]
        %v2395 = vld [vmem:[%s2389 + $0x14] sm:$0xf]
        %v2396 = vld [vmem:[%s2389 + $0x18] sm:$0xf]
        %v2397 = vld [vmem:[%s2389 + $0x1c] sm:$0xf]
        %v2399 = vrot.slane %v2293, 1
        %v2408 = vunpack.c.l.b16 %v2390
        %v2409 = vunpack.c.l.b16 %v2391
        %v2410 = vunpack.c.l.b16 %v2392
        %v2411 = vunpack.c.l.b16 %v2393
        %v2412 = vunpack.c.l.b16 %v2394
        %v2413 = vunpack.c.l.b16 %v2395
        %v2414 = vunpack.c.l.b16 %v2396
        %v2415 = vunpack.c.l.b16 %v2397
        %v2416 = vpack.c.b16 %v2409, %v2408
        %v2417 = vpack.c.b16 %v2411, %v2410
        %v2418 = vpack.c.b16 %v2413, %v2412
        %v2419 = vpack.c.b16 %v2415, %v2414
        %v2425 = vsel %vm1308, %v2399, 0
        %2427 = vmatpush.bf16.msra.mxu0 0
        %2428 = vmatpush.bf16.msra.mxu0 0
        %2429 = vmatpush.bf16.msra.mxu0 0
        %2430 = vmatpush.bf16.msra.mxu0 0
        %2431 = vmatpush.bf16.msra.mxu0 %v2419
        %2432 = vmatpush.bf16.msra.mxu0 %v2418
        %2433 = vmatpush.bf16.msra.mxu0 %v2417
        %2434 = vmatpush.bf16.msra.mxu0 %v2416
        %2435 = vmatmul.bf16.gmra.mxu0 %v2425
        %v2436 = vpop.f32.mrf.mxu0
        %v2437 = vadd.f32 0.0, %v2436
        %v2438 = vpop.f32.mrf.mxu0
        %2439 = vdwg.mxu0
        %v2440 = vadd.f32 %v2386, %v2437
        %v2441 = vmax.f32 %v2440, 0.0
        %v2442 = vadd.f32 %v2441, %v2117
        %v2443 = vmax.f32 %v2442, 0.0
        %v2445 = vrot.slane %v2443, 1
        %vm2447 = vcmask 1042432
        %v2448 = vsel %vm2447, %v2445, 0.0
        %s2449 = scalar_lea.vmem %s15, 32
        %v2450 = vld [vmem:[%s2449] sm:$0xf]
        %v2451 = vld [vmem:[%s2449 + $0x4] sm:$0xf]
        %v2452 = vld [vmem:[%s2449 + $0x8] sm:$0xf]
        %v2453 = vld [vmem:[%s2449 + $0xc] sm:$0xf]
        %v2454 = vld [vmem:[%s2449 + $0x10] sm:$0xf]
        %v2455 = vld [vmem:[%s2449 + $0x14] sm:$0xf]
        %v2456 = vld [vmem:[%s2449 + $0x18] sm:$0xf]
        %v2457 = vld [vmem:[%s2449 + $0x1c] sm:$0xf]
        %v2458 = vpack.c.bf16 %v2443, %v2443
        %v2467 = vunpack.c.l.b16 %v2450
        %v2468 = vunpack.c.l.b16 %v2451
        %v2469 = vunpack.c.l.b16 %v2452
        %v2470 = vunpack.c.l.b16 %v2453
        %v2471 = vunpack.c.l.b16 %v2454
        %v2472 = vunpack.c.l.b16 %v2455
        %v2473 = vunpack.c.l.b16 %v2456
        %v2474 = vunpack.c.l.b16 %v2457
        %v2475 = vpack.c.b16 %v2468, %v2467
        %v2476 = vpack.c.b16 %v2470, %v2469
        %v2477 = vpack.c.b16 %v2472, %v2471
        %v2478 = vpack.c.b16 %v2474, %v2473
        %v2484 = vsel %vm1308, %v2458, 0
        %2486 = vmatpush.bf16.msra.mxu0 0
        %2487 = vmatpush.bf16.msra.mxu0 0
        %2488 = vmatpush.bf16.msra.mxu0 0
        %2489 = vmatpush.bf16.msra.mxu0 0
        %2490 = vmatpush.bf16.msra.mxu0 %v2478
        %2491 = vmatpush.bf16.msra.mxu0 %v2477
        %2492 = vmatpush.bf16.msra.mxu0 %v2476
        %2493 = vmatpush.bf16.msra.mxu0 %v2475
        %2494 = vmatmul.bf16.gmra.mxu0 %v2484
        %v2495 = vpop.f32.mrf.mxu0
        %v2496 = vadd.f32 0.0, %v2495
        %v2497 = vpop.f32.mrf.mxu0
        %2498 = vdwg.mxu0
        %s2499 = scalar_lea.vmem %s15, 64
        %v2500 = vld [vmem:[%s2499] sm:$0xf]
        %v2501 = vld [vmem:[%s2499 + $0x4] sm:$0xf]
        %v2502 = vld [vmem:[%s2499 + $0x8] sm:$0xf]
        %v2503 = vld [vmem:[%s2499 + $0xc] sm:$0xf]
        %v2504 = vld [vmem:[%s2499 + $0x10] sm:$0xf]
        %v2505 = vld [vmem:[%s2499 + $0x14] sm:$0xf]
        %v2506 = vld [vmem:[%s2499 + $0x18] sm:$0xf]
        %v2507 = vld [vmem:[%s2499 + $0x1c] sm:$0xf]
        %v2508 = vld [vmem:[%s15] sm:$0xf]
        %v2509 = vld [vmem:[%s15 + $0x4] sm:$0xf]
        %v2510 = vld [vmem:[%s15 + $0x8] sm:$0xf]
        %v2511 = vld [vmem:[%s15 + $0xc] sm:$0xf]
        %v2512 = vld [vmem:[%s15 + $0x10] sm:$0xf]
        %v2513 = vld [vmem:[%s15 + $0x14] sm:$0xf]
        %v2514 = vld [vmem:[%s15 + $0x18] sm:$0xf]
        %v2515 = vld [vmem:[%s15 + $0x1c] sm:$0xf]
        %v2516 = vpack.c.bf16 %v2448, %v2448
        %v2525 = vunpack.c.l.b16 %v2508
        %v2526 = vunpack.c.l.b16 %v2509
        %v2527 = vunpack.c.l.b16 %v2510
        %v2528 = vunpack.c.l.b16 %v2511
        %v2529 = vunpack.c.l.b16 %v2512
        %v2530 = vunpack.c.l.b16 %v2513
        %v2531 = vunpack.c.l.b16 %v2514
        %v2532 = vunpack.c.l.b16 %v2515
        %v2533 = vpack.c.b16 %v2526, %v2525
        %v2534 = vpack.c.b16 %v2528, %v2527
        %v2535 = vpack.c.b16 %v2530, %v2529
        %v2536 = vpack.c.b16 %v2532, %v2531
        %v2542 = vsel %vm1308, %v2516, 0
        %2544 = vmatpush.bf16.msra.mxu0 0
        %2545 = vmatpush.bf16.msra.mxu0 0
        %2546 = vmatpush.bf16.msra.mxu0 0
        %2547 = vmatpush.bf16.msra.mxu0 0
        %2548 = vmatpush.bf16.msra.mxu0 %v2536
        %2549 = vmatpush.bf16.msra.mxu0 %v2535
        %2550 = vmatpush.bf16.msra.mxu0 %v2534
        %2551 = vmatpush.bf16.msra.mxu0 %v2533
        %2552 = vmatmul.bf16.gmra.mxu0 %v2542
        %v2553 = vpop.f32.mrf.mxu0
        %v2554 = vadd.f32 0.0, %v2553
        %v2555 = vpop.f32.mrf.mxu0
        %2556 = vdwg.mxu0
        %v2565 = vunpack.c.l.b16 %v2500
        %v2566 = vunpack.c.l.b16 %v2501
        %v2567 = vunpack.c.l.b16 %v2502
        %v2568 = vunpack.c.l.b16 %v2503
        %v2569 = vunpack.c.l.b16 %v2504
        %v2570 = vunpack.c.l.b16 %v2505
        %v2571 = vunpack.c.l.b16 %v2506
        %v2572 = vunpack.c.l.b16 %v2507
        %v2573 = vpack.c.b16 %v2566, %v2565
        %v2574 = vpack.c.b16 %v2568, %v2567
        %v2575 = vpack.c.b16 %v2570, %v2569
        %v2576 = vpack.c.b16 %v2572, %v2571
        %2581 = vmatpush.bf16.msra.mxu0 0
        %2582 = vmatpush.bf16.msra.mxu0 0
        %2583 = vmatpush.bf16.msra.mxu0 0
        %2584 = vmatpush.bf16.msra.mxu0 0
        %2585 = vmatpush.bf16.msra.mxu0 %v2576
        %2586 = vmatpush.bf16.msra.mxu0 %v2575
        %2587 = vmatpush.bf16.msra.mxu0 %v2574
        %2588 = vmatpush.bf16.msra.mxu0 %v2573
        %2589 = vmatmul.bf16.gmra.mxu0 %v2484
        %v2590 = vpop.f32.mrf.mxu0
        %v2591 = vadd.f32 %v2554, %v2590
        %v2592 = vpop.f32.mrf.mxu0
        %2593 = vdwg.mxu0
        %vm2594 = vcmask 31744
        %v2595 = vsel %vm2594, %v2058, 0
        %vm2597 = vcmask 1043456
        %v2599 = vsel %vm2597, %v2591, 0
        %2601 = vmatpush.msra.mxu0 0.0
        %2602 = vmatpush.msra.mxu0 0.0
        %2603 = vmatpush.msra.mxu0 0.0
        %2604 = vmatpush.msra.mxu0 0.0
        %2605 = vmatpush.msra.mxu0 0.0
        %2606 = vmatpush.msra.mxu0 0.0
        %2607 = vmatpush.msra.mxu0 0.0
        %2608 = vmatpush.msra.mxu0 0.0
        %2609 = vmatpush.msra.mxu0 0.0
        %2610 = vmatpush.msra.mxu0 0.0
        %2611 = vmatpush.msra.mxu0 0.0
        %2612 = vmatpush.msra.mxu0 0.0
        %2613 = vmatpush.msra.mxu0 0.0
        %2614 = vmatpush.msra.mxu0 0.0
        %2615 = vmatpush.msra.mxu0 0.0
        %2616 = vmatpush.msra.mxu0 %v2599
        %2617 = vmatmul.f32.gmra.mxu0 %v2595
        %v2618 = vpop.f32.mrf.mxu0
        %v2619 = vadd.f32 0.0, %v2618
        %2620 = vdwg.mxu0
        %v2621 = vsel %vm2594, %v2055, 0
        %v2624 = vsel %vm2597, %v2496, 0
        %2626 = vmatpush.msra.mxu0 0.0
        %2627 = vmatpush.msra.mxu0 0.0
        %2628 = vmatpush.msra.mxu0 0.0
        %2629 = vmatpush.msra.mxu0 0.0
        %2630 = vmatpush.msra.mxu0 0.0
        %2631 = vmatpush.msra.mxu0 0.0
        %2632 = vmatpush.msra.mxu0 0.0
        %2633 = vmatpush.msra.mxu0 0.0
        %2634 = vmatpush.msra.mxu0 0.0
        %2635 = vmatpush.msra.mxu0 0.0
        %2636 = vmatpush.msra.mxu0 0.0
        %2637 = vmatpush.msra.mxu0 0.0
        %2638 = vmatpush.msra.mxu0 0.0
        %2639 = vmatpush.msra.mxu0 0.0
        %2640 = vmatpush.msra.mxu0 0.0
        %2641 = vmatpush.msra.mxu0 %v2624
        %2642 = vmatmul.f32.gmra.mxu0 %v2621
        %v2643 = vpop.f32.mrf.mxu0
        %v2644 = vadd.f32 %v2619, %v2643
        %2645 = vdwg.mxu0
        %v2646 = vld [vmem:[%s16] sm:$0x1]
        %v2648 = vperm.slane %v2646, 0
        %v2650 = vadd.f32 %v2644, %v2648
        %v2651 = vmax.f32 %v2650, 0.0
        %v2653 = vrot.slane %v2651, 7
        %v2655 = vsel %vm702, 0.0, %v2653
        %v2656 = vsel %vm702, %v2653, 0.0
        %v2657 = vld [vmem:[%s17] sm:$0xf]
        %v2658 = vld [vmem:[%s17 + $0x4] sm:$0xf]
        %v2659 = vld [vmem:[%s17 + $0x8] sm:$0xf]
        %v2660 = vld [vmem:[%s17 + $0xc] sm:$0xf]
        %v2661 = vpack.c.bf16 %v2655, %v2655
        %s2662 = scalar_lea.vmem %s17, 16
        %v2663 = vld [vmem:[%s2662] sm:$0xf]
        %v2664 = vld [vmem:[%s2662 + $0x4] sm:$0xf]
        %v2665 = vld [vmem:[%s2662 + $0x8] sm:$0xf]
        %v2666 = vld [vmem:[%s2662 + $0xc] sm:$0xf]
        %v2667 = vpack.c.bf16 %v2656, %v2655
        %v2669 = vshrl.u32 %v2667, 16
        %v2671 = vshll.u32 %v2667, 16
        %v2673 = vrot.slane %v2671, 1
        %v2674 = vor.u32 %v2669, %v2673
        %v2679 = vunpack.c.l.b16 %v2663
        %v2680 = vunpack.c.l.b16 %v2664
        %v2681 = vunpack.c.l.b16 %v2665
        %v2682 = vunpack.c.l.b16 %v2666
        %v2683 = vpack.c.b16 %v2680, %v2679
        %v2684 = vpack.c.b16 %v2682, %v2681
        %v2688 = vsel %vm870, %v2674, 0
        %2690 = vmatpush.bf16.msra.mxu0 0
        %2691 = vmatpush.bf16.msra.mxu0 0
        %2692 = vmatpush.bf16.msra.mxu0 0
        %2693 = vmatpush.bf16.msra.mxu0 0
        %2694 = vmatpush.bf16.msra.mxu0 0
        %2695 = vmatpush.bf16.msra.mxu0 0
        %2696 = vmatpush.bf16.msra.mxu0 %v2684
        %2697 = vmatpush.bf16.msra.mxu0 %v2683
        %2698 = vmatmul.bf16.gmra.mxu0 %v2688
        %v2699 = vpop.f32.mrf.mxu0
        %v2700 = vadd.f32 0.0, %v2699
        %v2701 = vpop.f32.mrf.mxu0
        %2702 = vdwg.mxu0
        %v2707 = vunpack.c.l.b16 %v2657
        %v2708 = vunpack.c.l.b16 %v2658
        %v2709 = vunpack.c.l.b16 %v2659
        %v2710 = vunpack.c.l.b16 %v2660
        %v2711 = vpack.c.b16 %v2708, %v2707
        %v2712 = vpack.c.b16 %v2710, %v2709
        %v2716 = vsel %vm870, %v2661, 0
        %2718 = vmatpush.bf16.msra.mxu0 0
        %2719 = vmatpush.bf16.msra.mxu0 0
        %2720 = vmatpush.bf16.msra.mxu0 0
        %2721 = vmatpush.bf16.msra.mxu0 0
        %2722 = vmatpush.bf16.msra.mxu0 0
        %2723 = vmatpush.bf16.msra.mxu0 0
        %2724 = vmatpush.bf16.msra.mxu0 %v2712
        %2725 = vmatpush.bf16.msra.mxu0 %v2711
        %2726 = vmatmul.bf16.gmra.mxu0 %v2716
        %v2727 = vpop.f32.mrf.mxu0
        %v2728 = vadd.f32 %v2700, %v2727
        %v2729 = vpop.f32.mrf.mxu0
        %2730 = vdwg.mxu0
        %s2731 = scalar_lea.vmem %s17, 32
        %v2732 = vld [vmem:[%s2731] sm:$0xf]
        %v2733 = vld [vmem:[%s2731 + $0x4] sm:$0xf]
        %v2734 = vld [vmem:[%s2731 + $0x8] sm:$0xf]
        %v2735 = vld [vmem:[%s2731 + $0xc] sm:$0xf]
        %v2737 = vrot.slane %v2667, 1
        %v2742 = vunpack.c.l.b16 %v2732
        %v2743 = vunpack.c.l.b16 %v2733
        %v2744 = vunpack.c.l.b16 %v2734
        %v2745 = vunpack.c.l.b16 %v2735
        %v2746 = vpack.c.b16 %v2743, %v2742
        %v2747 = vpack.c.b16 %v2745, %v2744
        %v2751 = vsel %vm870, %v2737, 0
        %2753 = vmatpush.bf16.msra.mxu0 0
        %2754 = vmatpush.bf16.msra.mxu0 0
        %2755 = vmatpush.bf16.msra.mxu0 0
        %2756 = vmatpush.bf16.msra.mxu0 0
        %2757 = vmatpush.bf16.msra.mxu0 0
        %2758 = vmatpush.bf16.msra.mxu0 0
        %2759 = vmatpush.bf16.msra.mxu0 %v2747
        %2760 = vmatpush.bf16.msra.mxu0 %v2746
        %2761 = vmatmul.bf16.gmra.mxu0 %v2751
        %v2762 = vpop.f32.mrf.mxu0
        %v2763 = vadd.f32 0.0, %v2762
        %v2764 = vpop.f32.mrf.mxu0
        %2765 = vdwg.mxu0
        %v2766 = vadd.f32 %v2728, %v2763
        %v2767 = vmax.f32 %v2766, 0.0
        %v2769 = vrot.slane %v2767, 7
        %v2771 = vsel %vm702, 0.0, %v2769
        %v2772 = vsel %vm702, %v2769, 0.0
        %v2773 = vld [vmem:[%s18] sm:$0xf]
        %v2774 = vld [vmem:[%s18 + $0x4] sm:$0xf]
        %v2775 = vld [vmem:[%s18 + $0x8] sm:$0xf]
        %v2776 = vld [vmem:[%s18 + $0xc] sm:$0xf]
        %v2777 = vpack.c.bf16 %v2771, %v2771
        %s2778 = scalar_lea.vmem %s18, 16
        %v2779 = vld [vmem:[%s2778] sm:$0xf]
        %v2780 = vld [vmem:[%s2778 + $0x4] sm:$0xf]
        %v2781 = vld [vmem:[%s2778 + $0x8] sm:$0xf]
        %v2782 = vld [vmem:[%s2778 + $0xc] sm:$0xf]
        %v2783 = vpack.c.bf16 %v2772, %v2771
        %v2785 = vshrl.u32 %v2783, 16
        %v2787 = vshll.u32 %v2783, 16
        %v2789 = vrot.slane %v2787, 1
        %v2790 = vor.u32 %v2785, %v2789
        %v2795 = vunpack.c.l.b16 %v2779
        %v2796 = vunpack.c.l.b16 %v2780
        %v2797 = vunpack.c.l.b16 %v2781
        %v2798 = vunpack.c.l.b16 %v2782
        %v2799 = vpack.c.b16 %v2796, %v2795
        %v2800 = vpack.c.b16 %v2798, %v2797
        %v2804 = vsel %vm870, %v2790, 0
        %2806 = vmatpush.bf16.msra.mxu0 0
        %2807 = vmatpush.bf16.msra.mxu0 0
        %2808 = vmatpush.bf16.msra.mxu0 0
        %2809 = vmatpush.bf16.msra.mxu0 0
        %2810 = vmatpush.bf16.msra.mxu0 0
        %2811 = vmatpush.bf16.msra.mxu0 0
        %2812 = vmatpush.bf16.msra.mxu0 %v2800
        %2813 = vmatpush.bf16.msra.mxu0 %v2799
        %2814 = vmatmul.bf16.gmra.mxu0 %v2804
        %v2815 = vpop.f32.mrf.mxu0
        %v2816 = vadd.f32 0.0, %v2815
        %v2817 = vpop.f32.mrf.mxu0
        %2818 = vdwg.mxu0
        %v2823 = vunpack.c.l.b16 %v2773
        %v2824 = vunpack.c.l.b16 %v2774
        %v2825 = vunpack.c.l.b16 %v2775
        %v2826 = vunpack.c.l.b16 %v2776
        %v2827 = vpack.c.b16 %v2824, %v2823
        %v2828 = vpack.c.b16 %v2826, %v2825
        %v2832 = vsel %vm870, %v2777, 0
        %2834 = vmatpush.bf16.msra.mxu0 0
        %2835 = vmatpush.bf16.msra.mxu0 0
        %2836 = vmatpush.bf16.msra.mxu0 0
        %2837 = vmatpush.bf16.msra.mxu0 0
        %2838 = vmatpush.bf16.msra.mxu0 0
        %2839 = vmatpush.bf16.msra.mxu0 0
        %2840 = vmatpush.bf16.msra.mxu0 %v2828
        %2841 = vmatpush.bf16.msra.mxu0 %v2827
        %2842 = vmatmul.bf16.gmra.mxu0 %v2832
        %v2843 = vpop.f32.mrf.mxu0
        %v2844 = vadd.f32 %v2816, %v2843
        %v2845 = vpop.f32.mrf.mxu0
        %2846 = vdwg.mxu0
        %s2847 = scalar_lea.vmem %s18, 32
        %v2848 = vld [vmem:[%s2847] sm:$0xf]
        %v2849 = vld [vmem:[%s2847 + $0x4] sm:$0xf]
        %v2850 = vld [vmem:[%s2847 + $0x8] sm:$0xf]
        %v2851 = vld [vmem:[%s2847 + $0xc] sm:$0xf]
        %v2853 = vrot.slane %v2783, 1
        %v2858 = vunpack.c.l.b16 %v2848
        %v2859 = vunpack.c.l.b16 %v2849
        %v2860 = vunpack.c.l.b16 %v2850
        %v2861 = vunpack.c.l.b16 %v2851
        %v2862 = vpack.c.b16 %v2859, %v2858
        %v2863 = vpack.c.b16 %v2861, %v2860
        %v2867 = vsel %vm870, %v2853, 0
        %2869 = vmatpush.bf16.msra.mxu0 0
        %2870 = vmatpush.bf16.msra.mxu0 0
        %2871 = vmatpush.bf16.msra.mxu0 0
        %2872 = vmatpush.bf16.msra.mxu0 0
        %2873 = vmatpush.bf16.msra.mxu0 0
        %2874 = vmatpush.bf16.msra.mxu0 0
        %2875 = vmatpush.bf16.msra.mxu0 %v2863
        %2876 = vmatpush.bf16.msra.mxu0 %v2862
        %2877 = vmatmul.bf16.gmra.mxu0 %v2867
        %v2878 = vpop.f32.mrf.mxu0
        %v2879 = vadd.f32 0.0, %v2878
        %v2880 = vpop.f32.mrf.mxu0
        %2881 = vdwg.mxu0
        %v2882 = vadd.f32 %v2844, %v2879
        %v2883 = vmax.f32 %v2882, 0.0
        %v2884 = vadd.f32 %v2883, %v2651
        %v2885 = vmax.f32 %v2884, 0.0
        %v2887 = vrot.slane %v2885, 1
        %vm2889 = vcmask 1046528
        %v2890 = vsel %vm2889, %v2887, 0.0
        %s2891 = scalar_lea.vmem %s19, 16
        %v2892 = vld [vmem:[%s2891] sm:$0xf]
        %v2893 = vld [vmem:[%s2891 + $0x4] sm:$0xf]
        %v2894 = vld [vmem:[%s2891 + $0x8] sm:$0xf]
        %v2895 = vld [vmem:[%s2891 + $0xc] sm:$0xf]
        %v2896 = vpack.c.bf16 %v2885, %v2885
        %v2901 = vunpack.c.l.b16 %v2892
        %v2902 = vunpack.c.l.b16 %v2893
        %v2903 = vunpack.c.l.b16 %v2894
        %v2904 = vunpack.c.l.b16 %v2895
        %v2905 = vpack.c.b16 %v2902, %v2901
        %v2906 = vpack.c.b16 %v2904, %v2903
        %v2910 = vsel %vm870, %v2896, 0
        %2912 = vmatpush.bf16.msra.mxu0 0
        %2913 = vmatpush.bf16.msra.mxu0 0
        %2914 = vmatpush.bf16.msra.mxu0 0
        %2915 = vmatpush.bf16.msra.mxu0 0
        %2916 = vmatpush.bf16.msra.mxu0 0
        %2917 = vmatpush.bf16.msra.mxu0 0
        %2918 = vmatpush.bf16.msra.mxu0 %v2906
        %2919 = vmatpush.bf16.msra.mxu0 %v2905
        %2920 = vmatmul.bf16.gmra.mxu0 %v2910
        %v2921 = vpop.f32.mrf.mxu0
        %v2922 = vadd.f32 0.0, %v2921
        %v2923 = vpop.f32.mrf.mxu0
        %2924 = vdwg.mxu0
        %s2925 = scalar_lea.vmem %s19, 32
        %v2926 = vld [vmem:[%s2925] sm:$0xf]
        %v2927 = vld [vmem:[%s2925 + $0x4] sm:$0xf]
        %v2928 = vld [vmem:[%s2925 + $0x8] sm:$0xf]
        %v2929 = vld [vmem:[%s2925 + $0xc] sm:$0xf]
        %v2930 = vld [vmem:[%s19] sm:$0xf]
        %v2931 = vld [vmem:[%s19 + $0x4] sm:$0xf]
        %v2932 = vld [vmem:[%s19 + $0x8] sm:$0xf]
        %v2933 = vld [vmem:[%s19 + $0xc] sm:$0xf]
        %v2934 = vpack.c.bf16 %v2890, %v2890
        %v2939 = vunpack.c.l.b16 %v2930
        %v2940 = vunpack.c.l.b16 %v2931
        %v2941 = vunpack.c.l.b16 %v2932
        %v2942 = vunpack.c.l.b16 %v2933
        %v2943 = vpack.c.b16 %v2940, %v2939
        %v2944 = vpack.c.b16 %v2942, %v2941
        %v2948 = vsel %vm870, %v2934, 0
        %2950 = vmatpush.bf16.msra.mxu0 0
        %2951 = vmatpush.bf16.msra.mxu0 0
        %2952 = vmatpush.bf16.msra.mxu0 0
        %2953 = vmatpush.bf16.msra.mxu0 0
        %2954 = vmatpush.bf16.msra.mxu0 0
        %2955 = vmatpush.bf16.msra.mxu0 0
        %2956 = vmatpush.bf16.msra.mxu0 %v2944
        %2957 = vmatpush.bf16.msra.mxu0 %v2943
        %2958 = vmatmul.bf16.gmra.mxu0 %v2948
        %v2959 = vpop.f32.mrf.mxu0
        %v2960 = vadd.f32 0.0, %v2959
        %v2961 = vpop.f32.mrf.mxu0
        %2962 = vdwg.mxu0
        %v2967 = vunpack.c.l.b16 %v2926
        %v2968 = vunpack.c.l.b16 %v2927
        %v2969 = vunpack.c.l.b16 %v2928
        %v2970 = vunpack.c.l.b16 %v2929
        %v2971 = vpack.c.b16 %v2968, %v2967
        %v2972 = vpack.c.b16 %v2970, %v2969
        %2975 = vmatpush.bf16.msra.mxu0 0
        %2976 = vmatpush.bf16.msra.mxu0 0
        %2977 = vmatpush.bf16.msra.mxu0 0
        %2978 = vmatpush.bf16.msra.mxu0 0
        %2979 = vmatpush.bf16.msra.mxu0 0
        %2980 = vmatpush.bf16.msra.mxu0 0
        %2981 = vmatpush.bf16.msra.mxu0 %v2972
        %2982 = vmatpush.bf16.msra.mxu0 %v2971
        %2983 = vmatmul.bf16.gmra.mxu0 %v2910
        %v2984 = vpop.f32.mrf.mxu0
        %v2985 = vadd.f32 %v2960, %v2984
        %v2986 = vpop.f32.mrf.mxu0
        %2987 = vdwg.mxu0
        %v2988 = vadd.s32 %v712, 8
        %vm2989 = vcmp.eq.s32.totalorder %v2988, %v2053
        %v2990 = vsel %vm2989, 1.0, 0.0
        %vm2991 = vcmp.eq.s32.totalorder %v2988, %v2056
        %v2992 = vsel %vm2991, 1.0, 0.0
        %vm2993 = vcmask 64512
        %v2994 = vsel %vm2993, %v2058, 0
        %v2997 = vsel %vm2993, %v2992, 0
        %2999 = vmatpush.msra.mxu0 0.0
        %3000 = vmatpush.msra.mxu0 0.0
        %3001 = vmatpush.msra.mxu0 0.0
        %3002 = vmatpush.msra.mxu0 0.0
        %3003 = vmatpush.msra.mxu0 0.0
        %3004 = vmatpush.msra.mxu0 0.0
        %3005 = vmatpush.msra.mxu0 0.0
        %3006 = vmatpush.msra.mxu0 0.0
        %3007 = vmatpush.msra.mxu0 0.0
        %3008 = vmatpush.msra.mxu0 0.0
        %3009 = vmatpush.msra.mxu0 0.0
        %3010 = vmatpush.msra.mxu0 0.0
        %3011 = vmatpush.msra.mxu0 0.0
        %3012 = vmatpush.msra.mxu0 0.0
        %3013 = vmatpush.msra.mxu0 0.0
        %3014 = vmatpush.msra.mxu0 %v2985
        %3015 = vmatmul.f32.gmra.mxu0 %v2994
        %v3016 = vpop.f32.mrf.mxu0
        %v3017 = vadd.f32 0.0, %v3016
        %3018 = vmatmul.f32.gmra.mxu0 %v2997
        %v3019 = vpop.f32.mrf.mxu0
        %v3020 = vadd.f32 0.0, %v3019
        %3021 = vdwg.mxu0
        %v3022 = vsel %vm2993, %v2055, 0
        %v3025 = vsel %vm2993, %v2990, 0
        %3027 = vmatpush.msra.mxu0 0.0
        %3028 = vmatpush.msra.mxu0 0.0
        %3029 = vmatpush.msra.mxu0 0.0
        %3030 = vmatpush.msra.mxu0 0.0
        %3031 = vmatpush.msra.mxu0 0.0
        %3032 = vmatpush.msra.mxu0 0.0
        %3033 = vmatpush.msra.mxu0 0.0
        %3034 = vmatpush.msra.mxu0 0.0
        %3035 = vmatpush.msra.mxu0 0.0
        %3036 = vmatpush.msra.mxu0 0.0
        %3037 = vmatpush.msra.mxu0 0.0
        %3038 = vmatpush.msra.mxu0 0.0
        %3039 = vmatpush.msra.mxu0 0.0
        %3040 = vmatpush.msra.mxu0 0.0
        %3041 = vmatpush.msra.mxu0 0.0
        %3042 = vmatpush.msra.mxu0 %v2922
        %3043 = vmatmul.f32.gmra.mxu0 %v3022
        %v3044 = vpop.f32.mrf.mxu0
        %v3045 = vadd.f32 %v3017, %v3044
        %3046 = vmatmul.f32.gmra.mxu0 %v3025
        %v3047 = vpop.f32.mrf.mxu0
        %v3048 = vadd.f32 %v3020, %v3047
        %3049 = vdwg.mxu0
        %v3050 = vld [vmem:[#allocation2] sm:$0x1]
        %v3052 = vperm.slane %v3050, 0
        %v3054 = vadd.f32 %v3045, %v3052
        %v3055 = vadd.f32 %v3048, %v3052
        %v3056 = vmax.f32 %v3054, 0.0
        %v3057 = vmax.f32 %v3055, 0.0
        %vm3058 = vcmask 7168
        %3059 = vst.msk [vmem:[%s696] sm:$0xff] %vm3058, %v3056
        %3060 = vst.msk [vmem:[%s696 + $0x8] sm:$0xff] %vm3058, %v3057
        %s3061 = sand.u32 %s493, 1
        %s3062 = scalar_lea.sflag [#allocation4], %s3061
        %s3063 = sand.u32 %s493, 1
        %s3064 = smul.addr %s3063, 2
        %s3065 = scalar_lea.vmem [#allocation3], %s3064
        %p3066 = scmp.lt.s32.totalorder %s39, 1
        %s3067 = scalar_select %p3066, %s39, 1
        %s3068 = smul.addr %s3067, 2
        %s3069 = smul.addr %s3068, 8
        %s3070 = scalar_lea.vmem %s22, %s3069
        // Predicated region
        $region105: #{autoencoder_forward.1} parent=103 // pred_check
          %p3071 = pneg %p503
        $region106: #{autoencoder_forward.1} parent=103 // pred_check_branch
          %3073 = sbr.rel (%p3071) target = $region108
        $region107: #{autoencoder_forward.1} parent=103 // pred_region
          %3075 = vsyncadd %s3062, 0
          %s3076 = smul.addr %s39, 2
          %s3077 = scalar_lea.hbm %s21, %s3076
          %s3079 = sshll.u32 %s3065, 4
          %s3080 = int_to_ptr.vmem [resolvable:$true] %s3079
          %s3081 = sshll.u32 %s3077, 4
          %s3082 = int_to_ptr.hbm [resolvable:$true] %s3081
          %3084 = dma.vmem_to_hbm [thread:$0]  %s3080, 32, %s3082, %s3062
        $region108: #{autoencoder_forward.1} parent=103 // pred_fallthru
          _
        // Predicated region
        $region109: #{autoencoder_forward.1} parent=103 // pred_check
          %p3085 = pneg %p529
        $region110: #{autoencoder_forward.1} parent=103 // pred_check_branch
          %3087 = sbr.rel (%p3085) target = $region112
        $region111: #{autoencoder_forward.1} parent=103 // pred_region
          _
        $region112: #{autoencoder_forward.1} parent=103 // pred_fallthru
          _
      $region104: #{autoencoder_forward.1} parent=5 // pred_fallthru
        _
      %p3088 = scmp.le.s32.totalorder 2, %s34
      // Predicated region
      $region113: #{autoencoder_forward.1} parent=5 // pred_check
        %p3089 = pneg %p3088
      $region114: #{autoencoder_forward.1} parent=5 // pred_check_branch
        %3091 = sbr.rel (%p3089) target = $region116
      $region115: #{autoencoder_forward.1} parent=5 // pred_region
        %s3092 = ssub.s32 %s34, 2
        // Predicated region
        $region117: #{autoencoder_forward.1} parent=115 // pred_check
          %p3093 = pneg %p509
        $region118: #{autoencoder_forward.1} parent=115 // pred_check_branch
          %3095 = sbr.rel (%p3093) target = $region120
        $region119: #{autoencoder_forward.1} parent=115 // pred_region
          %s3096 = sand.u32 %s494, 1
          %s3097 = scalar_lea.sflag [#allocation4], %s3096
          %s3098 = sand.u32 %s494, 1
          %s3099 = smul.addr %s3098, 2
          %s3100 = scalar_lea.vmem [#allocation3], %s3099
          %3102 = dma.done %s3097, 32
        $region120: #{autoencoder_forward.1} parent=115 // pred_fallthru
          _
        // Predicated region
        $region121: #{autoencoder_forward.1} parent=115 // pred_check
          %p3103 = pneg %p535
        $region122: #{autoencoder_forward.1} parent=115 // pred_check_branch
          %3105 = sbr.rel (%p3103) target = $region124
        $region123: #{autoencoder_forward.1} parent=115 // pred_region
          %p3106 = scmp.lt.s32.totalorder %s40, 1
          %s3107 = scalar_select %p3106, %s40, 1
          %s3108 = smul.addr %s3107, 2
          %s3109 = smul.addr %s3108, 8
          %s3110 = scalar_lea.vmem %s22, %s3109
        $region124: #{autoencoder_forward.1} parent=115 // pred_fallthru
          _
      $region116: #{autoencoder_forward.1} parent=5 // pred_fallthru
        _
    $region6: #{autoencoder_forward.1} parent=1 // loop_footer
      %s38 = sadd.s32 1, %s34
    $region7: #{autoencoder_forward.1} parent=1 // loop_footer_branch
      %33 = sbr.rel target = $region3
    $region8: #{autoencoder_forward.1} parent=1 // loop_exit
      _
    %3111 = vsyncpa [#allocation4], 1
    %s3112 = scalar_lea.sflag [#allocation4], 1
    %3113 = vsyncpa %s3112, 1

</llo_original>
